<compile_context>
chip_gen: v7x
topology: tpu7x:2x2x1
jax: 0.10.0
libtpu: 0.0.40
codegen_flags: <defaults>
</compile_context>

<pallas_src>
import math
import jax
import jax.numpy as jnp
from jax.experimental import pallas as pl
from jax.experimental.pallas import tpu as pltpu

# ---------------- small synthetic configuration ----------------
N = 2             # batch size
L = 8             # sequence length
NL = N * L        # flattened tokens
H = 32            # embedding_size (BERT hidden size)
NUM_HEADS = 2     # encoder attention heads
HEAD_DIM = H // NUM_HEADS
FFN = 64          # encoder FFN intermediate size
NUM_LAYERS = 2    # encoder layers
VOCAB = 50        # vocabulary size
F = 12            # feature_size
H1 = 16           # h1_dim
H2 = 8            # h2_dim
LN_EPS = 1e-12    # BERT LayerNorm eps
D_IN = 4 * H + F  # input dim of layer1
OUT_PAD = 128     # lane-dense padded width of the regression output
W192 = 4 * H + FFN            # per-layer packed weight-slab width (192 lanes)
ISCALE = 1.0 / math.sqrt(HEAD_DIM)

# log2 of the (power-of-two) structural sizes, used for in-kernel iota masks
LOG_NL = NL.bit_length() - 1
LOG_HD = HEAD_DIM.bit_length() - 1
LOG_H = H.bit_length() - 1
LOG_L = L.bit_length() - 1

# data-slab lane offsets
D_X0 = 0
D_BIAS = H                 # 32
D_MASK = H + 2 * NL        # 64
D_FEAT = D_MASK + 4        # 68
D_W = D_FEAT + F           # 80 total lanes


# ---------------- in-kernel helpers ----------------
def _layernorm(x, g, b):
    mu = jnp.mean(x, axis=-1, keepdims=True)
    var = jnp.mean(jnp.square(x - mu), axis=-1, keepdims=True)
    return (x - mu) * jax.lax.rsqrt(var + LN_EPS) * g + b


def _gelu(x):
    # TODO(synk): real BertModel uses exact erf GELU; tanh approximation kept
    # for the synthetic stand-in encoder (the in-script reference matches it).
    return 0.5 * x * (1.0 + jnp.tanh(0.7978845608028654 * (x + 0.044715 * x * x * x)))


def _iota(shape, dim):
    return jax.lax.broadcasted_iota(jnp.int32, shape, dim)


def _ind(cond):
    return jnp.where(cond, 1.0, 0.0).astype(jnp.float32)


# ---------------- single fused kernel ----------------
def fused_grader_kernel(data_ref, wbig_ref, wf2_ref, pool_ref, reg_ref, out_ref):
    f32 = jnp.float32

    # ---- carve the packed input slabs (static slices) ----
    data = data_ref[...]                                   # [NL, 80]
    x0 = data[:, D_X0:D_X0 + H]                            # [NL, H]   embeddings, pre-LN
    bias2 = data[:, D_BIAS:D_BIAS + 2 * NL]                # [NL, 2NL] key bias tiled x2
    maskp = data[:, D_MASK:D_MASK + 4]                     # [NL, 4]   token mask x4 heads
    feat = data[0:N, D_FEAT:D_FEAT + F]                    # [N, F]

    pool = pool_ref[...]                                   # [52, 128]
    attnw = pool[0:H, :]                                   # [H, 4H]  pooling-head weights
    w3p = pool[H:H + H1, :]                                # [H1, 128] layer3 (lane 0 real)
    attnb = pool[H + H1:H + H1 + 1, :]                     # [1, 4H]
    b3p = pool[H + H1 + 1:H + H1 + 2, :]                   # [1, 128]
    eln_g = pool[H + H1 + 2:H + H1 + 3, 0:H]               # [1, H]
    eln_b = pool[H + H1 + 3:H + H1 + 4, 0:H]               # [1, H]

    reg = reg_ref[...]                                     # [158, H1]
    w1a = reg[0:4 * H, :]                                  # [4H, H1]
    w2p = reg[4 * H:4 * H + H1, :]                         # [H1, H1] (cols >= H2 are zero)
    w1b = reg[4 * H + H1:4 * H + H1 + F, :]                # [F, H1]
    b1 = reg[4 * H + H1 + F:4 * H + H1 + F + 1, :]         # [1, H1]
    b2p = reg[4 * H + H1 + F + 1:4 * H + H1 + F + 2, :]    # [1, H1]

    # ---- tiny 0/1 indicator constants generated in-kernel (saves ~7 DMAs) ----
    hm2 = _ind((_iota((2 * NL, H), 0) >> LOG_NL) == (_iota((2 * NL, H), 1) >> LOG_HD))
    blk = _ind((_iota((2 * NL, 2 * NL), 0) >> LOG_NL)
               == (_iota((2 * NL, 2 * NL), 1) >> LOG_NL))
    rep = _ind((_iota((H, 4 * H), 1) & (H - 1)) == _iota((H, 4 * H), 0))
    gmat = _ind((_iota((4 * H, 4), 0) >> LOG_H) == _iota((4 * H, 4), 1))
    gmatt = _ind(_iota((4, 4 * H), 0) == (_iota((4, 4 * H), 1) >> LOG_H))
    seg = _ind(_iota((N, NL), 0) == (_iota((N, NL), 1) >> LOG_L))
    segt = _ind((_iota((NL, N), 0) >> LOG_L) == _iota((NL, N), 1))

    # ---- embedding LayerNorm (all N*L rows at once) ----
    x = _layernorm(x0, eln_g, eln_b)                       # [NL, H]

    # ---- synthetic BERT-style encoder ----
    # TODO(synk): stands in for BertModel.from_pretrained('bert-base-uncased').
    for l in range(NUM_LAYERS):
        wl = wbig_ref[l]                                   # [36, 192]
        wqkv = wl[0:H, 0:3 * H]                            # [H, 3H] (1/sqrt(hd) folded in Q)
        wo = wl[0:H, 3 * H:4 * H]                          # [H, H]
        wf1 = wl[0:H, 4 * H:W192]                          # [H, FFN]
        bqkv = wl[H:H + 1, 0:3 * H]
        bo = wl[H + 1:H + 2, 0:H]
        ln1g = wl[H + 1:H + 2, H:2 * H]
        ln1b = wl[H + 1:H + 2, 2 * H:3 * H]
        bf2 = wl[H + 2:H + 3, 0:H]
        ln2g = wl[H + 2:H + 3, H:2 * H]
        ln2b = wl[H + 2:H + 3, 2 * H:3 * H]
        bf1 = wl[H + 3:H + 4, 0:FFN]
        wf2 = wf2_ref[l]                                   # [FFN, H]

        # fused QKV projection: one 96-lane matmul instead of three 32-lane ones
        qkv = jnp.dot(x, wqkv, preferred_element_type=f32) + bqkv       # [NL, 3H]
        q = qkv[:, 0:H]
        k = qkv[:, H:2 * H]
        v = qkv[:, 2 * H:3 * H]

        # both heads packed along the sublane axis of K/V: one score matmul,
        # one softmax chain, one context matmul per layer
        k2 = jnp.concatenate([k, k], axis=0) * hm2                      # [2NL, H]
        v2 = jnp.concatenate([v, v], axis=0) * hm2                      # [2NL, H]
        s = jax.lax.dot_general(q, k2, (((1,), (1,)), ((), ())),
                                preferred_element_type=f32) + bias2     # [NL, 2NL]
        s = s - jnp.max(s, axis=-1, keepdims=True)
        p = jnp.exp(s)
        denom = jnp.dot(p, blk, preferred_element_type=f32)             # per-head-block sums
        p = p * pl.reciprocal(denom, approx=True)
        ctx = jnp.dot(p, v2, preferred_element_type=f32)                # [NL, H] heads on lanes

        attn_out = jnp.dot(ctx, wo, preferred_element_type=f32) + bo
        hx = _layernorm(x + attn_out, ln1g, ln1b)
        ff = _gelu(jnp.dot(hx, wf1, preferred_element_type=f32) + bf1)
        ff = jnp.dot(ff, wf2, preferred_element_type=f32) + bf2
        x = _layernorm(hx + ff, ln2g, ln2b)                             # [NL, H]

    # ---- 4 pooling heads (BERTGrader._apply_attn), packed on the lane axis ----
    v_all = jnp.dot(x, attnw, preferred_element_type=f32) + attnb       # [NL, 4H]
    x_rep = jnp.dot(x, rep, preferred_element_type=f32)                 # [NL, 4H] (x tiled x4)
    scores = jnp.dot(x_rep * v_all, gmat, preferred_element_type=f32)   # [NL, 4]
    scaled = jnp.tanh(scores) * maskp + (1.0 - maskp) * (-10000.0)
    # tanh-bounded (<= 1) so exp needs no max subtraction; masked keys -> exp == 0.
    ex = jnp.exp(scaled)                                                # [NL, 4]
    den = jnp.dot(seg, ex, preferred_element_type=f32)                  # [N, 4]
    den_rep = jnp.dot(segt, den, preferred_element_type=f32)            # [NL, 4]
    w = ex * pl.reciprocal(den_rep, approx=True)                        # softmax over seq
    w_rep = jnp.dot(w, gmatt, preferred_element_type=f32)               # [NL, 4H]
    pooled = jnp.dot(seg, w_rep * x_rep, preferred_element_type=f32)    # [N, 4H]

    # ---- regression head (layer1 split over pooled-heads / feature columns) ----
    h1 = (jnp.dot(pooled, w1a, preferred_element_type=f32)
          + jnp.dot(feat, w1b, preferred_element_type=f32) + b1)
    h1 = jnp.maximum(h1, 0.0)
    h2 = jnp.maximum(jnp.dot(h1, w2p, preferred_element_type=f32) + b2p, 0.0)
    out_ref[...] = jnp.dot(h2, w3p, preferred_element_type=f32) + b3p


# ---------------- forward (glue + fused kernel) ----------------
@jax.jit
def bert_feature_grader_forward(packed, input_ids, input_array):
    attention_mask = input_array[:, :-F].astype(jnp.float32)   # [N, L]
    feature = input_array[:, -F:].astype(jnp.float32)          # [N, F]

    # embedding-table gather stays in plain JAX (tiny vocab gather)
    emb = (packed['word_emb'][input_ids]
           + packed['pos_emb'][None, :, :]
           + packed['type_emb'][0][None, None, :])              # [N, L, H]
    x0 = emb.reshape(NL, H)

    # additive per-key attention bias: -10000 on padded keys, -1e9 across
    # batches; tiled twice on the lane axis for the two sublane-stacked heads
    row_batch = jnp.arange(NL) // L
    same_batch = row_batch[:, None] == row_batch[None, :]
    key_pad = (1.0 - attention_mask.reshape(NL)) * -10000.0
    attn_bias = jnp.where(same_batch, key_pad[None, :], -1e9).astype(jnp.float32)
    bias2 = jnp.concatenate([attn_bias, attn_bias], axis=1)     # [NL, 2NL]

    maskp = jnp.broadcast_to(attention_mask.reshape(NL, 1), (NL, 4)).astype(jnp.float32)
    feat_pad = jnp.zeros((NL, F), jnp.float32).at[0:N, :].set(feature)

    # one data slab -> one DMA for all per-invocation inputs
    data = jnp.concatenate([x0, bias2, maskp, feat_pad], axis=1).astype(jnp.float32)

    args = (data, packed['wbig'], packed['wf2'], packed['pool'], packed['reg'])
    y_pad = pl.pallas_call(
        fused_grader_kernel,
        out_shape=jax.ShapeDtypeStruct((N, OUT_PAD), jnp.float32),
        in_specs=[pl.BlockSpec(memory_space=pltpu.MemorySpace.VMEM)] * len(args),
        out_specs=pl.BlockSpec(memory_space=pltpu.MemorySpace.VMEM),
        compiler_params=pltpu.CompilerParams(vmem_limit_bytes=8 * 1024 * 1024),
    )(*args)
    return y_pad[:, 0]                                          # squeeze(dim=-1)


# ---------------- parameter init (PyTorch layout) ----------------
def init_params(key):
    """Parameters in PyTorch convention (nn.Linear weight = [out, in])."""
    keys = iter(jax.random.split(key, 32))

    def nrm(shape, scale=0.02):
        return (scale * jax.random.normal(next(keys), shape)).astype(jnp.float32)

    layers = []
    for _ in range(NUM_LAYERS):
        layers.append(dict(
            wq=nrm((H, H)), bq=jnp.zeros((H,), jnp.float32),
            wk=nrm((H, H)), bk=jnp.zeros((H,), jnp.float32),
            wv=nrm((H, H)), bv=jnp.zeros((H,), jnp.float32),
            wo=nrm((H, H)), bo=jnp.zeros((H,), jnp.float32),
            ln1_g=jnp.ones((H,), jnp.float32), ln1_b=jnp.zeros((H,), jnp.float32),
            wf1=nrm((FFN, H)), bf1=jnp.zeros((FFN,), jnp.float32),
            wf2=nrm((H, FFN)), bf2=jnp.zeros((H,), jnp.float32),
            ln2_g=jnp.ones((H,), jnp.float32), ln2_b=jnp.zeros((H,), jnp.float32),
        ))
    return dict(
        word_emb=nrm((VOCAB, H)), pos_emb=nrm((L, H)), type_emb=nrm((2, H)),
        emb_ln_g=jnp.ones((H,), jnp.float32), emb_ln_b=jnp.zeros((H,), jnp.float32),
        layers=layers,
        attn_w=[nrm((H, H)) for _ in range(4)],
        attn_b=[jnp.zeros((H,), jnp.float32) for _ in range(4)],
        # regression head uses a larger init scale so the toy output is O(1)
        w1=nrm((H1, D_IN), 0.3), b1=jnp.zeros((H1,), jnp.float32),
        w2=nrm((H2, H1), 0.3), b2=jnp.zeros((H2,), jnp.float32),
        w3=nrm((1, H2), 0.3), b3=jnp.zeros((1,), jnp.float32),
    )


# ---------------- host-side packing into 4 weight slabs ----------------
def pack_params(p):
    """Free XLA plumbing: Linear weights transposed to [in, out], all small
    per-layer tensors packed into
      wbig [NUM_LAYERS, 36, 192] : rows 0:32 = [wq.T/sqrt(hd) | wk.T | wv.T | wo.T | wf1.T]
                                   rows 32:36 = biases + LayerNorm params
      wf2  [NUM_LAYERS, FFN, H]
      pool [52, 128]             : pooling-head weights, layer3 (lane 0), emb LN
      reg  [158, H1]             : layer1 split, layer2 (lane-padded to H1), biases."""
    f32 = jnp.float32
    layers = p['layers']

    def zrow(n):
        return jnp.zeros((n,), f32)

    slabs = []
    for l in layers:
        wrows = jnp.concatenate(
            [l['wq'].T * ISCALE, l['wk'].T, l['wv'].T, l['wo'].T, l['wf1'].T], axis=1)
        r0 = jnp.concatenate([l['bq'] * ISCALE, l['bk'], l['bv'], zrow(W192 - 3 * H)])
        r1 = jnp.concatenate([l['bo'], l['ln1_g'], l['ln1_b'], zrow(W192 - 3 * H)])
        r2 = jnp.concatenate([l['bf2'], l['ln2_g'], l['ln2_b'], zrow(W192 - 3 * H)])
        r3 = jnp.concatenate([l['bf1'], zrow(W192 - FFN)])
        slabs.append(jnp.concatenate([wrows, jnp.stack([r0, r1, r2, r3])], axis=0))
    wbig = jnp.stack(slabs, axis=0)                                         # [NLYR, 36, 192]
    wf2 = jnp.stack([l['wf2'].T for l in layers], axis=0)                   # [NLYR, FFN, H]

    attnw = jnp.concatenate([w.T for w in p['attn_w']], axis=1)             # [H, 4H]
    attnb = jnp.concatenate(p['attn_b'], axis=0)[None, :]                   # [1, 4H]
    w3p = jnp.zeros((H1, OUT_PAD), f32).at[0:H2, 0].set(p['w3'][0, :])      # [H1, 128]
    b3p = jnp.zeros((1, OUT_PAD), f32).at[0, 0].set(p['b3'][0])
    eln_g = jnp.zeros((1, OUT_PAD), f32).at[0, 0:H].set(p['emb_ln_g'])
    eln_b = jnp.zeros((1, OUT_PAD), f32).at[0, 0:H].set(p['emb_ln_b'])
    pool = jnp.concatenate([attnw, w3p, attnb, b3p, eln_g, eln_b], axis=0)  # [52, 128]

    w1t = p['w1'].T                                                         # [D_IN, H1]
    w2p = jnp.zeros((H1, H1), f32).at[:, 0:H2].set(p['w2'].T)               # [H1, H1]
    b2p = jnp.zeros((1, H1), f32).at[0, 0:H2].set(p['b2'])
    reg = jnp.concatenate(
        [w1t[0:4 * H, :], w2p, w1t[4 * H:, :], p['b1'][None, :], b2p], axis=0)  # [158, H1]

    return dict(word_emb=p['word_emb'], pos_emb=p['pos_emb'], type_emb=p['type_emb'],
                wbig=wbig, wf2=wf2, pool=pool, reg=reg)


# ---------------- pure-JAX reference (same synthetic encoder) ----------------
def reference_forward(p, input_ids, input_array):
    mask = input_array[:, :-F].astype(jnp.float32)              # [N, L]
    feature = input_array[:, -F:].astype(jnp.float32)

    def ln(x, g, b):
        mu = jnp.mean(x, axis=-1, keepdims=True)
        var = jnp.mean(jnp.square(x - mu), axis=-1, keepdims=True)
        return (x - mu) / jnp.sqrt(var + LN_EPS) * g + b

    emb = (p['word_emb'][input_ids] + p['pos_emb'][None, :, :]
           + p['type_emb'][0][None, None, :])
    x = ln(emb, p['emb_ln_g'], p['emb_ln_b'])                   # [N, L, H]
    ext = (1.0 - mask)[:, None, None, :] * -10000.0             # [N, 1, 1, L]

    for lyr in p['layers']:
        q = x @ lyr['wq'].T + lyr['bq']
        k = x @ lyr['wk'].T + lyr['bk']
        v = x @ lyr['wv'].T + lyr['bv']

        def split(t):
            return t.reshape(N, L, NUM_HEADS, HEAD_DIM).transpose(0, 2, 1, 3)

        qh, kh, vh = split(q), split(k), split(v)
        s = qh @ kh.transpose(0, 1, 3, 2) / math.sqrt(HEAD_DIM) + ext
        pw = jax.nn.softmax(s, axis=-1)
        ctx = (pw @ vh).transpose(0, 2, 1, 3).reshape(N, L, H)
        attn_out = ctx @ lyr['wo'].T + lyr['bo']
        hx = ln(x + attn_out, lyr['ln1_g'], lyr['ln1_b'])
        ff = _gelu(hx @ lyr['wf1'].T + lyr['bf1'])
        ff = ff @ lyr['wf2'].T + lyr['bf2']
        x = ln(hx + ff, lyr['ln2_g'], lyr['ln2_b'])

    heads = []
    for wi, bi in zip(p['attn_w'], p['attn_b']):
        tv = x @ wi.T + bi
        score = jnp.einsum('ijk,ijk->ij', x, tv)
        scaled = jnp.tanh(score) * mask + (1.0 - mask) * -10000.0
        ww = jax.nn.softmax(scaled, axis=1)
        heads.append(jnp.sum(x * ww[..., None], axis=1))

    allh = jnp.concatenate(heads + [feature], axis=1)           # [N, 4H + F]
    h1 = jnp.maximum(allh @ p['w1'].T + p['b1'], 0.0)
    h2 = jnp.maximum(h1 @ p['w2'].T + p['b2'], 0.0)
    return (h2 @ p['w3'].T + p['b3'])[:, 0]


if __name__ == "__main__":
    key = jax.random.PRNGKey(0)
    kp, kid, kfeat = jax.random.split(key, 3)
    params = init_params(kp)
    packed = pack_params(params)

    input_ids = jax.random.randint(kid, (N, L), 0, VOCAB)
    # token-level mask: row 0 has 8 valid tokens, row 1 has 5 (no fully-masked rows)
    mask = (jnp.arange(L)[None, :] < jnp.array([[L], [5]])).astype(jnp.float32)
    feature = jax.random.normal(kfeat, (N, F), dtype=jnp.float32)
    input_array = jnp.concatenate([mask, feature], axis=1)      # [N, L + F]

    y = bert_feature_grader_forward(packed, input_ids, input_array)
    y = jax.block_until_ready(y)
    y_ref = reference_forward(params, input_ids, input_array)

    assert y.shape == (N,)
    assert bool(jnp.all(jnp.isfinite(y)))
    assert bool(jnp.allclose(y, y_ref, rtol=1e-1, atol=1e-2)), (y, y_ref)
    print("KERNEL_OK")
</pallas_src>

<mosaic_0001>
module attributes {stable_mosaic.version = 11 : i64} {
  func.func @fused_grader_kernel(%arg0: memref<16x80xf32, #tpu.memory_space<vmem>>, %arg1: memref<2x36x192xf32, #tpu.memory_space<vmem>>, %arg2: memref<2x64x32xf32, #tpu.memory_space<vmem>>, %arg3: memref<52x128xf32, #tpu.memory_space<vmem>>, %arg4: memref<158x16xf32, #tpu.memory_space<vmem>>, %arg5: memref<2x128xf32, #tpu.memory_space<vmem>>) attributes {dimension_semantics = [], scalar_prefetch = 0 : i64, scratch_operands = 0 : i64, tpu.core_type = #tpu.core_type<tc>} {
    %c0 = arith.constant 0 : index
    %c0_0 = arith.constant 0 : index
    %0 = vector.load %arg0[%c0, %c0_0] : memref<16x80xf32, #tpu.memory_space<vmem>>, vector<16x80xf32>
    %1 = vector.extract_strided_slice %0 {offsets = [0, 0], sizes = [16, 32], strides = [1, 1]} : vector<16x80xf32> to vector<16x32xf32>
    %2 = vector.extract_strided_slice %0 {offsets = [0, 32], sizes = [16, 32], strides = [1, 1]} : vector<16x80xf32> to vector<16x32xf32>
    %3 = vector.extract_strided_slice %0 {offsets = [0, 64], sizes = [16, 4], strides = [1, 1]} : vector<16x80xf32> to vector<16x4xf32>
    %4 = vector.extract_strided_slice %0 {offsets = [0, 68], sizes = [2, 12], strides = [1, 1]} : vector<16x80xf32> to vector<2x12xf32>
    %c0_1 = arith.constant 0 : index
    %c0_2 = arith.constant 0 : index
    %5 = vector.load %arg3[%c0_1, %c0_2] : memref<52x128xf32, #tpu.memory_space<vmem>>, vector<52x128xf32>
    %6 = vector.extract_strided_slice %5 {offsets = [0, 0], sizes = [32, 128], strides = [1, 1]} : vector<52x128xf32> to vector<32x128xf32>
    %7 = vector.extract_strided_slice %5 {offsets = [32, 0], sizes = [16, 128], strides = [1, 1]} : vector<52x128xf32> to vector<16x128xf32>
    %8 = vector.extract_strided_slice %5 {offsets = [48, 0], sizes = [1, 128], strides = [1, 1]} : vector<52x128xf32> to vector<1x128xf32>
    %9 = vector.extract_strided_slice %5 {offsets = [49, 0], sizes = [1, 128], strides = [1, 1]} : vector<52x128xf32> to vector<1x128xf32>
    %10 = vector.extract_strided_slice %5 {offsets = [50, 0], sizes = [1, 32], strides = [1, 1]} : vector<52x128xf32> to vector<1x32xf32>
    %11 = vector.extract_strided_slice %5 {offsets = [51, 0], sizes = [1, 32], strides = [1, 1]} : vector<52x128xf32> to vector<1x32xf32>
    %c0_3 = arith.constant 0 : index
    %c0_4 = arith.constant 0 : index
    %12 = vector.load %arg4[%c0_3, %c0_4] : memref<158x16xf32, #tpu.memory_space<vmem>>, vector<158x16xf32>
    %13 = vector.extract_strided_slice %12 {offsets = [0, 0], sizes = [128, 16], strides = [1, 1]} : vector<158x16xf32> to vector<128x16xf32>
    %14 = vector.extract_strided_slice %12 {offsets = [128, 0], sizes = [16, 16], strides = [1, 1]} : vector<158x16xf32> to vector<16x16xf32>
    %15 = vector.extract_strided_slice %12 {offsets = [144, 0], sizes = [12, 16], strides = [1, 1]} : vector<158x16xf32> to vector<12x16xf32>
    %16 = vector.extract_strided_slice %12 {offsets = [156, 0], sizes = [1, 16], strides = [1, 1]} : vector<158x16xf32> to vector<1x16xf32>
    %17 = vector.extract_strided_slice %12 {offsets = [157, 0], sizes = [1, 16], strides = [1, 1]} : vector<158x16xf32> to vector<1x16xf32>
    %18 = tpu.iota {dimensions = array<i32: 0>} : vector<32x32xi32>
    %c4_i32 = arith.constant 4 : i32
    %19 = vector.broadcast %c4_i32 : i32 to vector<32x32xi32>
    %20 = arith.shrsi %18, %19 : vector<32x32xi32>
    %21 = tpu.iota {dimensions = array<i32: 1>} : vector<32x32xi32>
    %c4_i32_5 = arith.constant 4 : i32
    %22 = vector.broadcast %c4_i32_5 : i32 to vector<32x32xi32>
    %23 = arith.shrsi %21, %22 : vector<32x32xi32>
    %24 = arith.cmpi eq, %20, %23 : vector<32x32xi32>
    %cst = arith.constant 1.000000e+00 : f32
    %cst_6 = arith.constant 0.000000e+00 : f32
    %25 = vector.broadcast %cst : f32 to vector<32x32xf32>
    %26 = vector.broadcast %cst_6 : f32 to vector<32x32xf32>
    %27 = arith.select %24, %25, %26 : vector<32x32xi1>, vector<32x32xf32>
    %28 = tpu.iota {dimensions = array<i32: 0>} : vector<32x32xi32>
    %c4_i32_7 = arith.constant 4 : i32
    %29 = vector.broadcast %c4_i32_7 : i32 to vector<32x32xi32>
    %30 = arith.shrsi %28, %29 : vector<32x32xi32>
    %31 = tpu.iota {dimensions = array<i32: 1>} : vector<32x32xi32>
    %c4_i32_8 = arith.constant 4 : i32
    %32 = vector.broadcast %c4_i32_8 : i32 to vector<32x32xi32>
    %33 = arith.shrsi %31, %32 : vector<32x32xi32>
    %34 = arith.cmpi eq, %30, %33 : vector<32x32xi32>
    %cst_9 = arith.constant 1.000000e+00 : f32
    %cst_10 = arith.constant 0.000000e+00 : f32
    %35 = vector.broadcast %cst_9 : f32 to vector<32x32xf32>
    %36 = vector.broadcast %cst_10 : f32 to vector<32x32xf32>
    %37 = arith.select %34, %35, %36 : vector<32x32xi1>, vector<32x32xf32>
    %38 = tpu.iota {dimensions = array<i32: 1>} : vector<32x128xi32>
    %c31_i32 = arith.constant 31 : i32
    %39 = vector.broadcast %c31_i32 : i32 to vector<32x128xi32>
    %40 = arith.andi %38, %39 : vector<32x128xi32>
    %41 = tpu.iota {dimensions = array<i32: 0>} : vector<32x128xi32>
    %42 = arith.cmpi eq, %40, %41 : vector<32x128xi32>
    %cst_11 = arith.constant 1.000000e+00 : f32
    %cst_12 = arith.constant 0.000000e+00 : f32
    %43 = vector.broadcast %cst_11 : f32 to vector<32x128xf32>
    %44 = vector.broadcast %cst_12 : f32 to vector<32x128xf32>
    %45 = arith.select %42, %43, %44 : vector<32x128xi1>, vector<32x128xf32>
    %46 = tpu.iota {dimensions = array<i32: 0>} : vector<128x4xi32>
    %c5_i32 = arith.constant 5 : i32
    %47 = vector.broadcast %c5_i32 : i32 to vector<128x4xi32>
    %48 = arith.shrsi %46, %47 : vector<128x4xi32>
    %49 = tpu.iota {dimensions = array<i32: 1>} : vector<128x4xi32>
    %50 = arith.cmpi eq, %48, %49 : vector<128x4xi32>
    %cst_13 = arith.constant 1.000000e+00 : f32
    %cst_14 = arith.constant 0.000000e+00 : f32
    %51 = vector.broadcast %cst_13 : f32 to vector<128x4xf32>
    %52 = vector.broadcast %cst_14 : f32 to vector<128x4xf32>
    %53 = arith.select %50, %51, %52 : vector<128x4xi1>, vector<128x4xf32>
    %54 = tpu.iota {dimensions = array<i32: 0>} : vector<4x128xi32>
    %55 = tpu.iota {dimensions = array<i32: 1>} : vector<4x128xi32>
    %c5_i32_15 = arith.constant 5 : i32
    %56 = vector.broadcast %c5_i32_15 : i32 to vector<4x128xi32>
    %57 = arith.shrsi %55, %56 : vector<4x128xi32>
    %58 = arith.cmpi eq, %54, %57 : vector<4x128xi32>
    %cst_16 = arith.constant 1.000000e+00 : f32
    %cst_17 = arith.constant 0.000000e+00 : f32
    %59 = vector.broadcast %cst_16 : f32 to vector<4x128xf32>
    %60 = vector.broadcast %cst_17 : f32 to vector<4x128xf32>
    %61 = arith.select %58, %59, %60 : vector<4x128xi1>, vector<4x128xf32>
    %62 = tpu.iota {dimensions = array<i32: 0>} : vector<2x16xi32>
    %63 = tpu.iota {dimensions = array<i32: 1>} : vector<2x16xi32>
    %c3_i32 = arith.constant 3 : i32
    %64 = vector.broadcast %c3_i32 : i32 to vector<2x16xi32>
    %65 = arith.shrsi %63, %64 : vector<2x16xi32>
    %66 = arith.cmpi eq, %62, %65 : vector<2x16xi32>
    %cst_18 = arith.constant 1.000000e+00 : f32
    %cst_19 = arith.constant 0.000000e+00 : f32
    %67 = vector.broadcast %cst_18 : f32 to vector<2x16xf32>
    %68 = vector.broadcast %cst_19 : f32 to vector<2x16xf32>
    %69 = arith.select %66, %67, %68 : vector<2x16xi1>, vector<2x16xf32>
    %70 = tpu.iota {dimensions = array<i32: 0>} : vector<16x2xi32>
    %c3_i32_20 = arith.constant 3 : i32
    %71 = vector.broadcast %c3_i32_20 : i32 to vector<16x2xi32>
    %72 = arith.shrsi %70, %71 : vector<16x2xi32>
    %73 = tpu.iota {dimensions = array<i32: 1>} : vector<16x2xi32>
    %74 = arith.cmpi eq, %72, %73 : vector<16x2xi32>
    %cst_21 = arith.constant 1.000000e+00 : f32
    %cst_22 = arith.constant 0.000000e+00 : f32
    %75 = vector.broadcast %cst_21 : f32 to vector<16x2xf32>
    %76 = vector.broadcast %cst_22 : f32 to vector<16x2xf32>
    %77 = arith.select %74, %75, %76 : vector<16x2xi1>, vector<16x2xf32>
    %cst_23 = arith.constant dense<0.000000e+00> : vector<16xf32>
    %78 = vector.multi_reduction <add>, %1, %cst_23 [1] : vector<16x32xf32> to vector<16xf32>
    %79 = vector.shape_cast %78 : vector<16xf32> to vector<16x1xf32>
    %cst_24 = arith.constant 3.200000e+01 : f32
    %80 = vector.broadcast %cst_24 : f32 to vector<16x1xf32>
    %81 = arith.divf %79, %80 : vector<16x1xf32>
    %82 = vector.broadcast %81 : vector<16x1xf32> to vector<16x32xf32>
    %83 = arith.subf %1, %82 : vector<16x32xf32>
    %84 = arith.mulf %83, %83 : vector<16x32xf32>
    %cst_25 = arith.constant dense<0.000000e+00> : vector<16xf32>
    %85 = vector.multi_reduction <add>, %84, %cst_25 [1] : vector<16x32xf32> to vector<16xf32>
    %86 = vector.shape_cast %85 : vector<16xf32> to vector<16x1xf32>
    %cst_26 = arith.constant 3.200000e+01 : f32
    %87 = vector.broadcast %cst_26 : f32 to vector<16x1xf32>
    %88 = arith.divf %86, %87 : vector<16x1xf32>
    %89 = vector.broadcast %81 : vector<16x1xf32> to vector<16x32xf32>
    %90 = arith.subf %1, %89 : vector<16x32xf32>
    %cst_27 = arith.constant 9.99999996E-13 : f32
    %91 = vector.broadcast %cst_27 : f32 to vector<16x1xf32>
    %92 = arith.addf %88, %91 : vector<16x1xf32>
    %93 = math.rsqrt %92 : vector<16x1xf32>
    %94 = vector.broadcast %93 : vector<16x1xf32> to vector<16x32xf32>
    %95 = arith.mulf %90, %94 : vector<16x32xf32>
    %96 = vector.broadcast %10 : vector<1x32xf32> to vector<16x32xf32>
    %97 = arith.mulf %95, %96 : vector<16x32xf32>
    %98 = vector.broadcast %11 : vector<1x32xf32> to vector<16x32xf32>
    %99 = arith.addf %97, %98 : vector<16x32xf32>
    %c0_28 = arith.constant 0 : index
    %c0_29 = arith.constant 0 : index
    %c0_30 = arith.constant 0 : index
    %100 = vector.load %arg1[%c0_28, %c0_29, %c0_30] : memref<2x36x192xf32, #tpu.memory_space<vmem>>, vector<1x36x192xf32>
    %101 = vector.shape_cast %100 : vector<1x36x192xf32> to vector<36x192xf32>
    %102 = vector.extract_strided_slice %101 {offsets = [0, 0], sizes = [32, 96], strides = [1, 1]} : vector<36x192xf32> to vector<32x96xf32>
    %103 = vector.extract_strided_slice %101 {offsets = [0, 96], sizes = [32, 32], strides = [1, 1]} : vector<36x192xf32> to vector<32x32xf32>
    %104 = vector.extract_strided_slice %101 {offsets = [0, 128], sizes = [32, 64], strides = [1, 1]} : vector<36x192xf32> to vector<32x64xf32>
    %105 = vector.extract_strided_slice %101 {offsets = [32, 0], sizes = [1, 96], strides = [1, 1]} : vector<36x192xf32> to vector<1x96xf32>
    %106 = vector.extract_strided_slice %101 {offsets = [33, 0], sizes = [1, 32], strides = [1, 1]} : vector<36x192xf32> to vector<1x32xf32>
    %107 = vector.extract_strided_slice %101 {offsets = [33, 32], sizes = [1, 32], strides = [1, 1]} : vector<36x192xf32> to vector<1x32xf32>
    %108 = vector.extract_strided_slice %101 {offsets = [33, 64], sizes = [1, 32], strides = [1, 1]} : vector<36x192xf32> to vector<1x32xf32>
    %109 = vector.extract_strided_slice %101 {offsets = [34, 0], sizes = [1, 32], strides = [1, 1]} : vector<36x192xf32> to vector<1x32xf32>
    %110 = vector.extract_strided_slice %101 {offsets = [34, 32], sizes = [1, 32], strides = [1, 1]} : vector<36x192xf32> to vector<1x32xf32>
    %111 = vector.extract_strided_slice %101 {offsets = [34, 64], sizes = [1, 32], strides = [1, 1]} : vector<36x192xf32> to vector<1x32xf32>
    %112 = vector.extract_strided_slice %101 {offsets = [35, 0], sizes = [1, 64], strides = [1, 1]} : vector<36x192xf32> to vector<1x64xf32>
    %c0_31 = arith.constant 0 : index
    %c0_32 = arith.constant 0 : index
    %c0_33 = arith.constant 0 : index
    %113 = vector.load %arg2[%c0_31, %c0_32, %c0_33] : memref<2x64x32xf32, #tpu.memory_space<vmem>>, vector<1x64x32xf32>
    %114 = vector.shape_cast %113 : vector<1x64x32xf32> to vector<64x32xf32>
    %cst_34 = arith.constant dense<0.000000e+00> : vector<16x96xf32>
    %115 = tpu.matmul %99, %102, %cst_34 {dimension_numbers = #tpu.dot_dimension_numbers<[1], [0], [0], [1], [0, 0, 1, 1], [], []>} : vector<16x32xf32>, vector<32x96xf32>, vector<16x96xf32> -> vector<16x96xf32>
    %116 = vector.broadcast %105 : vector<1x96xf32> to vector<16x96xf32>
    %117 = arith.addf %115, %116 : vector<16x96xf32>
    %118 = vector.extract_strided_slice %117 {offsets = [0, 0], sizes = [16, 32], strides = [1, 1]} : vector<16x96xf32> to vector<16x32xf32>
    %119 = vector.extract_strided_slice %117 {offsets = [0, 32], sizes = [16, 32], strides = [1, 1]} : vector<16x96xf32> to vector<16x32xf32>
    %120 = vector.extract_strided_slice %117 {offsets = [0, 64], sizes = [16, 32], strides = [1, 1]} : vector<16x96xf32> to vector<16x32xf32>
    %121 = tpu.concatenate %119, %119 in 0 : vector<16x32xf32>, vector<16x32xf32> -> vector<32x32xf32>
    %122 = arith.mulf %121, %27 : vector<32x32xf32>
    %123 = tpu.concatenate %120, %120 in 0 : vector<16x32xf32>, vector<16x32xf32> -> vector<32x32xf32>
    %124 = arith.mulf %123, %27 : vector<32x32xf32>
    %cst_35 = arith.constant dense<0.000000e+00> : vector<16x32xf32>
    %125 = tpu.matmul %118, %122, %cst_35 {dimension_numbers = #tpu.dot_dimension_numbers<[1], [1], [0], [0], [0, 0, 1, 0], [], []>} : vector<16x32xf32>, vector<32x32xf32>, vector<16x32xf32> -> vector<16x32xf32>
    %126 = arith.addf %125, %2 : vector<16x32xf32>
    %cst_36 = arith.constant dense<0xFF800000> : vector<16xf32>
    %127 = vector.multi_reduction <maximumf>, %126, %cst_36 [1] : vector<16x32xf32> to vector<16xf32>
    %128 = vector.shape_cast %127 : vector<16xf32> to vector<16x1xf32>
    %129 = vector.broadcast %128 : vector<16x1xf32> to vector<16x32xf32>
    %130 = arith.subf %126, %129 : vector<16x32xf32>
    %131 = math.exp %130 : vector<16x32xf32>
    %cst_37 = arith.constant dense<0.000000e+00> : vector<16x32xf32>
    %132 = tpu.matmul %131, %37, %cst_37 {dimension_numbers = #tpu.dot_dimension_numbers<[1], [0], [0], [1], [0, 0, 1, 1], [], []>} : vector<16x32xf32>, vector<32x32xf32>, vector<16x32xf32> -> vector<16x32xf32>
    %133 = tpu.reciprocal %132 {approx = true} : vector<16x32xf32> -> vector<16x32xf32>
    %134 = arith.mulf %131, %133 : vector<16x32xf32>
    %cst_38 = arith.constant dense<0.000000e+00> : vector<16x32xf32>
    %135 = tpu.matmul %134, %124, %cst_38 {dimension_numbers = #tpu.dot_dimension_numbers<[1], [0], [0], [1], [0, 0, 1, 1], [], []>} : vector<16x32xf32>, vector<32x32xf32>, vector<16x32xf32> -> vector<16x32xf32>
    %cst_39 = arith.constant dense<0.000000e+00> : vector<16x32xf32>
    %136 = tpu.matmul %135, %103, %cst_39 {dimension_numbers = #tpu.dot_dimension_numbers<[1], [0], [0], [1], [0, 0, 1, 1], [], []>} : vector<16x32xf32>, vector<32x32xf32>, vector<16x32xf32> -> vector<16x32xf32>
    %137 = vector.broadcast %106 : vector<1x32xf32> to vector<16x32xf32>
    %138 = arith.addf %136, %137 : vector<16x32xf32>
    %139 = arith.addf %99, %138 : vector<16x32xf32>
    %cst_40 = arith.constant dense<0.000000e+00> : vector<16xf32>
    %140 = vector.multi_reduction <add>, %139, %cst_40 [1] : vector<16x32xf32> to vector<16xf32>
    %141 = vector.shape_cast %140 : vector<16xf32> to vector<16x1xf32>
    %cst_41 = arith.constant 3.200000e+01 : f32
    %142 = vector.broadcast %cst_41 : f32 to vector<16x1xf32>
    %143 = arith.divf %141, %142 : vector<16x1xf32>
    %144 = vector.broadcast %143 : vector<16x1xf32> to vector<16x32xf32>
    %145 = arith.subf %139, %144 : vector<16x32xf32>
    %146 = arith.mulf %145, %145 : vector<16x32xf32>
    %cst_42 = arith.constant dense<0.000000e+00> : vector<16xf32>
    %147 = vector.multi_reduction <add>, %146, %cst_42 [1] : vector<16x32xf32> to vector<16xf32>
    %148 = vector.shape_cast %147 : vector<16xf32> to vector<16x1xf32>
    %cst_43 = arith.constant 3.200000e+01 : f32
    %149 = vector.broadcast %cst_43 : f32 to vector<16x1xf32>
    %150 = arith.divf %148, %149 : vector<16x1xf32>
    %151 = vector.broadcast %143 : vector<16x1xf32> to vector<16x32xf32>
    %152 = arith.subf %139, %151 : vector<16x32xf32>
    %cst_44 = arith.constant 9.99999996E-13 : f32
    %153 = vector.broadcast %cst_44 : f32 to vector<16x1xf32>
    %154 = arith.addf %150, %153 : vector<16x1xf32>
    %155 = math.rsqrt %154 : vector<16x1xf32>
    %156 = vector.broadcast %155 : vector<16x1xf32> to vector<16x32xf32>
    %157 = arith.mulf %152, %156 : vector<16x32xf32>
    %158 = vector.broadcast %107 : vector<1x32xf32> to vector<16x32xf32>
    %159 = arith.mulf %157, %158 : vector<16x32xf32>
    %160 = vector.broadcast %108 : vector<1x32xf32> to vector<16x32xf32>
    %161 = arith.addf %159, %160 : vector<16x32xf32>
    %cst_45 = arith.constant dense<0.000000e+00> : vector<16x64xf32>
    %162 = tpu.matmul %161, %104, %cst_45 {dimension_numbers = #tpu.dot_dimension_numbers<[1], [0], [0], [1], [0, 0, 1, 1], [], []>} : vector<16x32xf32>, vector<32x64xf32>, vector<16x64xf32> -> vector<16x64xf32>
    %163 = vector.broadcast %112 : vector<1x64xf32> to vector<16x64xf32>
    %164 = arith.addf %162, %163 : vector<16x64xf32>
    %cst_46 = arith.constant 5.000000e-01 : f32
    %165 = vector.broadcast %cst_46 : f32 to vector<16x64xf32>
    %166 = arith.mulf %165, %164 : vector<16x64xf32>
    %cst_47 = arith.constant 4.471500e-02 : f32
    %167 = vector.broadcast %cst_47 : f32 to vector<16x64xf32>
    %168 = arith.mulf %167, %164 : vector<16x64xf32>
    %169 = arith.mulf %168, %164 : vector<16x64xf32>
    %170 = arith.mulf %169, %164 : vector<16x64xf32>
    %171 = arith.addf %164, %170 : vector<16x64xf32>
    %cst_48 = arith.constant 0.797884583 : f32
    %172 = vector.broadcast %cst_48 : f32 to vector<16x64xf32>
    %173 = arith.mulf %172, %171 : vector<16x64xf32>
    %174 = math.tanh %173 : vector<16x64xf32>
    %cst_49 = arith.constant 1.000000e+00 : f32
    %175 = vector.broadcast %cst_49 : f32 to vector<16x64xf32>
    %176 = arith.addf %175, %174 : vector<16x64xf32>
    %177 = arith.mulf %166, %176 : vector<16x64xf32>
    %cst_50 = arith.constant dense<0.000000e+00> : vector<16x32xf32>
    %178 = tpu.matmul %177, %114, %cst_50 {dimension_numbers = #tpu.dot_dimension_numbers<[1], [0], [0], [1], [0, 0, 1, 1], [], []>} : vector<16x64xf32>, vector<64x32xf32>, vector<16x32xf32> -> vector<16x32xf32>
    %179 = vector.broadcast %109 : vector<1x32xf32> to vector<16x32xf32>
    %180 = arith.addf %178, %179 : vector<16x32xf32>
    %181 = arith.addf %161, %180 : vector<16x32xf32>
    %cst_51 = arith.constant dense<0.000000e+00> : vector<16xf32>
    %182 = vector.multi_reduction <add>, %181, %cst_51 [1] : vector<16x32xf32> to vector<16xf32>
    %183 = vector.shape_cast %182 : vector<16xf32> to vector<16x1xf32>
    %cst_52 = arith.constant 3.200000e+01 : f32
    %184 = vector.broadcast %cst_52 : f32 to vector<16x1xf32>
    %185 = arith.divf %183, %184 : vector<16x1xf32>
    %186 = vector.broadcast %185 : vector<16x1xf32> to vector<16x32xf32>
    %187 = arith.subf %181, %186 : vector<16x32xf32>
    %188 = arith.mulf %187, %187 : vector<16x32xf32>
    %cst_53 = arith.constant dense<0.000000e+00> : vector<16xf32>
    %189 = vector.multi_reduction <add>, %188, %cst_53 [1] : vector<16x32xf32> to vector<16xf32>
    %190 = vector.shape_cast %189 : vector<16xf32> to vector<16x1xf32>
    %cst_54 = arith.constant 3.200000e+01 : f32
    %191 = vector.broadcast %cst_54 : f32 to vector<16x1xf32>
    %192 = arith.divf %190, %191 : vector<16x1xf32>
    %193 = vector.broadcast %185 : vector<16x1xf32> to vector<16x32xf32>
    %194 = arith.subf %181, %193 : vector<16x32xf32>
    %cst_55 = arith.constant 9.99999996E-13 : f32
    %195 = vector.broadcast %cst_55 : f32 to vector<16x1xf32>
    %196 = arith.addf %192, %195 : vector<16x1xf32>
    %197 = math.rsqrt %196 : vector<16x1xf32>
    %198 = vector.broadcast %197 : vector<16x1xf32> to vector<16x32xf32>
    %199 = arith.mulf %194, %198 : vector<16x32xf32>
    %200 = vector.broadcast %110 : vector<1x32xf32> to vector<16x32xf32>
    %201 = arith.mulf %199, %200 : vector<16x32xf32>
    %202 = vector.broadcast %111 : vector<1x32xf32> to vector<16x32xf32>
    %203 = arith.addf %201, %202 : vector<16x32xf32>
    %c1 = arith.constant 1 : index
    %c0_56 = arith.constant 0 : index
    %c0_57 = arith.constant 0 : index
    %204 = vector.load %arg1[%c1, %c0_56, %c0_57] : memref<2x36x192xf32, #tpu.memory_space<vmem>>, vector<1x36x192xf32>
    %205 = vector.shape_cast %204 : vector<1x36x192xf32> to vector<36x192xf32>
    %206 = vector.extract_strided_slice %205 {offsets = [0, 0], sizes = [32, 96], strides = [1, 1]} : vector<36x192xf32> to vector<32x96xf32>
    %207 = vector.extract_strided_slice %205 {offsets = [0, 96], sizes = [32, 32], strides = [1, 1]} : vector<36x192xf32> to vector<32x32xf32>
    %208 = vector.extract_strided_slice %205 {offsets = [0, 128], sizes = [32, 64], strides = [1, 1]} : vector<36x192xf32> to vector<32x64xf32>
    %209 = vector.extract_strided_slice %205 {offsets = [32, 0], sizes = [1, 96], strides = [1, 1]} : vector<36x192xf32> to vector<1x96xf32>
    %210 = vector.extract_strided_slice %205 {offsets = [33, 0], sizes = [1, 32], strides = [1, 1]} : vector<36x192xf32> to vector<1x32xf32>
    %211 = vector.extract_strided_slice %205 {offsets = [33, 32], sizes = [1, 32], strides = [1, 1]} : vector<36x192xf32> to vector<1x32xf32>
    %212 = vector.extract_strided_slice %205 {offsets = [33, 64], sizes = [1, 32], strides = [1, 1]} : vector<36x192xf32> to vector<1x32xf32>
    %213 = vector.extract_strided_slice %205 {offsets = [34, 0], sizes = [1, 32], strides = [1, 1]} : vector<36x192xf32> to vector<1x32xf32>
    %214 = vector.extract_strided_slice %205 {offsets = [34, 32], sizes = [1, 32], strides = [1, 1]} : vector<36x192xf32> to vector<1x32xf32>
    %215 = vector.extract_strided_slice %205 {offsets = [34, 64], sizes = [1, 32], strides = [1, 1]} : vector<36x192xf32> to vector<1x32xf32>
    %216 = vector.extract_strided_slice %205 {offsets = [35, 0], sizes = [1, 64], strides = [1, 1]} : vector<36x192xf32> to vector<1x64xf32>
    %c1_58 = arith.constant 1 : index
    %c0_59 = arith.constant 0 : index
    %c0_60 = arith.constant 0 : index
    %217 = vector.load %arg2[%c1_58, %c0_59, %c0_60] : memref<2x64x32xf32, #tpu.memory_space<vmem>>, vector<1x64x32xf32>
    %218 = vector.shape_cast %217 : vector<1x64x32xf32> to vector<64x32xf32>
    %cst_61 = arith.constant dense<0.000000e+00> : vector<16x96xf32>
    %219 = tpu.matmul %203, %206, %cst_61 {dimension_numbers = #tpu.dot_dimension_numbers<[1], [0], [0], [1], [0, 0, 1, 1], [], []>} : vector<16x32xf32>, vector<32x96xf32>, vector<16x96xf32> -> vector<16x96xf32>
    %220 = vector.broadcast %209 : vector<1x96xf32> to vector<16x96xf32>
    %221 = arith.addf %219, %220 : vector<16x96xf32>
    %222 = vector.extract_strided_slice %221 {offsets = [0, 0], sizes = [16, 32], strides = [1, 1]} : vector<16x96xf32> to vector<16x32xf32>
    %223 = vector.extract_strided_slice %221 {offsets = [0, 32], sizes = [16, 32], strides = [1, 1]} : vector<16x96xf32> to vector<16x32xf32>
    %224 = vector.extract_strided_slice %221 {offsets = [0, 64], sizes = [16, 32], strides = [1, 1]} : vector<16x96xf32> to vector<16x32xf32>
    %225 = tpu.concatenate %223, %223 in 0 : vector<16x32xf32>, vector<16x32xf32> -> vector<32x32xf32>
    %226 = arith.mulf %225, %27 : vector<32x32xf32>
    %227 = tpu.concatenate %224, %224 in 0 : vector<16x32xf32>, vector<16x32xf32> -> vector<32x32xf32>
    %228 = arith.mulf %227, %27 : vector<32x32xf32>
    %cst_62 = arith.constant dense<0.000000e+00> : vector<16x32xf32>
    %229 = tpu.matmul %222, %226, %cst_62 {dimension_numbers = #tpu.dot_dimension_numbers<[1], [1], [0], [0], [0, 0, 1, 0], [], []>} : vector<16x32xf32>, vector<32x32xf32>, vector<16x32xf32> -> vector<16x32xf32>
    %230 = arith.addf %229, %2 : vector<16x32xf32>
    %cst_63 = arith.constant dense<0xFF800000> : vector<16xf32>
    %231 = vector.multi_reduction <maximumf>, %230, %cst_63 [1] : vector<16x32xf32> to vector<16xf32>
    %232 = vector.shape_cast %231 : vector<16xf32> to vector<16x1xf32>
    %233 = vector.broadcast %232 : vector<16x1xf32> to vector<16x32xf32>
    %234 = arith.subf %230, %233 : vector<16x32xf32>
    %235 = math.exp %234 : vector<16x32xf32>
    %cst_64 = arith.constant dense<0.000000e+00> : vector<16x32xf32>
    %236 = tpu.matmul %235, %37, %cst_64 {dimension_numbers = #tpu.dot_dimension_numbers<[1], [0], [0], [1], [0, 0, 1, 1], [], []>} : vector<16x32xf32>, vector<32x32xf32>, vector<16x32xf32> -> vector<16x32xf32>
    %237 = tpu.reciprocal %236 {approx = true} : vector<16x32xf32> -> vector<16x32xf32>
    %238 = arith.mulf %235, %237 : vector<16x32xf32>
    %cst_65 = arith.constant dense<0.000000e+00> : vector<16x32xf32>
    %239 = tpu.matmul %238, %228, %cst_65 {dimension_numbers = #tpu.dot_dimension_numbers<[1], [0], [0], [1], [0, 0, 1, 1], [], []>} : vector<16x32xf32>, vector<32x32xf32>, vector<16x32xf32> -> vector<16x32xf32>
    %cst_66 = arith.constant dense<0.000000e+00> : vector<16x32xf32>
    %240 = tpu.matmul %239, %207, %cst_66 {dimension_numbers = #tpu.dot_dimension_numbers<[1], [0], [0], [1], [0, 0, 1, 1], [], []>} : vector<16x32xf32>, vector<32x32xf32>, vector<16x32xf32> -> vector<16x32xf32>
    %241 = vector.broadcast %210 : vector<1x32xf32> to vector<16x32xf32>
    %242 = arith.addf %240, %241 : vector<16x32xf32>
    %243 = arith.addf %203, %242 : vector<16x32xf32>
    %cst_67 = arith.constant dense<0.000000e+00> : vector<16xf32>
    %244 = vector.multi_reduction <add>, %243, %cst_67 [1] : vector<16x32xf32> to vector<16xf32>
    %245 = vector.shape_cast %244 : vector<16xf32> to vector<16x1xf32>
    %cst_68 = arith.constant 3.200000e+01 : f32
    %246 = vector.broadcast %cst_68 : f32 to vector<16x1xf32>
    %247 = arith.divf %245, %246 : vector<16x1xf32>
    %248 = vector.broadcast %247 : vector<16x1xf32> to vector<16x32xf32>
    %249 = arith.subf %243, %248 : vector<16x32xf32>
    %250 = arith.mulf %249, %249 : vector<16x32xf32>
    %cst_69 = arith.constant dense<0.000000e+00> : vector<16xf32>
    %251 = vector.multi_reduction <add>, %250, %cst_69 [1] : vector<16x32xf32> to vector<16xf32>
    %252 = vector.shape_cast %251 : vector<16xf32> to vector<16x1xf32>
    %cst_70 = arith.constant 3.200000e+01 : f32
    %253 = vector.broadcast %cst_70 : f32 to vector<16x1xf32>
    %254 = arith.divf %252, %253 : vector<16x1xf32>
    %255 = vector.broadcast %247 : vector<16x1xf32> to vector<16x32xf32>
    %256 = arith.subf %243, %255 : vector<16x32xf32>
    %cst_71 = arith.constant 9.99999996E-13 : f32
    %257 = vector.broadcast %cst_71 : f32 to vector<16x1xf32>
    %258 = arith.addf %254, %257 : vector<16x1xf32>
    %259 = math.rsqrt %258 : vector<16x1xf32>
    %260 = vector.broadcast %259 : vector<16x1xf32> to vector<16x32xf32>
    %261 = arith.mulf %256, %260 : vector<16x32xf32>
    %262 = vector.broadcast %211 : vector<1x32xf32> to vector<16x32xf32>
    %263 = arith.mulf %261, %262 : vector<16x32xf32>
    %264 = vector.broadcast %212 : vector<1x32xf32> to vector<16x32xf32>
    %265 = arith.addf %263, %264 : vector<16x32xf32>
    %cst_72 = arith.constant dense<0.000000e+00> : vector<16x64xf32>
    %266 = tpu.matmul %265, %208, %cst_72 {dimension_numbers = #tpu.dot_dimension_numbers<[1], [0], [0], [1], [0, 0, 1, 1], [], []>} : vector<16x32xf32>, vector<32x64xf32>, vector<16x64xf32> -> vector<16x64xf32>
    %267 = vector.broadcast %216 : vector<1x64xf32> to vector<16x64xf32>
    %268 = arith.addf %266, %267 : vector<16x64xf32>
    %cst_73 = arith.constant 5.000000e-01 : f32
    %269 = vector.broadcast %cst_73 : f32 to vector<16x64xf32>
    %270 = arith.mulf %269, %268 : vector<16x64xf32>
    %cst_74 = arith.constant 4.471500e-02 : f32
    %271 = vector.broadcast %cst_74 : f32 to vector<16x64xf32>
    %272 = arith.mulf %271, %268 : vector<16x64xf32>
    %273 = arith.mulf %272, %268 : vector<16x64xf32>
    %274 = arith.mulf %273, %268 : vector<16x64xf32>
    %275 = arith.addf %268, %274 : vector<16x64xf32>
    %cst_75 = arith.constant 0.797884583 : f32
    %276 = vector.broadcast %cst_75 : f32 to vector<16x64xf32>
    %277 = arith.mulf %276, %275 : vector<16x64xf32>
    %278 = math.tanh %277 : vector<16x64xf32>
    %cst_76 = arith.constant 1.000000e+00 : f32
    %279 = vector.broadcast %cst_76 : f32 to vector<16x64xf32>
    %280 = arith.addf %279, %278 : vector<16x64xf32>
    %281 = arith.mulf %270, %280 : vector<16x64xf32>
    %cst_77 = arith.constant dense<0.000000e+00> : vector<16x32xf32>
    %282 = tpu.matmul %281, %218, %cst_77 {dimension_numbers = #tpu.dot_dimension_numbers<[1], [0], [0], [1], [0, 0, 1, 1], [], []>} : vector<16x64xf32>, vector<64x32xf32>, vector<16x32xf32> -> vector<16x32xf32>
    %283 = vector.broadcast %213 : vector<1x32xf32> to vector<16x32xf32>
    %284 = arith.addf %282, %283 : vector<16x32xf32>
    %285 = arith.addf %265, %284 : vector<16x32xf32>
    %cst_78 = arith.constant dense<0.000000e+00> : vector<16xf32>
    %286 = vector.multi_reduction <add>, %285, %cst_78 [1] : vector<16x32xf32> to vector<16xf32>
    %287 = vector.shape_cast %286 : vector<16xf32> to vector<16x1xf32>
    %cst_79 = arith.constant 3.200000e+01 : f32
    %288 = vector.broadcast %cst_79 : f32 to vector<16x1xf32>
    %289 = arith.divf %287, %288 : vector<16x1xf32>
    %290 = vector.broadcast %289 : vector<16x1xf32> to vector<16x32xf32>
    %291 = arith.subf %285, %290 : vector<16x32xf32>
    %292 = arith.mulf %291, %291 : vector<16x32xf32>
    %cst_80 = arith.constant dense<0.000000e+00> : vector<16xf32>
    %293 = vector.multi_reduction <add>, %292, %cst_80 [1] : vector<16x32xf32> to vector<16xf32>
    %294 = vector.shape_cast %293 : vector<16xf32> to vector<16x1xf32>
    %cst_81 = arith.constant 3.200000e+01 : f32
    %295 = vector.broadcast %cst_81 : f32 to vector<16x1xf32>
    %296 = arith.divf %294, %295 : vector<16x1xf32>
    %297 = vector.broadcast %289 : vector<16x1xf32> to vector<16x32xf32>
    %298 = arith.subf %285, %297 : vector<16x32xf32>
    %cst_82 = arith.constant 9.99999996E-13 : f32
    %299 = vector.broadcast %cst_82 : f32 to vector<16x1xf32>
    %300 = arith.addf %296, %299 : vector<16x1xf32>
    %301 = math.rsqrt %300 : vector<16x1xf32>
    %302 = vector.broadcast %301 : vector<16x1xf32> to vector<16x32xf32>
    %303 = arith.mulf %298, %302 : vector<16x32xf32>
    %304 = vector.broadcast %214 : vector<1x32xf32> to vector<16x32xf32>
    %305 = arith.mulf %303, %304 : vector<16x32xf32>
    %306 = vector.broadcast %215 : vector<1x32xf32> to vector<16x32xf32>
    %307 = arith.addf %305, %306 : vector<16x32xf32>
    %cst_83 = arith.constant dense<0.000000e+00> : vector<16x128xf32>
    %308 = tpu.matmul %307, %6, %cst_83 {dimension_numbers = #tpu.dot_dimension_numbers<[1], [0], [0], [1], [0, 0, 1, 1], [], []>} : vector<16x32xf32>, vector<32x128xf32>, vector<16x128xf32> -> vector<16x128xf32>
    %309 = vector.broadcast %8 : vector<1x128xf32> to vector<16x128xf32>
    %310 = arith.addf %308, %309 : vector<16x128xf32>
    %cst_84 = arith.constant dense<0.000000e+00> : vector<16x128xf32>
    %311 = tpu.matmul %307, %45, %cst_84 {dimension_numbers = #tpu.dot_dimension_numbers<[1], [0], [0], [1], [0, 0, 1, 1], [], []>} : vector<16x32xf32>, vector<32x128xf32>, vector<16x128xf32> -> vector<16x128xf32>
    %312 = arith.mulf %311, %310 : vector<16x128xf32>
    %cst_85 = arith.constant dense<0.000000e+00> : vector<16x4xf32>
    %313 = tpu.matmul %312, %53, %cst_85 {dimension_numbers = #tpu.dot_dimension_numbers<[1], [0], [0], [1], [0, 0, 1, 1], [], []>} : vector<16x128xf32>, vector<128x4xf32>, vector<16x4xf32> -> vector<16x4xf32>
    %314 = math.tanh %313 : vector<16x4xf32>
    %315 = arith.mulf %314, %3 : vector<16x4xf32>
    %cst_86 = arith.constant 1.000000e+00 : f32
    %316 = vector.broadcast %cst_86 : f32 to vector<16x4xf32>
    %317 = arith.subf %316, %3 : vector<16x4xf32>
    %cst_87 = arith.constant -1.000000e+04 : f32
    %318 = vector.broadcast %cst_87 : f32 to vector<16x4xf32>
    %319 = arith.mulf %317, %318 : vector<16x4xf32>
    %320 = arith.addf %315, %319 : vector<16x4xf32>
    %321 = math.exp %320 : vector<16x4xf32>
    %cst_88 = arith.constant dense<0.000000e+00> : vector<2x4xf32>
    %322 = tpu.matmul %69, %321, %cst_88 {dimension_numbers = #tpu.dot_dimension_numbers<[1], [0], [0], [1], [0, 0, 1, 1], [], []>} : vector<2x16xf32>, vector<16x4xf32>, vector<2x4xf32> -> vector<2x4xf32>
    %cst_89 = arith.constant dense<0.000000e+00> : vector<16x4xf32>
    %323 = tpu.matmul %77, %322, %cst_89 {dimension_numbers = #tpu.dot_dimension_numbers<[1], [0], [0], [1], [0, 0, 1, 1], [], []>} : vector<16x2xf32>, vector<2x4xf32>, vector<16x4xf32> -> vector<16x4xf32>
    %324 = tpu.reciprocal %323 {approx = true} : vector<16x4xf32> -> vector<16x4xf32>
    %325 = arith.mulf %321, %324 : vector<16x4xf32>
    %cst_90 = arith.constant dense<0.000000e+00> : vector<16x128xf32>
    %326 = tpu.matmul %325, %61, %cst_90 {dimension_numbers = #tpu.dot_dimension_numbers<[1], [0], [0], [1], [0, 0, 1, 1], [], []>} : vector<16x4xf32>, vector<4x128xf32>, vector<16x128xf32> -> vector<16x128xf32>
    %327 = arith.mulf %326, %311 : vector<16x128xf32>
    %cst_91 = arith.constant dense<0.000000e+00> : vector<2x128xf32>
    %328 = tpu.matmul %69, %327, %cst_91 {dimension_numbers = #tpu.dot_dimension_numbers<[1], [0], [0], [1], [0, 0, 1, 1], [], []>} : vector<2x16xf32>, vector<16x128xf32>, vector<2x128xf32> -> vector<2x128xf32>
    %cst_92 = arith.constant dense<0.000000e+00> : vector<2x16xf32>
    %329 = tpu.matmul %328, %13, %cst_92 {dimension_numbers = #tpu.dot_dimension_numbers<[1], [0], [0], [1], [0, 0, 1, 1], [], []>} : vector<2x128xf32>, vector<128x16xf32>, vector<2x16xf32> -> vector<2x16xf32>
    %cst_93 = arith.constant dense<0.000000e+00> : vector<2x16xf32>
    %330 = tpu.matmul %4, %15, %cst_93 {dimension_numbers = #tpu.dot_dimension_numbers<[1], [0], [0], [1], [0, 0, 1, 1], [], []>} : vector<2x12xf32>, vector<12x16xf32>, vector<2x16xf32> -> vector<2x16xf32>
    %331 = arith.addf %329, %330 : vector<2x16xf32>
    %332 = vector.broadcast %16 : vector<1x16xf32> to vector<2x16xf32>
    %333 = arith.addf %331, %332 : vector<2x16xf32>
    %cst_94 = arith.constant 0.000000e+00 : f32
    %334 = vector.broadcast %cst_94 : f32 to vector<2x16xf32>
    %335 = arith.maximumf %333, %334 : vector<2x16xf32>
    %cst_95 = arith.constant dense<0.000000e+00> : vector<2x16xf32>
    %336 = tpu.matmul %335, %14, %cst_95 {dimension_numbers = #tpu.dot_dimension_numbers<[1], [0], [0], [1], [0, 0, 1, 1], [], []>} : vector<2x16xf32>, vector<16x16xf32>, vector<2x16xf32> -> vector<2x16xf32>
    %337 = vector.broadcast %17 : vector<1x16xf32> to vector<2x16xf32>
    %338 = arith.addf %336, %337 : vector<2x16xf32>
    %cst_96 = arith.constant 0.000000e+00 : f32
    %339 = vector.broadcast %cst_96 : f32 to vector<2x16xf32>
    %340 = arith.maximumf %338, %339 : vector<2x16xf32>
    %cst_97 = arith.constant dense<0.000000e+00> : vector<2x128xf32>
    %341 = tpu.matmul %340, %7, %cst_97 {dimension_numbers = #tpu.dot_dimension_numbers<[1], [0], [0], [1], [0, 0, 1, 1], [], []>} : vector<2x16xf32>, vector<16x128xf32>, vector<2x128xf32> -> vector<2x128xf32>
    %342 = vector.broadcast %9 : vector<1x128xf32> to vector<2x128xf32>
    %343 = arith.addf %341, %342 : vector<2x128xf32>
    %c0_98 = arith.constant 0 : index
    %c0_99 = arith.constant 0 : index
    %344 = vector.load %arg5[%c0_98, %c0_99] : memref<2x128xf32, #tpu.memory_space<vmem>>, vector<2x128xf32>
    tpu.vector_store %arg5[%c0_98, %c0_99], %343 {strides = array<i32>} : memref<2x128xf32, #tpu.memory_space<vmem>>, vector<2x128xf32>,
    return
  }
}

</mosaic_0001>

<llo_original>
// kernel: bert_feature_grader_forward.1
$region0: #{bert_feature_grader_forward.1}
  #allocation0 [shape = 'u32[]', space=smem, size = 0x4, offset = 0x4, fixed_abs, tag = 'smem constant byte address 0x4 - core index']
  #allocation1 [shape = 'u32[144,128]{1,0:T(1,128)}', space=vmem, size = 0x12000, scoped, tag = 'internal scratch']
  %s0 = inlined_call_operand.vmem [shape: f32[16,80], index: 0, kind: input, shape index: {}]
  %s1 = inlined_call_operand.vmem [shape: f32[2,36,192], index: 1, kind: input, shape index: {}]
  %s2 = inlined_call_operand.vmem [shape: f32[2,64,32], index: 2, kind: input, shape index: {}]
  %s3 = inlined_call_operand.vmem [shape: f32[52,128], index: 3, kind: input, shape index: {}]
  %s4 = inlined_call_operand.vmem [shape: f32[158,16], index: 4, kind: input, shape index: {}]
  %s5 = inlined_call_operand.vmem [shape: f32[2,128], index: 5, kind: output, shape index: {}]
  %s6 = sld [smem:[#allocation0]]
  $region30: #{bert_feature_grader_forward.1} parent=0
    _
  %s8 = ssub.s32 1, %s6
  %s9 = scalar_select 0, %s8, %s6
  // Predicated region
  $region2: #{bert_feature_grader_forward.1} parent=0 // pred_check
    _
  $region3: #{bert_feature_grader_forward.1} parent=0 // pred_check_branch
    %11 = sbr.rel (0) target = $region5
  $region4: #{bert_feature_grader_forward.1} parent=0 // pred_region
    _
  $region5: #{bert_feature_grader_forward.1} parent=0 // pred_fallthru
    _
  // Predicated region
  $region6: #{bert_feature_grader_forward.1} parent=0 // pred_check
    _
  $region7: #{bert_feature_grader_forward.1} parent=0 // pred_check_branch
    %13 = sbr.rel (0) target = $region9
  $region8: #{bert_feature_grader_forward.1} parent=0 // pred_region
    _
  $region9: #{bert_feature_grader_forward.1} parent=0 // pred_fallthru
    _
  // Predicated region
  $region10: #{bert_feature_grader_forward.1} parent=0 // pred_check
    _
  $region11: #{bert_feature_grader_forward.1} parent=0 // pred_check_branch
    %15 = sbr.rel (0) target = $region13
  $region12: #{bert_feature_grader_forward.1} parent=0 // pred_region
    _
  $region13: #{bert_feature_grader_forward.1} parent=0 // pred_fallthru
    _
  // Predicated region
  $region14: #{bert_feature_grader_forward.1} parent=0 // pred_check
    _
  $region15: #{bert_feature_grader_forward.1} parent=0 // pred_check_branch
    %17 = sbr.rel (0) target = $region17
  $region16: #{bert_feature_grader_forward.1} parent=0 // pred_region
    _
  $region17: #{bert_feature_grader_forward.1} parent=0 // pred_fallthru
    _
  // Predicated region
  $region18: #{bert_feature_grader_forward.1} parent=0 // pred_check
    _
  $region19: #{bert_feature_grader_forward.1} parent=0 // pred_check_branch
    %19 = sbr.rel (0) target = $region21
  $region20: #{bert_feature_grader_forward.1} parent=0 // pred_region
    _
  $region21: #{bert_feature_grader_forward.1} parent=0 // pred_fallthru
    _
  %v20 = vld [vmem:[%s0] sm:$0xff]
  %v21 = vld [vmem:[%s0 + $0x8] sm:$0xff]
  %v22 = vld [vmem:[%s3] sm:$0xff]
  %v23 = vld [vmem:[%s3 + $0x8] sm:$0xff]
  %v24 = vld [vmem:[%s3 + $0x10] sm:$0xff]
  %v25 = vld [vmem:[%s3 + $0x18] sm:$0xff]
  %v26 = vld [vmem:[%s3 + $0x20] sm:$0xff]
  %v27 = vld [vmem:[%s3 + $0x28] sm:$0xff]
  %v28 = vld [vmem:[%s3 + $0x30] sm:$0xf]
  %v29 = vld [vmem:[%s4] sm:$0xff]
  %v30 = vld [vmem:[%s4 + $0x8] sm:$0xff]
  %v31 = vld [vmem:[%s4 + $0x10] sm:$0xff]
  %v32 = vld [vmem:[%s4 + $0x18] sm:$0xff]
  %v33 = vld [vmem:[%s4 + $0x20] sm:$0xff]
  %v34 = vld [vmem:[%s4 + $0x28] sm:$0xff]
  %v35 = vld [vmem:[%s4 + $0x30] sm:$0xff]
  %v36 = vld [vmem:[%s4 + $0x38] sm:$0xff]
  %v37 = vld [vmem:[%s4 + $0x40] sm:$0xff]
  %v38 = vld [vmem:[%s4 + $0x48] sm:$0xff]
  %v39 = vld [vmem:[%s4 + $0x50] sm:$0xff]
  %v40 = vld [vmem:[%s4 + $0x58] sm:$0xff]
  %v41 = vld [vmem:[%s4 + $0x60] sm:$0xff]
  %v42 = vld [vmem:[%s4 + $0x68] sm:$0xff]
  %v43 = vld [vmem:[%s4 + $0x70] sm:$0xff]
  %v44 = vld [vmem:[%s4 + $0x78] sm:$0xff]
  %v45 = vld [vmem:[%s4 + $0x80] sm:$0xff]
  %v46 = vld [vmem:[%s4 + $0x88] sm:$0xff]
  %v47 = vld [vmem:[%s4 + $0x90] sm:$0xff]
  %v48 = vld [vmem:[%s4 + $0x98] sm:$0x3f]
  %v49 = vlaneseq
  %v50 = vshrl.u32 %v49, 7
  %v51 = vadd.s32 %v50, 8
  %v52 = vadd.s32 %v50, 16
  %v53 = vadd.s32 %v50, 24
  %v54 = vshra.s32 %v50, 4
  %v55 = vshra.s32 %v51, 4
  %v56 = vshra.s32 %v52, 4
  %v57 = vshra.s32 %v53, 4
  %v58 = vlaneseq
  %v59 = vand.u32 %v58, 127
  %v60 = vshra.s32 %v59, 4
  %vm61 = vcmp.eq.s32.totalorder %v54, %v60
  %vm62 = vcmp.eq.s32.totalorder %v55, %v60
  %vm63 = vcmp.eq.s32.totalorder %v56, %v60
  %vm64 = vcmp.eq.s32.totalorder %v57, %v60
  %v65 = vsel %vm61, 1.0, 0.0
  %v66 = vsel %vm62, 1.0, 0.0
  %v67 = vsel %vm63, 1.0, 0.0
  %v68 = vsel %vm64, 1.0, 0.0
  %v69 = vand.u32 %v59, 31
  %vm70 = vcmp.eq.s32.totalorder %v69, %v50
  %vm71 = vcmp.eq.s32.totalorder %v69, %v51
  %vm72 = vcmp.eq.s32.totalorder %v69, %v52
  %vm73 = vcmp.eq.s32.totalorder %v69, %v53
  %v74 = vsel %vm70, 1.0, 0.0
  %v75 = vsel %vm71, 1.0, 0.0
  %v76 = vsel %vm72, 1.0, 0.0
  %v77 = vsel %vm73, 1.0, 0.0
  %v78 = vadd.s32 %v50, 32
  %v79 = vadd.s32 %v50, 40
  %v80 = vadd.s32 %v50, 48
  %v81 = vadd.s32 %v50, 56
  %v82 = vadd.s32 %v50, 64
  %v83 = vadd.s32 %v50, 72
  %v84 = vadd.s32 %v50, 80
  %v85 = vadd.s32 %v50, 88
  %v86 = vadd.s32 %v50, 96
  %v87 = vadd.s32 %v50, 104
  %v88 = vadd.s32 %v50, 112
  %v89 = vadd.s32 %v50, 120
  %v90 = vshra.s32 %v50, 5
  %v91 = vshra.s32 %v51, 5
  %v92 = vshra.s32 %v52, 5
  %v93 = vshra.s32 %v53, 5
  %v94 = vshra.s32 %v78, 5
  %v95 = vshra.s32 %v79, 5
  %v96 = vshra.s32 %v80, 5
  %v97 = vshra.s32 %v81, 5
  %v98 = vshra.s32 %v82, 5
  %v99 = vshra.s32 %v83, 5
  %v100 = vshra.s32 %v84, 5
  %v101 = vshra.s32 %v85, 5
  %v102 = vshra.s32 %v86, 5
  %v103 = vshra.s32 %v87, 5
  %v104 = vshra.s32 %v88, 5
  %v105 = vshra.s32 %v89, 5
  %vm106 = vcmp.eq.s32.totalorder %v90, %v59
  %vm107 = vcmp.eq.s32.totalorder %v91, %v59
  %vm108 = vcmp.eq.s32.totalorder %v92, %v59
  %vm109 = vcmp.eq.s32.totalorder %v93, %v59
  %vm110 = vcmp.eq.s32.totalorder %v94, %v59
  %vm111 = vcmp.eq.s32.totalorder %v95, %v59
  %vm112 = vcmp.eq.s32.totalorder %v96, %v59
  %vm113 = vcmp.eq.s32.totalorder %v97, %v59
  %vm114 = vcmp.eq.s32.totalorder %v98, %v59
  %vm115 = vcmp.eq.s32.totalorder %v99, %v59
  %vm116 = vcmp.eq.s32.totalorder %v100, %v59
  %vm117 = vcmp.eq.s32.totalorder %v101, %v59
  %vm118 = vcmp.eq.s32.totalorder %v102, %v59
  %vm119 = vcmp.eq.s32.totalorder %v103, %v59
  %vm120 = vcmp.eq.s32.totalorder %v104, %v59
  %vm121 = vcmp.eq.s32.totalorder %v105, %v59
  %v122 = vsel %vm106, 1.0, 0.0
  %v123 = vsel %vm107, 1.0, 0.0
  %v124 = vsel %vm108, 1.0, 0.0
  %v125 = vsel %vm109, 1.0, 0.0
  %v126 = vsel %vm110, 1.0, 0.0
  %v127 = vsel %vm111, 1.0, 0.0
  %v128 = vsel %vm112, 1.0, 0.0
  %v129 = vsel %vm113, 1.0, 0.0
  %v130 = vsel %vm114, 1.0, 0.0
  %v131 = vsel %vm115, 1.0, 0.0
  %v132 = vsel %vm116, 1.0, 0.0
  %v133 = vsel %vm117, 1.0, 0.0
  %v134 = vsel %vm118, 1.0, 0.0
  %v135 = vsel %vm119, 1.0, 0.0
  %v136 = vsel %vm120, 1.0, 0.0
  %v137 = vsel %vm121, 1.0, 0.0
  %v138 = vshra.s32 %v59, 5
  %vm139 = vcmp.eq.s32.totalorder %v50, %v138
  %v140 = vsel %vm139, 1.0, 0.0
  %v141 = vshra.s32 %v59, 3
  %vm142 = vcmp.eq.s32.totalorder %v50, %v141
  %v143 = vsel %vm142, 1.0, 0.0
  %v144 = vshra.s32 %v50, 3
  %v145 = vshra.s32 %v51, 3
  %vm146 = vcmp.eq.s32.totalorder %v144, %v59
  %vm147 = vcmp.eq.s32.totalorder %v145, %v59
  %v148 = vsel %vm146, 1.0, 0.0
  %v149 = vsel %vm147, 1.0, 0.0
  %vm150 = vcmask 261120
  %v151 = vsel %vm150, %v20, 0.0
  %152 = vadd.xlane.f32.xlu0 %v151
  %v153 = vpop.xlane.xlu0 %152
  %v154 = vsel %vm150, %v21, 0.0
  %155 = vadd.xlane.f32.xlu0 %v154
  %v156 = vpop.xlane.xlu0 %155
  %v157 = vrcp.pop 32.0
  %v158 = vmul.f32 %v153, %v157
  %v159 = vmul.f32 %v156, %v157
  %v160 = vsub.f32 %v20, %v158
  %v161 = vsub.f32 %v21, %v159
  %v162 = vmul.f32 %v160, %v160
  %v163 = vmul.f32 %v161, %v161
  %v164 = vsel %vm150, %v162, 0.0
  %165 = vadd.xlane.f32.xlu0 %v164
  %v166 = vpop.xlane.xlu0 %165
  %v167 = vsel %vm150, %v163, 0.0
  %168 = vadd.xlane.f32.xlu0 %v167
  %v169 = vpop.xlane.xlu0 %168
  %v170 = vmul.f32 %v166, %v157
  %v171 = vmul.f32 %v169, %v157
  %v172 = vadd.f32 %v170, 1e-12
  %v173 = vadd.f32 %v171, 1e-12
  %v174 = vrsqrt.pop %v172
  %v175 = vrsqrt.pop %v173
  %v176 = vmul.f32 %v160, %v174
  %v177 = vmul.f32 %v161, %v175
  %v178 = vlaneseq
  %v179 = vshrl.u32 %v178, 7
  %v180 = vsub.s32 2, %v179
  %v181 = vrot.slane %v28, %v180
  %v182 = vmul.f32 %v176, %v181
  %v183 = vmul.f32 %v177, %v181
  %v184 = vlaneseq
  %v185 = vshrl.u32 %v184, 7
  %v186 = vsub.s32 3, %v185
  %v187 = vrot.slane %v28, %v186
  %v188 = vadd.f32 %v182, %v187
  %v189 = vadd.f32 %v183, %v187
  %v190 = vld [vmem:[%s1] sm:$0xff]
  %v191 = vld [vmem:[%s1 + $0x8] sm:$0xff]
  %v192 = vld [vmem:[%s1 + $0x10] sm:$0xff]
  %v193 = vld [vmem:[%s1 + $0x18] sm:$0xff]
  %v194 = vld [vmem:[%s1 + $0x20] sm:$0xff]
  %v195 = vld [vmem:[%s1 + $0x28] sm:$0xff]
  %v196 = vld [vmem:[%s1 + $0x30] sm:$0xff]
  %v197 = vld [vmem:[%s1 + $0x38] sm:$0xff]
  %v198 = vld [vmem:[%s1 + $0x40] sm:$0xf]
  %v199 = vld [vmem:[%s2] sm:$0xff]
  %v200 = vld [vmem:[%s2 + $0x8] sm:$0xff]
  %v201 = vld [vmem:[%s2 + $0x10] sm:$0xff]
  %v202 = vld [vmem:[%s2 + $0x18] sm:$0xff]
  %v203 = vld [vmem:[%s2 + $0x20] sm:$0xff]
  %v204 = vld [vmem:[%s2 + $0x28] sm:$0xff]
  %v205 = vld [vmem:[%s2 + $0x30] sm:$0xff]
  %v206 = vld [vmem:[%s2 + $0x38] sm:$0xff]
  %v207 = vlaneseq
  %v208 = vshrl.u32 %v207, 7
  %v209 = vsub.s32 0, %v208
  %v210 = vrot.slane %v198, %v209
  %v212 = vsel %vm150, %v188, 0
  %v215 = vsel %vm150, %v189, 0
  %217 = vmatprep.subr.mxu0 0.0
  %218 = vmatpush1.msra.mxu0 %v190
  %219 = vmatprep.subr.mxu0 0.0
  %220 = vmatpush1.msra.mxu0 %v192
  %221 = vmatprep.subr.mxu0 0.0
  %222 = vmatpush1.msra.mxu0 %v194
  %223 = vmatprep.subr.mxu0 0.0
  %224 = vmatpush1.msra.mxu0 %v196
  %225 = vmatprep.subr.mxu0 0.0
  %226 = vmatpush1.msra.mxu0 0.0
  %227 = vmatprep.subr.mxu0 0.0
  %228 = vmatpush1.msra.mxu0 0.0
  %229 = vmatprep.subr.mxu0 0.0
  %230 = vmatpush1.msra.mxu0 0.0
  %231 = vmatprep.subr.mxu0 0.0
  %232 = vmatpush1.msra.mxu0 0.0
  %233 = vmatprep.subr.mxu0 0.0
  %234 = vmatpush1.msra.mxu0 0.0
  %235 = vmatprep.subr.mxu0 0.0
  %236 = vmatpush1.msra.mxu0 0.0
  %237 = vmatprep.subr.mxu0 0.0
  %238 = vmatpush1.msra.mxu0 0.0
  %239 = vmatprep.subr.mxu0 0.0
  %240 = vmatpush1.msra.mxu0 0.0
  %241 = vmatprep.subr.mxu0 0.0
  %242 = vmatpush1.msra.mxu0 0.0
  %243 = vmatprep.subr.mxu0 0.0
  %244 = vmatpush1.msra.mxu0 0.0
  %245 = vmatprep.subr.mxu0 0.0
  %246 = vmatpush1.msra.mxu0 0.0
  %247 = vmatprep.subr.mxu0 0.0
  %248 = vmatpush1.msra.mxu0 0.0
  %249 = vmatprep.subr.mxu0 0.0
  %250 = vmatpush1.msra.mxu0 0.0
  %251 = vmatprep.subr.mxu0 0.0
  %252 = vmatpush1.msra.mxu0 0.0
  %253 = vmatprep.subr.mxu0 0.0
  %254 = vmatpush1.msra.mxu0 0.0
  %255 = vmatprep.subr.mxu0 0.0
  %256 = vmatpush1.msra.mxu0 0.0
  %257 = vmatprep.subr.mxu0 0.0
  %258 = vmatpush1.msra.mxu0 0.0
  %259 = vmatprep.subr.mxu0 0.0
  %260 = vmatpush1.msra.mxu0 0.0
  %261 = vmatprep.subr.mxu0 0.0
  %262 = vmatpush1.msra.mxu0 0.0
  %263 = vmatprep.subr.mxu0 0.0
  %264 = vmatpush1.msra.mxu0 0.0
  %265 = vmatprep.subr.mxu0 0.0
  %266 = vmatpush1.msra.mxu0 0.0
  %267 = vmatprep.subr.mxu0 0.0
  %268 = vmatpush1.msra.mxu0 0.0
  %269 = vmatprep.subr.mxu0 0.0
  %270 = vmatpush1.msra.mxu0 0.0
  %271 = vmatprep.subr.mxu0 0.0
  %272 = vmatpush1.msra.mxu0 0.0
  %273 = vmatprep.subr.mxu0 0.0
  %274 = vmatpush1.msra.mxu0 0.0
  %275 = vmatprep.subr.mxu0 0.0
  %276 = vmatpush1.msra.mxu0 0.0
  %277 = vmatprep.subr.mxu0 0.0
  %278 = vmatpush1.msra.mxu0 0.0
  %279 = vmatprep.subr.mxu0 0.0
  %280 = vmatpush1.msra.mxu0 0.0
  %281 = vmatprep.mubr.f32.mxu0 0.0
  %282 = vmatmul.mubr.f32.gmra.mrb[0].mxu0 %v212
  %v283 = vpop.f32.mrb[0].mxu0
  %v284 = vadd.f32 %v210, %v283
  %v285 = vpop.f32.mrb[0].mxu0
  %286 = vmatprep.mubr.f32.mxu0 0.0
  %287 = vmatmul.mubr.f32.gmra.mrb[0].mxu0 %v215
  %v288 = vpop.f32.mrb[0].mxu0
  %v289 = vadd.f32 %v210, %v288
  %v290 = vpop.f32.mrb[0].mxu0
  %291 = vdwg.mxu0
  %296 = vrot.lane.b32.xlu0 %v65, 32
  %v297 = vpop.permute.xlu0 %296
  %298 = vrot.lane.b32.xlu0 %v66, 32
  %v299 = vpop.permute.xlu0 %298
  %300 = vrot.lane.b32.xlu0 %v67, 32
  %v301 = vpop.permute.xlu0 %300
  %302 = vrot.lane.b32.xlu0 %v68, 32
  %v303 = vpop.permute.xlu0 %302
  %v308 = vmul.f32 %v284, %v297
  %v309 = vmul.f32 %v289, %v299
  %v310 = vmul.f32 %v284, %v301
  %v311 = vmul.f32 %v289, %v303
  %312 = vrot.lane.b32.xlu0 %v65, 64
  %v313 = vpop.permute.xlu0 %312
  %314 = vrot.lane.b32.xlu0 %v66, 64
  %v315 = vpop.permute.xlu0 %314
  %316 = vrot.lane.b32.xlu0 %v67, 64
  %v317 = vpop.permute.xlu0 %316
  %318 = vrot.lane.b32.xlu0 %v68, 64
  %v319 = vpop.permute.xlu0 %318
  %v324 = vmul.f32 %v284, %v313
  %v325 = vmul.f32 %v289, %v315
  %v326 = vmul.f32 %v284, %v317
  %v327 = vmul.f32 %v289, %v319
  %332 = vrot.lane.b32.xlu0 %v308, 96
  %v333 = vpop.permute.xlu0 %332
  %334 = vrot.lane.b32.xlu0 %v309, 96
  %v335 = vpop.permute.xlu0 %334
  %336 = vrot.lane.b32.xlu0 %v310, 96
  %v337 = vpop.permute.xlu0 %336
  %338 = vrot.lane.b32.xlu0 %v311, 96
  %v339 = vpop.permute.xlu0 %338
  %342 = vrot.lane.b32.xlu0 %v20, 96
  %v343 = vpop.permute.xlu0 %342
  %344 = vrot.lane.b32.xlu0 %v21, 96
  %v345 = vpop.permute.xlu0 %344
  %v349 = vsel %vm150, %v284, 0
  %v352 = vsel %vm150, %v289, 0
  %v354 = vsel %vm150, %v333, 0
  %v356 = vsel %vm150, %v335, 0
  %v358 = vsel %vm150, %v337, 0
  %v360 = vsel %vm150, %v339, 0
  %362 = vmatprep.subr.mxu0 0.0
  %363 = vmatpush1.xpose.msra.mxu0 %v354
  %364 = vmatprep.subr.mxu0 0.0
  %365 = vmatpush1.xpose.msra.mxu0 %v356
  %366 = vmatprep.subr.mxu0 0.0
  %367 = vmatpush1.xpose.msra.mxu0 %v358
  %368 = vmatprep.subr.mxu0 0.0
  %369 = vmatpush1.xpose.msra.mxu0 %v360
  %370 = vmatprep.subr.mxu0 0.0
  %371 = vmatpush1.xpose.msra.mxu0 0.0
  %372 = vmatprep.subr.mxu0 0.0
  %373 = vmatpush1.xpose.msra.mxu0 0.0
  %374 = vmatprep.subr.mxu0 0.0
  %375 = vmatpush1.xpose.msra.mxu0 0.0
  %376 = vmatprep.subr.mxu0 0.0
  %377 = vmatpush1.xpose.msra.mxu0 0.0
  %378 = vmatprep.subr.mxu0 0.0
  %379 = vmatpush1.xpose.msra.mxu0 0.0
  %380 = vmatprep.subr.mxu0 0.0
  %381 = vmatpush1.xpose.msra.mxu0 0.0
  %382 = vmatprep.subr.mxu0 0.0
  %383 = vmatpush1.xpose.msra.mxu0 0.0
  %384 = vmatprep.subr.mxu0 0.0
  %385 = vmatpush1.xpose.msra.mxu0 0.0
  %386 = vmatprep.subr.mxu0 0.0
  %387 = vmatpush1.xpose.msra.mxu0 0.0
  %388 = vmatprep.subr.mxu0 0.0
  %389 = vmatpush1.xpose.msra.mxu0 0.0
  %390 = vmatprep.subr.mxu0 0.0
  %391 = vmatpush1.xpose.msra.mxu0 0.0
  %392 = vmatprep.subr.mxu0 0.0
  %393 = vmatpush1.xpose.msra.mxu0 0.0
  %394 = vmatprep.subr.mxu0 0.0
  %395 = vmatpush1.xpose.msra.mxu0 0.0
  %396 = vmatprep.subr.mxu0 0.0
  %397 = vmatpush1.xpose.msra.mxu0 0.0
  %398 = vmatprep.subr.mxu0 0.0
  %399 = vmatpush1.xpose.msra.mxu0 0.0
  %400 = vmatprep.subr.mxu0 0.0
  %401 = vmatpush1.xpose.msra.mxu0 0.0
  %402 = vmatprep.subr.mxu0 0.0
  %403 = vmatpush1.xpose.msra.mxu0 0.0
  %404 = vmatprep.subr.mxu0 0.0
  %405 = vmatpush1.xpose.msra.mxu0 0.0
  %406 = vmatprep.subr.mxu0 0.0
  %407 = vmatpush1.xpose.msra.mxu0 0.0
  %408 = vmatprep.subr.mxu0 0.0
  %409 = vmatpush1.xpose.msra.mxu0 0.0
  %410 = vmatprep.subr.mxu0 0.0
  %411 = vmatpush1.xpose.msra.mxu0 0.0
  %412 = vmatprep.subr.mxu0 0.0
  %413 = vmatpush1.xpose.msra.mxu0 0.0
  %414 = vmatprep.subr.mxu0 0.0
  %415 = vmatpush1.xpose.msra.mxu0 0.0
  %416 = vmatprep.subr.mxu0 0.0
  %417 = vmatpush1.xpose.msra.mxu0 0.0
  %418 = vmatprep.subr.mxu0 0.0
  %419 = vmatpush1.xpose.msra.mxu0 0.0
  %420 = vmatprep.subr.mxu0 0.0
  %421 = vmatpush1.xpose.msra.mxu0 0.0
  %422 = vmatprep.subr.mxu0 0.0
  %423 = vmatpush1.xpose.msra.mxu0 0.0
  %424 = vmatprep.subr.mxu0 0.0
  %425 = vmatpush1.xpose.msra.mxu0 0.0
  %426 = vmatprep.mubr.f32.mxu0 0.0
  %427 = vmatmul.mubr.f32.gmra.mrb[0].mxu0 %v349
  %v428 = vpop.f32.mrb[0].mxu0
  %v429 = vadd.f32 %v343, %v428
  %v430 = vpop.f32.mrb[0].mxu0
  %431 = vmatprep.mubr.f32.mxu0 0.0
  %432 = vmatmul.mubr.f32.gmra.mrb[0].mxu0 %v352
  %v433 = vpop.f32.mrb[0].mxu0
  %v434 = vadd.f32 %v345, %v433
  %v435 = vpop.f32.mrb[0].mxu0
  %436 = vdwg.mxu0
  %v437 = vsel %vm150, %v429, -inf
  %438 = vmax.xlane.f32.xlu0 %v437
  %v439 = vpop.xlane.xlu0 %438
  %v440 = vsel %vm150, %v434, -inf
  %441 = vmax.xlane.f32.xlu0 %v440
  %v442 = vpop.xlane.xlu0 %441
  %v443 = vsub.f32 %v429, %v439
  %v444 = vsub.f32 %v434, %v442
  %v445 = vmul.f32 %v443, 1.442695
  %v446 = vpow.pop %v445
  %v447 = vmul.f32 %v444, 1.442695
  %v448 = vpow.pop %v447
  %v450 = vsel %vm150, %v446, 0
  %v453 = vsel %vm150, %v448, 0
  %455 = vmatprep.subr.mxu0 0.0
  %456 = vmatpush1.msra.mxu0 %v65
  %457 = vmatprep.subr.mxu0 0.0
  %458 = vmatpush1.msra.mxu0 %v66
  %459 = vmatprep.subr.mxu0 0.0
  %460 = vmatpush1.msra.mxu0 %v67
  %461 = vmatprep.subr.mxu0 0.0
  %462 = vmatpush1.msra.mxu0 %v68
  %463 = vmatprep.subr.mxu0 0.0
  %464 = vmatpush1.msra.mxu0 0.0
  %465 = vmatprep.subr.mxu0 0.0
  %466 = vmatpush1.msra.mxu0 0.0
  %467 = vmatprep.subr.mxu0 0.0
  %468 = vmatpush1.msra.mxu0 0.0
  %469 = vmatprep.subr.mxu0 0.0
  %470 = vmatpush1.msra.mxu0 0.0
  %471 = vmatprep.subr.mxu0 0.0
  %472 = vmatpush1.msra.mxu0 0.0
  %473 = vmatprep.subr.mxu0 0.0
  %474 = vmatpush1.msra.mxu0 0.0
  %475 = vmatprep.subr.mxu0 0.0
  %476 = vmatpush1.msra.mxu0 0.0
  %477 = vmatprep.subr.mxu0 0.0
  %478 = vmatpush1.msra.mxu0 0.0
  %479 = vmatprep.subr.mxu0 0.0
  %480 = vmatpush1.msra.mxu0 0.0
  %481 = vmatprep.subr.mxu0 0.0
  %482 = vmatpush1.msra.mxu0 0.0
  %483 = vmatprep.subr.mxu0 0.0
  %484 = vmatpush1.msra.mxu0 0.0
  %485 = vmatprep.subr.mxu0 0.0
  %486 = vmatpush1.msra.mxu0 0.0
  %487 = vmatprep.subr.mxu0 0.0
  %488 = vmatpush1.msra.mxu0 0.0
  %489 = vmatprep.subr.mxu0 0.0
  %490 = vmatpush1.msra.mxu0 0.0
  %491 = vmatprep.subr.mxu0 0.0
  %492 = vmatpush1.msra.mxu0 0.0
  %493 = vmatprep.subr.mxu0 0.0
  %494 = vmatpush1.msra.mxu0 0.0
  %495 = vmatprep.subr.mxu0 0.0
  %496 = vmatpush1.msra.mxu0 0.0
  %497 = vmatprep.subr.mxu0 0.0
  %498 = vmatpush1.msra.mxu0 0.0
  %499 = vmatprep.subr.mxu0 0.0
  %500 = vmatpush1.msra.mxu0 0.0
  %501 = vmatprep.subr.mxu0 0.0
  %502 = vmatpush1.msra.mxu0 0.0
  %503 = vmatprep.subr.mxu0 0.0
  %504 = vmatpush1.msra.mxu0 0.0
  %505 = vmatprep.subr.mxu0 0.0
  %506 = vmatpush1.msra.mxu0 0.0
  %507 = vmatprep.subr.mxu0 0.0
  %508 = vmatpush1.msra.mxu0 0.0
  %509 = vmatprep.subr.mxu0 0.0
  %510 = vmatpush1.msra.mxu0 0.0
  %511 = vmatprep.subr.mxu0 0.0
  %512 = vmatpush1.msra.mxu0 0.0
  %513 = vmatprep.subr.mxu0 0.0
  %514 = vmatpush1.msra.mxu0 0.0
  %515 = vmatprep.subr.mxu0 0.0
  %516 = vmatpush1.msra.mxu0 0.0
  %517 = vmatprep.subr.mxu0 0.0
  %518 = vmatpush1.msra.mxu0 0.0
  %519 = vmatprep.mubr.f32.mxu0 0.0
  %520 = vmatmul.mubr.f32.gmra.mrb[0].mxu0 %v450
  %v521 = vpop.f32.mrb[0].mxu0
  %v522 = vadd.f32 0.0, %v521
  %v523 = vpop.f32.mrb[0].mxu0
  %524 = vmatprep.mubr.f32.mxu0 0.0
  %525 = vmatmul.mubr.f32.gmra.mrb[0].mxu0 %v453
  %v526 = vpop.f32.mrb[0].mxu0
  %v527 = vadd.f32 0.0, %v526
  %v528 = vpop.f32.mrb[0].mxu0
  %529 = vdwg.mxu0
  %v530 = vrcp.pop %v522
  %v531 = vrcp.pop %v527
  %v532 = vmul.f32 %v446, %v530
  %v533 = vmul.f32 %v448, %v531
  %538 = vrot.lane.b32.xlu0 %v324, 64
  %v539 = vpop.permute.xlu0 %538
  %540 = vrot.lane.b32.xlu0 %v325, 64
  %v541 = vpop.permute.xlu0 %540
  %542 = vrot.lane.b32.xlu0 %v326, 64
  %v543 = vpop.permute.xlu0 %542
  %544 = vrot.lane.b32.xlu0 %v327, 64
  %v545 = vpop.permute.xlu0 %544
  %v551 = vsel %vm150, %v532, 0
  %v554 = vsel %vm150, %v533, 0
  %556 = vmatprep.subr.mxu0 0.0
  %557 = vmatpush1.msra.mxu0 %v539
  %558 = vmatprep.subr.mxu0 0.0
  %559 = vmatpush1.msra.mxu0 %v541
  %560 = vmatprep.subr.mxu0 0.0
  %561 = vmatpush1.msra.mxu0 %v543
  %562 = vmatprep.subr.mxu0 0.0
  %563 = vmatpush1.msra.mxu0 %v545
  %564 = vmatprep.subr.mxu0 0.0
  %565 = vmatpush1.msra.mxu0 0.0
  %566 = vmatprep.subr.mxu0 0.0
  %567 = vmatpush1.msra.mxu0 0.0
  %568 = vmatprep.subr.mxu0 0.0
  %569 = vmatpush1.msra.mxu0 0.0
  %570 = vmatprep.subr.mxu0 0.0
  %571 = vmatpush1.msra.mxu0 0.0
  %572 = vmatprep.subr.mxu0 0.0
  %573 = vmatpush1.msra.mxu0 0.0
  %574 = vmatprep.subr.mxu0 0.0
  %575 = vmatpush1.msra.mxu0 0.0
  %576 = vmatprep.subr.mxu0 0.0
  %577 = vmatpush1.msra.mxu0 0.0
  %578 = vmatprep.subr.mxu0 0.0
  %579 = vmatpush1.msra.mxu0 0.0
  %580 = vmatprep.subr.mxu0 0.0
  %581 = vmatpush1.msra.mxu0 0.0
  %582 = vmatprep.subr.mxu0 0.0
  %583 = vmatpush1.msra.mxu0 0.0
  %584 = vmatprep.subr.mxu0 0.0
  %585 = vmatpush1.msra.mxu0 0.0
  %586 = vmatprep.subr.mxu0 0.0
  %587 = vmatpush1.msra.mxu0 0.0
  %588 = vmatprep.subr.mxu0 0.0
  %589 = vmatpush1.msra.mxu0 0.0
  %590 = vmatprep.subr.mxu0 0.0
  %591 = vmatpush1.msra.mxu0 0.0
  %592 = vmatprep.subr.mxu0 0.0
  %593 = vmatpush1.msra.mxu0 0.0
  %594 = vmatprep.subr.mxu0 0.0
  %595 = vmatpush1.msra.mxu0 0.0
  %596 = vmatprep.subr.mxu0 0.0
  %597 = vmatpush1.msra.mxu0 0.0
  %598 = vmatprep.subr.mxu0 0.0
  %599 = vmatpush1.msra.mxu0 0.0
  %600 = vmatprep.subr.mxu0 0.0
  %601 = vmatpush1.msra.mxu0 0.0
  %602 = vmatprep.subr.mxu0 0.0
  %603 = vmatpush1.msra.mxu0 0.0
  %604 = vmatprep.subr.mxu0 0.0
  %605 = vmatpush1.msra.mxu0 0.0
  %606 = vmatprep.subr.mxu0 0.0
  %607 = vmatpush1.msra.mxu0 0.0
  %608 = vmatprep.subr.mxu0 0.0
  %609 = vmatpush1.msra.mxu0 0.0
  %610 = vmatprep.subr.mxu0 0.0
  %611 = vmatpush1.msra.mxu0 0.0
  %612 = vmatprep.subr.mxu0 0.0
  %613 = vmatpush1.msra.mxu0 0.0
  %614 = vmatprep.subr.mxu0 0.0
  %615 = vmatpush1.msra.mxu0 0.0
  %616 = vmatprep.subr.mxu0 0.0
  %617 = vmatpush1.msra.mxu0 0.0
  %618 = vmatprep.subr.mxu0 0.0
  %619 = vmatpush1.msra.mxu0 0.0
  %620 = vmatprep.mubr.f32.mxu0 0.0
  %621 = vmatmul.mubr.f32.gmra.mrb[0].mxu0 %v551
  %v622 = vpop.f32.mrb[0].mxu0
  %v623 = vadd.f32 0.0, %v622
  %v624 = vpop.f32.mrb[0].mxu0
  %625 = vmatprep.mubr.f32.mxu0 0.0
  %626 = vmatmul.mubr.f32.gmra.mrb[0].mxu0 %v554
  %v627 = vpop.f32.mrb[0].mxu0
  %v628 = vadd.f32 0.0, %v627
  %v629 = vpop.f32.mrb[0].mxu0
  %630 = vdwg.mxu0
  %v631 = vlaneseq
  %v632 = vshrl.u32 %v631, 7
  %v633 = vsub.s32 1, %v632
  %v634 = vrot.slane %v198, %v633
  %639 = vrot.lane.b32.xlu0 %v190, 32
  %v640 = vpop.permute.xlu0 %639
  %641 = vrot.lane.b32.xlu0 %v192, 32
  %v642 = vpop.permute.xlu0 %641
  %643 = vrot.lane.b32.xlu0 %v194, 32
  %v644 = vpop.permute.xlu0 %643
  %645 = vrot.lane.b32.xlu0 %v196, 32
  %v646 = vpop.permute.xlu0 %645
  %v652 = vsel %vm150, %v623, 0
  %v655 = vsel %vm150, %v628, 0
  %657 = vmatprep.subr.mxu0 0.0
  %658 = vmatpush1.msra.mxu0 %v640
  %659 = vmatprep.subr.mxu0 0.0
  %660 = vmatpush1.msra.mxu0 %v642
  %661 = vmatprep.subr.mxu0 0.0
  %662 = vmatpush1.msra.mxu0 %v644
  %663 = vmatprep.subr.mxu0 0.0
  %664 = vmatpush1.msra.mxu0 %v646
  %665 = vmatprep.subr.mxu0 0.0
  %666 = vmatpush1.msra.mxu0 0.0
  %667 = vmatprep.subr.mxu0 0.0
  %668 = vmatpush1.msra.mxu0 0.0
  %669 = vmatprep.subr.mxu0 0.0
  %670 = vmatpush1.msra.mxu0 0.0
  %671 = vmatprep.subr.mxu0 0.0
  %672 = vmatpush1.msra.mxu0 0.0
  %673 = vmatprep.subr.mxu0 0.0
  %674 = vmatpush1.msra.mxu0 0.0
  %675 = vmatprep.subr.mxu0 0.0
  %676 = vmatpush1.msra.mxu0 0.0
  %677 = vmatprep.subr.mxu0 0.0
  %678 = vmatpush1.msra.mxu0 0.0
  %679 = vmatprep.subr.mxu0 0.0
  %680 = vmatpush1.msra.mxu0 0.0
  %681 = vmatprep.subr.mxu0 0.0
  %682 = vmatpush1.msra.mxu0 0.0
  %683 = vmatprep.subr.mxu0 0.0
  %684 = vmatpush1.msra.mxu0 0.0
  %685 = vmatprep.subr.mxu0 0.0
  %686 = vmatpush1.msra.mxu0 0.0
  %687 = vmatprep.subr.mxu0 0.0
  %688 = vmatpush1.msra.mxu0 0.0
  %689 = vmatprep.subr.mxu0 0.0
  %690 = vmatpush1.msra.mxu0 0.0
  %691 = vmatprep.subr.mxu0 0.0
  %692 = vmatpush1.msra.mxu0 0.0
  %693 = vmatprep.subr.mxu0 0.0
  %694 = vmatpush1.msra.mxu0 0.0
  %695 = vmatprep.subr.mxu0 0.0
  %696 = vmatpush1.msra.mxu0 0.0
  %697 = vmatprep.subr.mxu0 0.0
  %698 = vmatpush1.msra.mxu0 0.0
  %699 = vmatprep.subr.mxu0 0.0
  %700 = vmatpush1.msra.mxu0 0.0
  %701 = vmatprep.subr.mxu0 0.0
  %702 = vmatpush1.msra.mxu0 0.0
  %703 = vmatprep.subr.mxu0 0.0
  %704 = vmatpush1.msra.mxu0 0.0
  %705 = vmatprep.subr.mxu0 0.0
  %706 = vmatpush1.msra.mxu0 0.0
  %707 = vmatprep.subr.mxu0 0.0
  %708 = vmatpush1.msra.mxu0 0.0
  %709 = vmatprep.subr.mxu0 0.0
  %710 = vmatpush1.msra.mxu0 0.0
  %711 = vmatprep.subr.mxu0 0.0
  %712 = vmatpush1.msra.mxu0 0.0
  %713 = vmatprep.subr.mxu0 0.0
  %714 = vmatpush1.msra.mxu0 0.0
  %715 = vmatprep.subr.mxu0 0.0
  %716 = vmatpush1.msra.mxu0 0.0
  %717 = vmatprep.subr.mxu0 0.0
  %718 = vmatpush1.msra.mxu0 0.0
  %719 = vmatprep.subr.mxu0 0.0
  %720 = vmatpush1.msra.mxu0 0.0
  %721 = vmatprep.mubr.f32.mxu0 0.0
  %722 = vmatmul.mubr.f32.gmra.mrb[0].mxu0 %v652
  %v723 = vpop.f32.mrb[0].mxu0
  %v724 = vadd.f32 %v634, %v723
  %v725 = vpop.f32.mrb[0].mxu0
  %726 = vmatprep.mubr.f32.mxu0 0.0
  %727 = vmatmul.mubr.f32.gmra.mrb[0].mxu0 %v655
  %v728 = vpop.f32.mrb[0].mxu0
  %v729 = vadd.f32 %v634, %v728
  %v730 = vpop.f32.mrb[0].mxu0
  %731 = vdwg.mxu0
  %v732 = vadd.f32 %v188, %v724
  %v733 = vadd.f32 %v189, %v729
  %v734 = vsel %vm150, %v732, 0.0
  %735 = vadd.xlane.f32.xlu0 %v734
  %v736 = vpop.xlane.xlu0 %735
  %v737 = vsel %vm150, %v733, 0.0
  %738 = vadd.xlane.f32.xlu0 %v737
  %v739 = vpop.xlane.xlu0 %738
  %v740 = vmul.f32 %v736, %v157
  %v741 = vmul.f32 %v739, %v157
  %v742 = vsub.f32 %v732, %v740
  %v743 = vsub.f32 %v733, %v741
  %v744 = vmul.f32 %v742, %v742
  %v745 = vmul.f32 %v743, %v743
  %v746 = vsel %vm150, %v744, 0.0
  %747 = vadd.xlane.f32.xlu0 %v746
  %v748 = vpop.xlane.xlu0 %747
  %v749 = vsel %vm150, %v745, 0.0
  %750 = vadd.xlane.f32.xlu0 %v749
  %v751 = vpop.xlane.xlu0 %750
  %v752 = vmul.f32 %v748, %v157
  %v753 = vmul.f32 %v751, %v157
  %v754 = vadd.f32 %v752, 1e-12
  %v755 = vadd.f32 %v753, 1e-12
  %v756 = vrsqrt.pop %v754
  %v757 = vrsqrt.pop %v755
  %v758 = vmul.f32 %v742, %v756
  %v759 = vmul.f32 %v743, %v757
  %761 = vrot.lane.b32.xlu0 %v634, 96
  %v762 = vpop.permute.xlu0 %761
  %v764 = vmul.f32 %v758, %v762
  %v765 = vmul.f32 %v759, %v762
  %766 = vrot.lane.b32.xlu0 %v634, 64
  %v767 = vpop.permute.xlu0 %766
  %v769 = vadd.f32 %v764, %v767
  %v770 = vadd.f32 %v765, %v767
  %v771 = vlaneseq
  %v772 = vshrl.u32 %v771, 7
  %v773 = vsub.s32 3, %v772
  %v774 = vrot.slane %v198, %v773
  %v776 = vsel %vm150, %v769, 0
  %v779 = vsel %vm150, %v770, 0
  %781 = vmatprep.subr.mxu0 0.0
  %782 = vmatpush1.msra.mxu0 %v191
  %783 = vmatprep.subr.mxu0 0.0
  %784 = vmatpush1.msra.mxu0 %v193
  %785 = vmatprep.subr.mxu0 0.0
  %786 = vmatpush1.msra.mxu0 %v195
  %787 = vmatprep.subr.mxu0 0.0
  %788 = vmatpush1.msra.mxu0 %v197
  %789 = vmatprep.subr.mxu0 0.0
  %790 = vmatpush1.msra.mxu0 0.0
  %791 = vmatprep.subr.mxu0 0.0
  %792 = vmatpush1.msra.mxu0 0.0
  %793 = vmatprep.subr.mxu0 0.0
  %794 = vmatpush1.msra.mxu0 0.0
  %795 = vmatprep.subr.mxu0 0.0
  %796 = vmatpush1.msra.mxu0 0.0
  %797 = vmatprep.subr.mxu0 0.0
  %798 = vmatpush1.msra.mxu0 0.0
  %799 = vmatprep.subr.mxu0 0.0
  %800 = vmatpush1.msra.mxu0 0.0
  %801 = vmatprep.subr.mxu0 0.0
  %802 = vmatpush1.msra.mxu0 0.0
  %803 = vmatprep.subr.mxu0 0.0
  %804 = vmatpush1.msra.mxu0 0.0
  %805 = vmatprep.subr.mxu0 0.0
  %806 = vmatpush1.msra.mxu0 0.0
  %807 = vmatprep.subr.mxu0 0.0
  %808 = vmatpush1.msra.mxu0 0.0
  %809 = vmatprep.subr.mxu0 0.0
  %810 = vmatpush1.msra.mxu0 0.0
  %811 = vmatprep.subr.mxu0 0.0
  %812 = vmatpush1.msra.mxu0 0.0
  %813 = vmatprep.subr.mxu0 0.0
  %814 = vmatpush1.msra.mxu0 0.0
  %815 = vmatprep.subr.mxu0 0.0
  %816 = vmatpush1.msra.mxu0 0.0
  %817 = vmatprep.subr.mxu0 0.0
  %818 = vmatpush1.msra.mxu0 0.0
  %819 = vmatprep.subr.mxu0 0.0
  %820 = vmatpush1.msra.mxu0 0.0
  %821 = vmatprep.subr.mxu0 0.0
  %822 = vmatpush1.msra.mxu0 0.0
  %823 = vmatprep.subr.mxu0 0.0
  %824 = vmatpush1.msra.mxu0 0.0
  %825 = vmatprep.subr.mxu0 0.0
  %826 = vmatpush1.msra.mxu0 0.0
  %827 = vmatprep.subr.mxu0 0.0
  %828 = vmatpush1.msra.mxu0 0.0
  %829 = vmatprep.subr.mxu0 0.0
  %830 = vmatpush1.msra.mxu0 0.0
  %831 = vmatprep.subr.mxu0 0.0
  %832 = vmatpush1.msra.mxu0 0.0
  %833 = vmatprep.subr.mxu0 0.0
  %834 = vmatpush1.msra.mxu0 0.0
  %835 = vmatprep.subr.mxu0 0.0
  %836 = vmatpush1.msra.mxu0 0.0
  %837 = vmatprep.subr.mxu0 0.0
  %838 = vmatpush1.msra.mxu0 0.0
  %839 = vmatprep.subr.mxu0 0.0
  %840 = vmatpush1.msra.mxu0 0.0
  %841 = vmatprep.subr.mxu0 0.0
  %842 = vmatpush1.msra.mxu0 0.0
  %843 = vmatprep.subr.mxu0 0.0
  %844 = vmatpush1.msra.mxu0 0.0
  %845 = vmatprep.mubr.f32.mxu0 0.0
  %846 = vmatmul.mubr.f32.gmra.mrb[0].mxu0 %v776
  %v847 = vpop.f32.mrb[0].mxu0
  %v848 = vadd.f32 %v774, %v847
  %v849 = vpop.f32.mrb[0].mxu0
  %850 = vmatprep.mubr.f32.mxu0 0.0
  %851 = vmatmul.mubr.f32.gmra.mrb[0].mxu0 %v779
  %v852 = vpop.f32.mrb[0].mxu0
  %v853 = vadd.f32 %v774, %v852
  %v854 = vpop.f32.mrb[0].mxu0
  %855 = vdwg.mxu0
  %v856 = vmul.f32 %v848, 0.5
  %v857 = vmul.f32 %v853, 0.5
  %v858 = vmul.f32 %v848, 0.044715
  %v859 = vmul.f32 %v853, 0.044715
  %v860 = vmul.f32 %v858, %v848
  %v861 = vmul.f32 %v859, %v853
  %v862 = vmul.f32 %v860, %v848
  %v863 = vmul.f32 %v861, %v853
  %v864 = vadd.f32 %v848, %v862
  %v865 = vadd.f32 %v853, %v863
  %v866 = vmul.f32 %v864, 0.7978846
  %v867 = vmul.f32 %v865, 0.7978846
  %v868 = vtanh.pop %v866
  %v869 = vtanh.pop %v867
  %v870 = vadd.f32 %v868, 1.0
  %v871 = vadd.f32 %v869, 1.0
  %v872 = vmul.f32 %v856, %v870
  %v873 = vmul.f32 %v857, %v871
  %v874 = vlaneseq
  %v875 = vshrl.u32 %v874, 7
  %v876 = vsub.s32 2, %v875
  %v877 = vrot.slane %v198, %v876
  %vm878 = vcmask 523264
  %v880 = vsel %vm878, %v872, 0
  %v883 = vsel %vm878, %v873, 0
  %885 = vmatprep.subr.mxu0 0.0
  %886 = vmatpush1.msra.mxu0 %v199
  %887 = vmatprep.subr.mxu0 0.0
  %888 = vmatpush1.msra.mxu0 %v200
  %889 = vmatprep.subr.mxu0 0.0
  %890 = vmatpush1.msra.mxu0 %v201
  %891 = vmatprep.subr.mxu0 0.0
  %892 = vmatpush1.msra.mxu0 %v202
  %893 = vmatprep.subr.mxu0 0.0
  %894 = vmatpush1.msra.mxu0 %v203
  %895 = vmatprep.subr.mxu0 0.0
  %896 = vmatpush1.msra.mxu0 %v204
  %897 = vmatprep.subr.mxu0 0.0
  %898 = vmatpush1.msra.mxu0 %v205
  %899 = vmatprep.subr.mxu0 0.0
  %900 = vmatpush1.msra.mxu0 %v206
  %901 = vmatprep.subr.mxu0 0.0
  %902 = vmatpush1.msra.mxu0 0.0
  %903 = vmatprep.subr.mxu0 0.0
  %904 = vmatpush1.msra.mxu0 0.0
  %905 = vmatprep.subr.mxu0 0.0
  %906 = vmatpush1.msra.mxu0 0.0
  %907 = vmatprep.subr.mxu0 0.0
  %908 = vmatpush1.msra.mxu0 0.0
  %909 = vmatprep.subr.mxu0 0.0
  %910 = vmatpush1.msra.mxu0 0.0
  %911 = vmatprep.subr.mxu0 0.0
  %912 = vmatpush1.msra.mxu0 0.0
  %913 = vmatprep.subr.mxu0 0.0
  %914 = vmatpush1.msra.mxu0 0.0
  %915 = vmatprep.subr.mxu0 0.0
  %916 = vmatpush1.msra.mxu0 0.0
  %917 = vmatprep.subr.mxu0 0.0
  %918 = vmatpush1.msra.mxu0 0.0
  %919 = vmatprep.subr.mxu0 0.0
  %920 = vmatpush1.msra.mxu0 0.0
  %921 = vmatprep.subr.mxu0 0.0
  %922 = vmatpush1.msra.mxu0 0.0
  %923 = vmatprep.subr.mxu0 0.0
  %924 = vmatpush1.msra.mxu0 0.0
  %925 = vmatprep.subr.mxu0 0.0
  %926 = vmatpush1.msra.mxu0 0.0
  %927 = vmatprep.subr.mxu0 0.0
  %928 = vmatpush1.msra.mxu0 0.0
  %929 = vmatprep.subr.mxu0 0.0
  %930 = vmatpush1.msra.mxu0 0.0
  %931 = vmatprep.subr.mxu0 0.0
  %932 = vmatpush1.msra.mxu0 0.0
  %933 = vmatprep.subr.mxu0 0.0
  %934 = vmatpush1.msra.mxu0 0.0
  %935 = vmatprep.subr.mxu0 0.0
  %936 = vmatpush1.msra.mxu0 0.0
  %937 = vmatprep.subr.mxu0 0.0
  %938 = vmatpush1.msra.mxu0 0.0
  %939 = vmatprep.subr.mxu0 0.0
  %940 = vmatpush1.msra.mxu0 0.0
  %941 = vmatprep.subr.mxu0 0.0
  %942 = vmatpush1.msra.mxu0 0.0
  %943 = vmatprep.subr.mxu0 0.0
  %944 = vmatpush1.msra.mxu0 0.0
  %945 = vmatprep.subr.mxu0 0.0
  %946 = vmatpush1.msra.mxu0 0.0
  %947 = vmatprep.subr.mxu0 0.0
  %948 = vmatpush1.msra.mxu0 0.0
  %949 = vmatprep.mubr.f32.mxu0 0.0
  %950 = vmatmul.mubr.f32.gmra.mrb[0].mxu0 %v880
  %v951 = vpop.f32.mrb[0].mxu0
  %v952 = vadd.f32 %v877, %v951
  %v953 = vpop.f32.mrb[0].mxu0
  %954 = vmatprep.mubr.f32.mxu0 0.0
  %955 = vmatmul.mubr.f32.gmra.mrb[0].mxu0 %v883
  %v956 = vpop.f32.mrb[0].mxu0
  %v957 = vadd.f32 %v877, %v956
  %v958 = vpop.f32.mrb[0].mxu0
  %959 = vdwg.mxu0
  %v960 = vadd.f32 %v769, %v952
  %v961 = vadd.f32 %v770, %v957
  %v962 = vsel %vm150, %v960, 0.0
  %963 = vadd.xlane.f32.xlu0 %v962
  %v964 = vpop.xlane.xlu0 %963
  %v965 = vsel %vm150, %v961, 0.0
  %966 = vadd.xlane.f32.xlu0 %v965
  %v967 = vpop.xlane.xlu0 %966
  %v968 = vmul.f32 %v964, %v157
  %v969 = vmul.f32 %v967, %v157
  %v970 = vsub.f32 %v960, %v968
  %v971 = vsub.f32 %v961, %v969
  %v972 = vmul.f32 %v970, %v970
  %v973 = vmul.f32 %v971, %v971
  %v974 = vsel %vm150, %v972, 0.0
  %975 = vadd.xlane.f32.xlu0 %v974
  %v976 = vpop.xlane.xlu0 %975
  %v977 = vsel %vm150, %v973, 0.0
  %978 = vadd.xlane.f32.xlu0 %v977
  %v979 = vpop.xlane.xlu0 %978
  %v980 = vmul.f32 %v976, %v157
  %v981 = vmul.f32 %v979, %v157
  %v982 = vadd.f32 %v980, 1e-12
  %v983 = vadd.f32 %v981, 1e-12
  %v984 = vrsqrt.pop %v982
  %v985 = vrsqrt.pop %v983
  %v986 = vmul.f32 %v970, %v984
  %v987 = vmul.f32 %v971, %v985
  %989 = vrot.lane.b32.xlu0 %v877, 96
  %v990 = vpop.permute.xlu0 %989
  %v992 = vmul.f32 %v986, %v990
  %v993 = vmul.f32 %v987, %v990
  %994 = vrot.lane.b32.xlu0 %v877, 64
  %v995 = vpop.permute.xlu0 %994
  %v997 = vadd.f32 %v992, %v995
  %v998 = vadd.f32 %v993, %v995
  %s999 = scalar_lea.vmem %s1, 80
  %v1000 = vld [vmem:[%s999] sm:$0xff]
  %v1001 = vld [vmem:[%s999 + $0x8] sm:$0xff]
  %v1002 = vld [vmem:[%s999 + $0x10] sm:$0xff]
  %v1003 = vld [vmem:[%s999 + $0x18] sm:$0xff]
  %v1004 = vld [vmem:[%s999 + $0x20] sm:$0xff]
  %v1005 = vld [vmem:[%s999 + $0x28] sm:$0xff]
  %v1006 = vld [vmem:[%s999 + $0x30] sm:$0xff]
  %v1007 = vld [vmem:[%s999 + $0x38] sm:$0xff]
  %v1008 = vld [vmem:[%s999 + $0x40] sm:$0xf]
  %s1009 = scalar_lea.vmem %s2, 64
  %v1010 = vld [vmem:[%s1009] sm:$0xff]
  %v1011 = vld [vmem:[%s1009 + $0x8] sm:$0xff]
  %v1012 = vld [vmem:[%s1009 + $0x10] sm:$0xff]
  %v1013 = vld [vmem:[%s1009 + $0x18] sm:$0xff]
  %v1014 = vld [vmem:[%s1009 + $0x20] sm:$0xff]
  %v1015 = vld [vmem:[%s1009 + $0x28] sm:$0xff]
  %v1016 = vld [vmem:[%s1009 + $0x30] sm:$0xff]
  %v1017 = vld [vmem:[%s1009 + $0x38] sm:$0xff]
  %v1018 = vlaneseq
  %v1019 = vshrl.u32 %v1018, 7
  %v1020 = vsub.s32 0, %v1019
  %v1021 = vrot.slane %v1008, %v1020
  %v1023 = vsel %vm150, %v997, 0
  %v1026 = vsel %vm150, %v998, 0
  %1028 = vmatprep.subr.mxu0 0.0
  %1029 = vmatpush1.msra.mxu0 %v1000
  %1030 = vmatprep.subr.mxu0 0.0
  %1031 = vmatpush1.msra.mxu0 %v1002
  %1032 = vmatprep.subr.mxu0 0.0
  %1033 = vmatpush1.msra.mxu0 %v1004
  %1034 = vmatprep.subr.mxu0 0.0
  %1035 = vmatpush1.msra.mxu0 %v1006
  %1036 = vmatprep.subr.mxu0 0.0
  %1037 = vmatpush1.msra.mxu0 0.0
  %1038 = vmatprep.subr.mxu0 0.0
  %1039 = vmatpush1.msra.mxu0 0.0
  %1040 = vmatprep.subr.mxu0 0.0
  %1041 = vmatpush1.msra.mxu0 0.0
  %1042 = vmatprep.subr.mxu0 0.0
  %1043 = vmatpush1.msra.mxu0 0.0
  %1044 = vmatprep.subr.mxu0 0.0
  %1045 = vmatpush1.msra.mxu0 0.0
  %1046 = vmatprep.subr.mxu0 0.0
  %1047 = vmatpush1.msra.mxu0 0.0
  %1048 = vmatprep.subr.mxu0 0.0
  %1049 = vmatpush1.msra.mxu0 0.0
  %1050 = vmatprep.subr.mxu0 0.0
  %1051 = vmatpush1.msra.mxu0 0.0
  %1052 = vmatprep.subr.mxu0 0.0
  %1053 = vmatpush1.msra.mxu0 0.0
  %1054 = vmatprep.subr.mxu0 0.0
  %1055 = vmatpush1.msra.mxu0 0.0
  %1056 = vmatprep.subr.mxu0 0.0
  %1057 = vmatpush1.msra.mxu0 0.0
  %1058 = vmatprep.subr.mxu0 0.0
  %1059 = vmatpush1.msra.mxu0 0.0
  %1060 = vmatprep.subr.mxu0 0.0
  %1061 = vmatpush1.msra.mxu0 0.0
  %1062 = vmatprep.subr.mxu0 0.0
  %1063 = vmatpush1.msra.mxu0 0.0
  %1064 = vmatprep.subr.mxu0 0.0
  %1065 = vmatpush1.msra.mxu0 0.0
  %1066 = vmatprep.subr.mxu0 0.0
  %1067 = vmatpush1.msra.mxu0 0.0
  %1068 = vmatprep.subr.mxu0 0.0
  %1069 = vmatpush1.msra.mxu0 0.0
  %1070 = vmatprep.subr.mxu0 0.0
  %1071 = vmatpush1.msra.mxu0 0.0
  %1072 = vmatprep.subr.mxu0 0.0
  %1073 = vmatpush1.msra.mxu0 0.0
  %1074 = vmatprep.subr.mxu0 0.0
  %1075 = vmatpush1.msra.mxu0 0.0
  %1076 = vmatprep.subr.mxu0 0.0
  %1077 = vmatpush1.msra.mxu0 0.0
  %1078 = vmatprep.subr.mxu0 0.0
  %1079 = vmatpush1.msra.mxu0 0.0
  %1080 = vmatprep.subr.mxu0 0.0
  %1081 = vmatpush1.msra.mxu0 0.0
  %1082 = vmatprep.subr.mxu0 0.0
  %1083 = vmatpush1.msra.mxu0 0.0
  %1084 = vmatprep.subr.mxu0 0.0
  %1085 = vmatpush1.msra.mxu0 0.0
  %1086 = vmatprep.subr.mxu0 0.0
  %1087 = vmatpush1.msra.mxu0 0.0
  %1088 = vmatprep.subr.mxu0 0.0
  %1089 = vmatpush1.msra.mxu0 0.0
  %1090 = vmatprep.subr.mxu0 0.0
  %1091 = vmatpush1.msra.mxu0 0.0
  %1092 = vmatprep.mubr.f32.mxu0 0.0
  %1093 = vmatmul.mubr.f32.gmra.mrb[0].mxu0 %v1023
  %v1094 = vpop.f32.mrb[0].mxu0
  %v1095 = vadd.f32 %v1021, %v1094
  %v1096 = vpop.f32.mrb[0].mxu0
  %1097 = vmatprep.mubr.f32.mxu0 0.0
  %1098 = vmatmul.mubr.f32.gmra.mrb[0].mxu0 %v1026
  %v1099 = vpop.f32.mrb[0].mxu0
  %v1100 = vadd.f32 %v1021, %v1099
  %v1101 = vpop.f32.mrb[0].mxu0
  %1102 = vdwg.mxu0
  %v1103 = vmul.f32 %v1095, %v297
  %v1104 = vmul.f32 %v1100, %v299
  %v1105 = vmul.f32 %v1095, %v301
  %v1106 = vmul.f32 %v1100, %v303
  %v1107 = vmul.f32 %v1095, %v313
  %v1108 = vmul.f32 %v1100, %v315
  %v1109 = vmul.f32 %v1095, %v317
  %v1110 = vmul.f32 %v1100, %v319
  %1115 = vrot.lane.b32.xlu0 %v1103, 96
  %v1116 = vpop.permute.xlu0 %1115
  %1117 = vrot.lane.b32.xlu0 %v1104, 96
  %v1118 = vpop.permute.xlu0 %1117
  %1119 = vrot.lane.b32.xlu0 %v1105, 96
  %v1120 = vpop.permute.xlu0 %1119
  %1121 = vrot.lane.b32.xlu0 %v1106, 96
  %v1122 = vpop.permute.xlu0 %1121
  %v1124 = vsel %vm150, %v1095, 0
  %v1127 = vsel %vm150, %v1100, 0
  %v1129 = vsel %vm150, %v1116, 0
  %v1131 = vsel %vm150, %v1118, 0
  %v1133 = vsel %vm150, %v1120, 0
  %v1135 = vsel %vm150, %v1122, 0
  %1137 = vmatprep.subr.mxu0 0.0
  %1138 = vmatpush1.xpose.msra.mxu0 %v1129
  %1139 = vmatprep.subr.mxu0 0.0
  %1140 = vmatpush1.xpose.msra.mxu0 %v1131
  %1141 = vmatprep.subr.mxu0 0.0
  %1142 = vmatpush1.xpose.msra.mxu0 %v1133
  %1143 = vmatprep.subr.mxu0 0.0
  %1144 = vmatpush1.xpose.msra.mxu0 %v1135
  %1145 = vmatprep.subr.mxu0 0.0
  %1146 = vmatpush1.xpose.msra.mxu0 0.0
  %1147 = vmatprep.subr.mxu0 0.0
  %1148 = vmatpush1.xpose.msra.mxu0 0.0
  %1149 = vmatprep.subr.mxu0 0.0
  %1150 = vmatpush1.xpose.msra.mxu0 0.0
  %1151 = vmatprep.subr.mxu0 0.0
  %1152 = vmatpush1.xpose.msra.mxu0 0.0
  %1153 = vmatprep.subr.mxu0 0.0
  %1154 = vmatpush1.xpose.msra.mxu0 0.0
  %1155 = vmatprep.subr.mxu0 0.0
  %1156 = vmatpush1.xpose.msra.mxu0 0.0
  %1157 = vmatprep.subr.mxu0 0.0
  %1158 = vmatpush1.xpose.msra.mxu0 0.0
  %1159 = vmatprep.subr.mxu0 0.0
  %1160 = vmatpush1.xpose.msra.mxu0 0.0
  %1161 = vmatprep.subr.mxu0 0.0
  %1162 = vmatpush1.xpose.msra.mxu0 0.0
  %1163 = vmatprep.subr.mxu0 0.0
  %1164 = vmatpush1.xpose.msra.mxu0 0.0
  %1165 = vmatprep.subr.mxu0 0.0
  %1166 = vmatpush1.xpose.msra.mxu0 0.0
  %1167 = vmatprep.subr.mxu0 0.0
  %1168 = vmatpush1.xpose.msra.mxu0 0.0
  %1169 = vmatprep.subr.mxu0 0.0
  %1170 = vmatpush1.xpose.msra.mxu0 0.0
  %1171 = vmatprep.subr.mxu0 0.0
  %1172 = vmatpush1.xpose.msra.mxu0 0.0
  %1173 = vmatprep.subr.mxu0 0.0
  %1174 = vmatpush1.xpose.msra.mxu0 0.0
  %1175 = vmatprep.subr.mxu0 0.0
  %1176 = vmatpush1.xpose.msra.mxu0 0.0
  %1177 = vmatprep.subr.mxu0 0.0
  %1178 = vmatpush1.xpose.msra.mxu0 0.0
  %1179 = vmatprep.subr.mxu0 0.0
  %1180 = vmatpush1.xpose.msra.mxu0 0.0
  %1181 = vmatprep.subr.mxu0 0.0
  %1182 = vmatpush1.xpose.msra.mxu0 0.0
  %1183 = vmatprep.subr.mxu0 0.0
  %1184 = vmatpush1.xpose.msra.mxu0 0.0
  %1185 = vmatprep.subr.mxu0 0.0
  %1186 = vmatpush1.xpose.msra.mxu0 0.0
  %1187 = vmatprep.subr.mxu0 0.0
  %1188 = vmatpush1.xpose.msra.mxu0 0.0
  %1189 = vmatprep.subr.mxu0 0.0
  %1190 = vmatpush1.xpose.msra.mxu0 0.0
  %1191 = vmatprep.subr.mxu0 0.0
  %1192 = vmatpush1.xpose.msra.mxu0 0.0
  %1193 = vmatprep.subr.mxu0 0.0
  %1194 = vmatpush1.xpose.msra.mxu0 0.0
  %1195 = vmatprep.subr.mxu0 0.0
  %1196 = vmatpush1.xpose.msra.mxu0 0.0
  %1197 = vmatprep.subr.mxu0 0.0
  %1198 = vmatpush1.xpose.msra.mxu0 0.0
  %1199 = vmatprep.subr.mxu0 0.0
  %1200 = vmatpush1.xpose.msra.mxu0 0.0
  %1201 = vmatprep.mubr.f32.mxu0 0.0
  %1202 = vmatmul.mubr.f32.gmra.mrb[0].mxu0 %v1124
  %v1203 = vpop.f32.mrb[0].mxu0
  %v1204 = vadd.f32 %v343, %v1203
  %v1205 = vpop.f32.mrb[0].mxu0
  %1206 = vmatprep.mubr.f32.mxu0 0.0
  %1207 = vmatmul.mubr.f32.gmra.mrb[0].mxu0 %v1127
  %v1208 = vpop.f32.mrb[0].mxu0
  %v1209 = vadd.f32 %v345, %v1208
  %v1210 = vpop.f32.mrb[0].mxu0
  %1211 = vdwg.mxu0
  %v1212 = vsel %vm150, %v1204, -inf
  %1213 = vmax.xlane.f32.xlu0 %v1212
  %v1214 = vpop.xlane.xlu0 %1213
  %v1215 = vsel %vm150, %v1209, -inf
  %1216 = vmax.xlane.f32.xlu0 %v1215
  %v1217 = vpop.xlane.xlu0 %1216
  %v1218 = vsub.f32 %v1204, %v1214
  %v1219 = vsub.f32 %v1209, %v1217
  %v1220 = vmul.f32 %v1218, 1.442695
  %v1221 = vpow.pop %v1220
  %v1222 = vmul.f32 %v1219, 1.442695
  %v1223 = vpow.pop %v1222
  %v1225 = vsel %vm150, %v1221, 0
  %v1228 = vsel %vm150, %v1223, 0
  %1230 = vmatprep.subr.mxu0 0.0
  %1231 = vmatpush1.msra.mxu0 %v65
  %1232 = vmatprep.subr.mxu0 0.0
  %1233 = vmatpush1.msra.mxu0 %v66
  %1234 = vmatprep.subr.mxu0 0.0
  %1235 = vmatpush1.msra.mxu0 %v67
  %1236 = vmatprep.subr.mxu0 0.0
  %1237 = vmatpush1.msra.mxu0 %v68
  %1238 = vmatprep.subr.mxu0 0.0
  %1239 = vmatpush1.msra.mxu0 0.0
  %1240 = vmatprep.subr.mxu0 0.0
  %1241 = vmatpush1.msra.mxu0 0.0
  %1242 = vmatprep.subr.mxu0 0.0
  %1243 = vmatpush1.msra.mxu0 0.0
  %1244 = vmatprep.subr.mxu0 0.0
  %1245 = vmatpush1.msra.mxu0 0.0
  %1246 = vmatprep.subr.mxu0 0.0
  %1247 = vmatpush1.msra.mxu0 0.0
  %1248 = vmatprep.subr.mxu0 0.0
  %1249 = vmatpush1.msra.mxu0 0.0
  %1250 = vmatprep.subr.mxu0 0.0
  %1251 = vmatpush1.msra.mxu0 0.0
  %1252 = vmatprep.subr.mxu0 0.0
  %1253 = vmatpush1.msra.mxu0 0.0
  %1254 = vmatprep.subr.mxu0 0.0
  %1255 = vmatpush1.msra.mxu0 0.0
  %1256 = vmatprep.subr.mxu0 0.0
  %1257 = vmatpush1.msra.mxu0 0.0
  %1258 = vmatprep.subr.mxu0 0.0
  %1259 = vmatpush1.msra.mxu0 0.0
  %1260 = vmatprep.subr.mxu0 0.0
  %1261 = vmatpush1.msra.mxu0 0.0
  %1262 = vmatprep.subr.mxu0 0.0
  %1263 = vmatpush1.msra.mxu0 0.0
  %1264 = vmatprep.subr.mxu0 0.0
  %1265 = vmatpush1.msra.mxu0 0.0
  %1266 = vmatprep.subr.mxu0 0.0
  %1267 = vmatpush1.msra.mxu0 0.0
  %1268 = vmatprep.subr.mxu0 0.0
  %1269 = vmatpush1.msra.mxu0 0.0
  %1270 = vmatprep.subr.mxu0 0.0
  %1271 = vmatpush1.msra.mxu0 0.0
  %1272 = vmatprep.subr.mxu0 0.0
  %1273 = vmatpush1.msra.mxu0 0.0
  %1274 = vmatprep.subr.mxu0 0.0
  %1275 = vmatpush1.msra.mxu0 0.0
  %1276 = vmatprep.subr.mxu0 0.0
  %1277 = vmatpush1.msra.mxu0 0.0
  %1278 = vmatprep.subr.mxu0 0.0
  %1279 = vmatpush1.msra.mxu0 0.0
  %1280 = vmatprep.subr.mxu0 0.0
  %1281 = vmatpush1.msra.mxu0 0.0
  %1282 = vmatprep.subr.mxu0 0.0
  %1283 = vmatpush1.msra.mxu0 0.0
  %1284 = vmatprep.subr.mxu0 0.0
  %1285 = vmatpush1.msra.mxu0 0.0
  %1286 = vmatprep.subr.mxu0 0.0
  %1287 = vmatpush1.msra.mxu0 0.0
  %1288 = vmatprep.subr.mxu0 0.0
  %1289 = vmatpush1.msra.mxu0 0.0
  %1290 = vmatprep.subr.mxu0 0.0
  %1291 = vmatpush1.msra.mxu0 0.0
  %1292 = vmatprep.subr.mxu0 0.0
  %1293 = vmatpush1.msra.mxu0 0.0
  %1294 = vmatprep.mubr.f32.mxu0 0.0
  %1295 = vmatmul.mubr.f32.gmra.mrb[0].mxu0 %v1225
  %v1296 = vpop.f32.mrb[0].mxu0
  %v1297 = vadd.f32 0.0, %v1296
  %v1298 = vpop.f32.mrb[0].mxu0
  %1299 = vmatprep.mubr.f32.mxu0 0.0
  %1300 = vmatmul.mubr.f32.gmra.mrb[0].mxu0 %v1228
  %v1301 = vpop.f32.mrb[0].mxu0
  %v1302 = vadd.f32 0.0, %v1301
  %v1303 = vpop.f32.mrb[0].mxu0
  %1304 = vdwg.mxu0
  %v1305 = vrcp.pop %v1297
  %v1306 = vrcp.pop %v1302
  %v1307 = vmul.f32 %v1221, %v1305
  %v1308 = vmul.f32 %v1223, %v1306
  %1313 = vrot.lane.b32.xlu0 %v1107, 64
  %v1314 = vpop.permute.xlu0 %1313
  %1315 = vrot.lane.b32.xlu0 %v1108, 64
  %v1316 = vpop.permute.xlu0 %1315
  %1317 = vrot.lane.b32.xlu0 %v1109, 64
  %v1318 = vpop.permute.xlu0 %1317
  %1319 = vrot.lane.b32.xlu0 %v1110, 64
  %v1320 = vpop.permute.xlu0 %1319
  %v1326 = vsel %vm150, %v1307, 0
  %v1329 = vsel %vm150, %v1308, 0
  %1331 = vmatprep.subr.mxu0 0.0
  %1332 = vmatpush1.msra.mxu0 %v1314
  %1333 = vmatprep.subr.mxu0 0.0
  %1334 = vmatpush1.msra.mxu0 %v1316
  %1335 = vmatprep.subr.mxu0 0.0
  %1336 = vmatpush1.msra.mxu0 %v1318
  %1337 = vmatprep.subr.mxu0 0.0
  %1338 = vmatpush1.msra.mxu0 %v1320
  %1339 = vmatprep.subr.mxu0 0.0
  %1340 = vmatpush1.msra.mxu0 0.0
  %1341 = vmatprep.subr.mxu0 0.0
  %1342 = vmatpush1.msra.mxu0 0.0
  %1343 = vmatprep.subr.mxu0 0.0
  %1344 = vmatpush1.msra.mxu0 0.0
  %1345 = vmatprep.subr.mxu0 0.0
  %1346 = vmatpush1.msra.mxu0 0.0
  %1347 = vmatprep.subr.mxu0 0.0
  %1348 = vmatpush1.msra.mxu0 0.0
  %1349 = vmatprep.subr.mxu0 0.0
  %1350 = vmatpush1.msra.mxu0 0.0
  %1351 = vmatprep.subr.mxu0 0.0
  %1352 = vmatpush1.msra.mxu0 0.0
  %1353 = vmatprep.subr.mxu0 0.0
  %1354 = vmatpush1.msra.mxu0 0.0
  %1355 = vmatprep.subr.mxu0 0.0
  %1356 = vmatpush1.msra.mxu0 0.0
  %1357 = vmatprep.subr.mxu0 0.0
  %1358 = vmatpush1.msra.mxu0 0.0
  %1359 = vmatprep.subr.mxu0 0.0
  %1360 = vmatpush1.msra.mxu0 0.0
  %1361 = vmatprep.subr.mxu0 0.0
  %1362 = vmatpush1.msra.mxu0 0.0
  %1363 = vmatprep.subr.mxu0 0.0
  %1364 = vmatpush1.msra.mxu0 0.0
  %1365 = vmatprep.subr.mxu0 0.0
  %1366 = vmatpush1.msra.mxu0 0.0
  %1367 = vmatprep.subr.mxu0 0.0
  %1368 = vmatpush1.msra.mxu0 0.0
  %1369 = vmatprep.subr.mxu0 0.0
  %1370 = vmatpush1.msra.mxu0 0.0
  %1371 = vmatprep.subr.mxu0 0.0
  %1372 = vmatpush1.msra.mxu0 0.0
  %1373 = vmatprep.subr.mxu0 0.0
  %1374 = vmatpush1.msra.mxu0 0.0
  %1375 = vmatprep.subr.mxu0 0.0
  %1376 = vmatpush1.msra.mxu0 0.0
  %1377 = vmatprep.subr.mxu0 0.0
  %1378 = vmatpush1.msra.mxu0 0.0
  %1379 = vmatprep.subr.mxu0 0.0
  %1380 = vmatpush1.msra.mxu0 0.0
  %1381 = vmatprep.subr.mxu0 0.0
  %1382 = vmatpush1.msra.mxu0 0.0
  %1383 = vmatprep.subr.mxu0 0.0
  %1384 = vmatpush1.msra.mxu0 0.0
  %1385 = vmatprep.subr.mxu0 0.0
  %1386 = vmatpush1.msra.mxu0 0.0
  %1387 = vmatprep.subr.mxu0 0.0
  %1388 = vmatpush1.msra.mxu0 0.0
  %1389 = vmatprep.subr.mxu0 0.0
  %1390 = vmatpush1.msra.mxu0 0.0
  %1391 = vmatprep.subr.mxu0 0.0
  %1392 = vmatpush1.msra.mxu0 0.0
  %1393 = vmatprep.subr.mxu0 0.0
  %1394 = vmatpush1.msra.mxu0 0.0
  %1395 = vmatprep.mubr.f32.mxu0 0.0
  %1396 = vmatmul.mubr.f32.gmra.mrb[0].mxu0 %v1326
  %v1397 = vpop.f32.mrb[0].mxu0
  %v1398 = vadd.f32 0.0, %v1397
  %v1399 = vpop.f32.mrb[0].mxu0
  %1400 = vmatprep.mubr.f32.mxu0 0.0
  %1401 = vmatmul.mubr.f32.gmra.mrb[0].mxu0 %v1329
  %v1402 = vpop.f32.mrb[0].mxu0
  %v1403 = vadd.f32 0.0, %v1402
  %v1404 = vpop.f32.mrb[0].mxu0
  %1405 = vdwg.mxu0
  %v1406 = vlaneseq
  %v1407 = vshrl.u32 %v1406, 7
  %v1408 = vsub.s32 1, %v1407
  %v1409 = vrot.slane %v1008, %v1408
  %1414 = vrot.lane.b32.xlu0 %v1000, 32
  %v1415 = vpop.permute.xlu0 %1414
  %1416 = vrot.lane.b32.xlu0 %v1002, 32
  %v1417 = vpop.permute.xlu0 %1416
  %1418 = vrot.lane.b32.xlu0 %v1004, 32
  %v1419 = vpop.permute.xlu0 %1418
  %1420 = vrot.lane.b32.xlu0 %v1006, 32
  %v1421 = vpop.permute.xlu0 %1420
  %v1427 = vsel %vm150, %v1398, 0
  %v1430 = vsel %vm150, %v1403, 0
  %1432 = vmatprep.subr.mxu0 0.0
  %1433 = vmatpush1.msra.mxu0 %v1415
  %1434 = vmatprep.subr.mxu0 0.0
  %1435 = vmatpush1.msra.mxu0 %v1417
  %1436 = vmatprep.subr.mxu0 0.0
  %1437 = vmatpush1.msra.mxu0 %v1419
  %1438 = vmatprep.subr.mxu0 0.0
  %1439 = vmatpush1.msra.mxu0 %v1421
  %1440 = vmatprep.subr.mxu0 0.0
  %1441 = vmatpush1.msra.mxu0 0.0
  %1442 = vmatprep.subr.mxu0 0.0
  %1443 = vmatpush1.msra.mxu0 0.0
  %1444 = vmatprep.subr.mxu0 0.0
  %1445 = vmatpush1.msra.mxu0 0.0
  %1446 = vmatprep.subr.mxu0 0.0
  %1447 = vmatpush1.msra.mxu0 0.0
  %1448 = vmatprep.subr.mxu0 0.0
  %1449 = vmatpush1.msra.mxu0 0.0
  %1450 = vmatprep.subr.mxu0 0.0
  %1451 = vmatpush1.msra.mxu0 0.0
  %1452 = vmatprep.subr.mxu0 0.0
  %1453 = vmatpush1.msra.mxu0 0.0
  %1454 = vmatprep.subr.mxu0 0.0
  %1455 = vmatpush1.msra.mxu0 0.0
  %1456 = vmatprep.subr.mxu0 0.0
  %1457 = vmatpush1.msra.mxu0 0.0
  %1458 = vmatprep.subr.mxu0 0.0
  %1459 = vmatpush1.msra.mxu0 0.0
  %1460 = vmatprep.subr.mxu0 0.0
  %1461 = vmatpush1.msra.mxu0 0.0
  %1462 = vmatprep.subr.mxu0 0.0
  %1463 = vmatpush1.msra.mxu0 0.0
  %1464 = vmatprep.subr.mxu0 0.0
  %1465 = vmatpush1.msra.mxu0 0.0
  %1466 = vmatprep.subr.mxu0 0.0
  %1467 = vmatpush1.msra.mxu0 0.0
  %1468 = vmatprep.subr.mxu0 0.0
  %1469 = vmatpush1.msra.mxu0 0.0
  %1470 = vmatprep.subr.mxu0 0.0
  %1471 = vmatpush1.msra.mxu0 0.0
  %1472 = vmatprep.subr.mxu0 0.0
  %1473 = vmatpush1.msra.mxu0 0.0
  %1474 = vmatprep.subr.mxu0 0.0
  %1475 = vmatpush1.msra.mxu0 0.0
  %1476 = vmatprep.subr.mxu0 0.0
  %1477 = vmatpush1.msra.mxu0 0.0
  %1478 = vmatprep.subr.mxu0 0.0
  %1479 = vmatpush1.msra.mxu0 0.0
  %1480 = vmatprep.subr.mxu0 0.0
  %1481 = vmatpush1.msra.mxu0 0.0
  %1482 = vmatprep.subr.mxu0 0.0
  %1483 = vmatpush1.msra.mxu0 0.0
  %1484 = vmatprep.subr.mxu0 0.0
  %1485 = vmatpush1.msra.mxu0 0.0
  %1486 = vmatprep.subr.mxu0 0.0
  %1487 = vmatpush1.msra.mxu0 0.0
  %1488 = vmatprep.subr.mxu0 0.0
  %1489 = vmatpush1.msra.mxu0 0.0
  %1490 = vmatprep.subr.mxu0 0.0
  %1491 = vmatpush1.msra.mxu0 0.0
  %1492 = vmatprep.subr.mxu0 0.0
  %1493 = vmatpush1.msra.mxu0 0.0
  %1494 = vmatprep.subr.mxu0 0.0
  %1495 = vmatpush1.msra.mxu0 0.0
  %1496 = vmatprep.mubr.f32.mxu0 0.0
  %1497 = vmatmul.mubr.f32.gmra.mrb[0].mxu0 %v1427
  %v1498 = vpop.f32.mrb[0].mxu0
  %v1499 = vadd.f32 %v1409, %v1498
  %v1500 = vpop.f32.mrb[0].mxu0
  %1501 = vmatprep.mubr.f32.mxu0 0.0
  %1502 = vmatmul.mubr.f32.gmra.mrb[0].mxu0 %v1430
  %v1503 = vpop.f32.mrb[0].mxu0
  %v1504 = vadd.f32 %v1409, %v1503
  %v1505 = vpop.f32.mrb[0].mxu0
  %1506 = vdwg.mxu0
  %v1507 = vadd.f32 %v997, %v1499
  %v1508 = vadd.f32 %v998, %v1504
  %v1509 = vsel %vm150, %v1507, 0.0
  %1510 = vadd.xlane.f32.xlu0 %v1509
  %v1511 = vpop.xlane.xlu0 %1510
  %v1512 = vsel %vm150, %v1508, 0.0
  %1513 = vadd.xlane.f32.xlu0 %v1512
  %v1514 = vpop.xlane.xlu0 %1513
  %v1515 = vmul.f32 %v1511, %v157
  %v1516 = vmul.f32 %v1514, %v157
  %v1517 = vsub.f32 %v1507, %v1515
  %v1518 = vsub.f32 %v1508, %v1516
  %v1519 = vmul.f32 %v1517, %v1517
  %v1520 = vmul.f32 %v1518, %v1518
  %v1521 = vsel %vm150, %v1519, 0.0
  %1522 = vadd.xlane.f32.xlu0 %v1521
  %v1523 = vpop.xlane.xlu0 %1522
  %v1524 = vsel %vm150, %v1520, 0.0
  %1525 = vadd.xlane.f32.xlu0 %v1524
  %v1526 = vpop.xlane.xlu0 %1525
  %v1527 = vmul.f32 %v1523, %v157
  %v1528 = vmul.f32 %v1526, %v157
  %v1529 = vadd.f32 %v1527, 1e-12
  %v1530 = vadd.f32 %v1528, 1e-12
  %v1531 = vrsqrt.pop %v1529
  %v1532 = vrsqrt.pop %v1530
  %v1533 = vmul.f32 %v1517, %v1531
  %v1534 = vmul.f32 %v1518, %v1532
  %1536 = vrot.lane.b32.xlu0 %v1409, 96
  %v1537 = vpop.permute.xlu0 %1536
  %v1539 = vmul.f32 %v1533, %v1537
  %v1540 = vmul.f32 %v1534, %v1537
  %1541 = vrot.lane.b32.xlu0 %v1409, 64
  %v1542 = vpop.permute.xlu0 %1541
  %v1544 = vadd.f32 %v1539, %v1542
  %v1545 = vadd.f32 %v1540, %v1542
  %v1546 = vlaneseq
  %v1547 = vshrl.u32 %v1546, 7
  %v1548 = vsub.s32 3, %v1547
  %v1549 = vrot.slane %v1008, %v1548
  %v1551 = vsel %vm150, %v1544, 0
  %v1554 = vsel %vm150, %v1545, 0
  %1556 = vmatprep.subr.mxu0 0.0
  %1557 = vmatpush1.msra.mxu0 %v1001
  %1558 = vmatprep.subr.mxu0 0.0
  %1559 = vmatpush1.msra.mxu0 %v1003
  %1560 = vmatprep.subr.mxu0 0.0
  %1561 = vmatpush1.msra.mxu0 %v1005
  %1562 = vmatprep.subr.mxu0 0.0
  %1563 = vmatpush1.msra.mxu0 %v1007
  %1564 = vmatprep.subr.mxu0 0.0
  %1565 = vmatpush1.msra.mxu0 0.0
  %1566 = vmatprep.subr.mxu0 0.0
  %1567 = vmatpush1.msra.mxu0 0.0
  %1568 = vmatprep.subr.mxu0 0.0
  %1569 = vmatpush1.msra.mxu0 0.0
  %1570 = vmatprep.subr.mxu0 0.0
  %1571 = vmatpush1.msra.mxu0 0.0
  %1572 = vmatprep.subr.mxu0 0.0
  %1573 = vmatpush1.msra.mxu0 0.0
  %1574 = vmatprep.subr.mxu0 0.0
  %1575 = vmatpush1.msra.mxu0 0.0
  %1576 = vmatprep.subr.mxu0 0.0
  %1577 = vmatpush1.msra.mxu0 0.0
  %1578 = vmatprep.subr.mxu0 0.0
  %1579 = vmatpush1.msra.mxu0 0.0
  %1580 = vmatprep.subr.mxu0 0.0
  %1581 = vmatpush1.msra.mxu0 0.0
  %1582 = vmatprep.subr.mxu0 0.0
  %1583 = vmatpush1.msra.mxu0 0.0
  %1584 = vmatprep.subr.mxu0 0.0
  %1585 = vmatpush1.msra.mxu0 0.0
  %1586 = vmatprep.subr.mxu0 0.0
  %1587 = vmatpush1.msra.mxu0 0.0
  %1588 = vmatprep.subr.mxu0 0.0
  %1589 = vmatpush1.msra.mxu0 0.0
  %1590 = vmatprep.subr.mxu0 0.0
  %1591 = vmatpush1.msra.mxu0 0.0
  %1592 = vmatprep.subr.mxu0 0.0
  %1593 = vmatpush1.msra.mxu0 0.0
  %1594 = vmatprep.subr.mxu0 0.0
  %1595 = vmatpush1.msra.mxu0 0.0
  %1596 = vmatprep.subr.mxu0 0.0
  %1597 = vmatpush1.msra.mxu0 0.0
  %1598 = vmatprep.subr.mxu0 0.0
  %1599 = vmatpush1.msra.mxu0 0.0
  %1600 = vmatprep.subr.mxu0 0.0
  %1601 = vmatpush1.msra.mxu0 0.0
  %1602 = vmatprep.subr.mxu0 0.0
  %1603 = vmatpush1.msra.mxu0 0.0
  %1604 = vmatprep.subr.mxu0 0.0
  %1605 = vmatpush1.msra.mxu0 0.0
  %1606 = vmatprep.subr.mxu0 0.0
  %1607 = vmatpush1.msra.mxu0 0.0
  %1608 = vmatprep.subr.mxu0 0.0
  %1609 = vmatpush1.msra.mxu0 0.0
  %1610 = vmatprep.subr.mxu0 0.0
  %1611 = vmatpush1.msra.mxu0 0.0
  %1612 = vmatprep.subr.mxu0 0.0
  %1613 = vmatpush1.msra.mxu0 0.0
  %1614 = vmatprep.subr.mxu0 0.0
  %1615 = vmatpush1.msra.mxu0 0.0
  %1616 = vmatprep.subr.mxu0 0.0
  %1617 = vmatpush1.msra.mxu0 0.0
  %1618 = vmatprep.subr.mxu0 0.0
  %1619 = vmatpush1.msra.mxu0 0.0
  %1620 = vmatprep.mubr.f32.mxu0 0.0
  %1621 = vmatmul.mubr.f32.gmra.mrb[0].mxu0 %v1551
  %v1622 = vpop.f32.mrb[0].mxu0
  %v1623 = vadd.f32 %v1549, %v1622
  %v1624 = vpop.f32.mrb[0].mxu0
  %1625 = vmatprep.mubr.f32.mxu0 0.0
  %1626 = vmatmul.mubr.f32.gmra.mrb[0].mxu0 %v1554
  %v1627 = vpop.f32.mrb[0].mxu0
  %v1628 = vadd.f32 %v1549, %v1627
  %v1629 = vpop.f32.mrb[0].mxu0
  %1630 = vdwg.mxu0
  %v1631 = vmul.f32 %v1623, 0.5
  %v1632 = vmul.f32 %v1628, 0.5
  %v1633 = vmul.f32 %v1623, 0.044715
  %v1634 = vmul.f32 %v1628, 0.044715
  %v1635 = vmul.f32 %v1633, %v1623
  %v1636 = vmul.f32 %v1634, %v1628
  %v1637 = vmul.f32 %v1635, %v1623
  %v1638 = vmul.f32 %v1636, %v1628
  %v1639 = vadd.f32 %v1623, %v1637
  %v1640 = vadd.f32 %v1628, %v1638
  %v1641 = vmul.f32 %v1639, 0.7978846
  %v1642 = vmul.f32 %v1640, 0.7978846
  %v1643 = vtanh.pop %v1641
  %v1644 = vtanh.pop %v1642
  %v1645 = vadd.f32 %v1643, 1.0
  %v1646 = vadd.f32 %v1644, 1.0
  %v1647 = vmul.f32 %v1631, %v1645
  %v1648 = vmul.f32 %v1632, %v1646
  %v1649 = vlaneseq
  %v1650 = vshrl.u32 %v1649, 7
  %v1651 = vsub.s32 2, %v1650
  %v1652 = vrot.slane %v1008, %v1651
  %v1654 = vsel %vm878, %v1647, 0
  %v1657 = vsel %vm878, %v1648, 0
  %1659 = vmatprep.subr.mxu0 0.0
  %1660 = vmatpush1.msra.mxu0 %v1010
  %1661 = vmatprep.subr.mxu0 0.0
  %1662 = vmatpush1.msra.mxu0 %v1011
  %1663 = vmatprep.subr.mxu0 0.0
  %1664 = vmatpush1.msra.mxu0 %v1012
  %1665 = vmatprep.subr.mxu0 0.0
  %1666 = vmatpush1.msra.mxu0 %v1013
  %1667 = vmatprep.subr.mxu0 0.0
  %1668 = vmatpush1.msra.mxu0 %v1014
  %1669 = vmatprep.subr.mxu0 0.0
  %1670 = vmatpush1.msra.mxu0 %v1015
  %1671 = vmatprep.subr.mxu0 0.0
  %1672 = vmatpush1.msra.mxu0 %v1016
  %1673 = vmatprep.subr.mxu0 0.0
  %1674 = vmatpush1.msra.mxu0 %v1017
  %1675 = vmatprep.subr.mxu0 0.0
  %1676 = vmatpush1.msra.mxu0 0.0
  %1677 = vmatprep.subr.mxu0 0.0
  %1678 = vmatpush1.msra.mxu0 0.0
  %1679 = vmatprep.subr.mxu0 0.0
  %1680 = vmatpush1.msra.mxu0 0.0
  %1681 = vmatprep.subr.mxu0 0.0
  %1682 = vmatpush1.msra.mxu0 0.0
  %1683 = vmatprep.subr.mxu0 0.0
  %1684 = vmatpush1.msra.mxu0 0.0
  %1685 = vmatprep.subr.mxu0 0.0
  %1686 = vmatpush1.msra.mxu0 0.0
  %1687 = vmatprep.subr.mxu0 0.0
  %1688 = vmatpush1.msra.mxu0 0.0
  %1689 = vmatprep.subr.mxu0 0.0
  %1690 = vmatpush1.msra.mxu0 0.0
  %1691 = vmatprep.subr.mxu0 0.0
  %1692 = vmatpush1.msra.mxu0 0.0
  %1693 = vmatprep.subr.mxu0 0.0
  %1694 = vmatpush1.msra.mxu0 0.0
  %1695 = vmatprep.subr.mxu0 0.0
  %1696 = vmatpush1.msra.mxu0 0.0
  %1697 = vmatprep.subr.mxu0 0.0
  %1698 = vmatpush1.msra.mxu0 0.0
  %1699 = vmatprep.subr.mxu0 0.0
  %1700 = vmatpush1.msra.mxu0 0.0
  %1701 = vmatprep.subr.mxu0 0.0
  %1702 = vmatpush1.msra.mxu0 0.0
  %1703 = vmatprep.subr.mxu0 0.0
  %1704 = vmatpush1.msra.mxu0 0.0
  %1705 = vmatprep.subr.mxu0 0.0
  %1706 = vmatpush1.msra.mxu0 0.0
  %1707 = vmatprep.subr.mxu0 0.0
  %1708 = vmatpush1.msra.mxu0 0.0
  %1709 = vmatprep.subr.mxu0 0.0
  %1710 = vmatpush1.msra.mxu0 0.0
  %1711 = vmatprep.subr.mxu0 0.0
  %1712 = vmatpush1.msra.mxu0 0.0
  %1713 = vmatprep.subr.mxu0 0.0
  %1714 = vmatpush1.msra.mxu0 0.0
  %1715 = vmatprep.subr.mxu0 0.0
  %1716 = vmatpush1.msra.mxu0 0.0
  %1717 = vmatprep.subr.mxu0 0.0
  %1718 = vmatpush1.msra.mxu0 0.0
  %1719 = vmatprep.subr.mxu0 0.0
  %1720 = vmatpush1.msra.mxu0 0.0
  %1721 = vmatprep.subr.mxu0 0.0
  %1722 = vmatpush1.msra.mxu0 0.0
  %1723 = vmatprep.mubr.f32.mxu0 0.0
  %1724 = vmatmul.mubr.f32.gmra.mrb[0].mxu0 %v1654
  %v1725 = vpop.f32.mrb[0].mxu0
  %v1726 = vadd.f32 %v1652, %v1725
  %v1727 = vpop.f32.mrb[0].mxu0
  %1728 = vmatprep.mubr.f32.mxu0 0.0
  %1729 = vmatmul.mubr.f32.gmra.mrb[0].mxu0 %v1657
  %v1730 = vpop.f32.mrb[0].mxu0
  %v1731 = vadd.f32 %v1652, %v1730
  %v1732 = vpop.f32.mrb[0].mxu0
  %1733 = vdwg.mxu0
  %v1734 = vadd.f32 %v1544, %v1726
  %v1735 = vadd.f32 %v1545, %v1731
  %v1736 = vsel %vm150, %v1734, 0.0
  %1737 = vadd.xlane.f32.xlu0 %v1736
  %v1738 = vpop.xlane.xlu0 %1737
  %v1739 = vsel %vm150, %v1735, 0.0
  %1740 = vadd.xlane.f32.xlu0 %v1739
  %v1741 = vpop.xlane.xlu0 %1740
  %v1742 = vmul.f32 %v1738, %v157
  %v1743 = vmul.f32 %v1741, %v157
  %v1744 = vsub.f32 %v1734, %v1742
  %v1745 = vsub.f32 %v1735, %v1743
  %v1746 = vmul.f32 %v1744, %v1744
  %v1747 = vmul.f32 %v1745, %v1745
  %v1748 = vsel %vm150, %v1746, 0.0
  %1749 = vadd.xlane.f32.xlu0 %v1748
  %v1750 = vpop.xlane.xlu0 %1749
  %v1751 = vsel %vm150, %v1747, 0.0
  %1752 = vadd.xlane.f32.xlu0 %v1751
  %v1753 = vpop.xlane.xlu0 %1752
  %v1754 = vmul.f32 %v1750, %v157
  %v1755 = vmul.f32 %v1753, %v157
  %v1756 = vadd.f32 %v1754, 1e-12
  %v1757 = vadd.f32 %v1755, 1e-12
  %v1758 = vrsqrt.pop %v1756
  %v1759 = vrsqrt.pop %v1757
  %v1760 = vmul.f32 %v1744, %v1758
  %v1761 = vmul.f32 %v1745, %v1759
  %1763 = vrot.lane.b32.xlu0 %v1652, 96
  %v1764 = vpop.permute.xlu0 %1763
  %v1766 = vmul.f32 %v1760, %v1764
  %v1767 = vmul.f32 %v1761, %v1764
  %1768 = vrot.lane.b32.xlu0 %v1652, 64
  %v1769 = vpop.permute.xlu0 %1768
  %v1771 = vadd.f32 %v1766, %v1769
  %v1772 = vadd.f32 %v1767, %v1769
  %v1773 = vlaneseq
  %v1774 = vshrl.u32 %v1773, 7
  %v1775 = vsub.s32 0, %v1774
  %v1776 = vrot.slane %v28, %v1775
  %v1778 = vsel %vm150, %v1771, 0
  %v1781 = vsel %vm150, %v1772, 0
  %1783 = vmatprep.subr.mxu0 0.0
  %1784 = vmatpush1.msra.mxu0 %v22
  %1785 = vmatprep.subr.mxu0 0.0
  %1786 = vmatpush1.msra.mxu0 %v23
  %1787 = vmatprep.subr.mxu0 0.0
  %1788 = vmatpush1.msra.mxu0 %v24
  %1789 = vmatprep.subr.mxu0 0.0
  %1790 = vmatpush1.msra.mxu0 %v25
  %1791 = vmatprep.subr.mxu0 0.0
  %1792 = vmatpush1.msra.mxu0 0.0
  %1793 = vmatprep.subr.mxu0 0.0
  %1794 = vmatpush1.msra.mxu0 0.0
  %1795 = vmatprep.subr.mxu0 0.0
  %1796 = vmatpush1.msra.mxu0 0.0
  %1797 = vmatprep.subr.mxu0 0.0
  %1798 = vmatpush1.msra.mxu0 0.0
  %1799 = vmatprep.subr.mxu0 0.0
  %1800 = vmatpush1.msra.mxu0 0.0
  %1801 = vmatprep.subr.mxu0 0.0
  %1802 = vmatpush1.msra.mxu0 0.0
  %1803 = vmatprep.subr.mxu0 0.0
  %1804 = vmatpush1.msra.mxu0 0.0
  %1805 = vmatprep.subr.mxu0 0.0
  %1806 = vmatpush1.msra.mxu0 0.0
  %1807 = vmatprep.subr.mxu0 0.0
  %1808 = vmatpush1.msra.mxu0 0.0
  %1809 = vmatprep.subr.mxu0 0.0
  %1810 = vmatpush1.msra.mxu0 0.0
  %1811 = vmatprep.subr.mxu0 0.0
  %1812 = vmatpush1.msra.mxu0 0.0
  %1813 = vmatprep.subr.mxu0 0.0
  %1814 = vmatpush1.msra.mxu0 0.0
  %1815 = vmatprep.subr.mxu0 0.0
  %1816 = vmatpush1.msra.mxu0 0.0
  %1817 = vmatprep.subr.mxu0 0.0
  %1818 = vmatpush1.msra.mxu0 0.0
  %1819 = vmatprep.subr.mxu0 0.0
  %1820 = vmatpush1.msra.mxu0 0.0
  %1821 = vmatprep.subr.mxu0 0.0
  %1822 = vmatpush1.msra.mxu0 0.0
  %1823 = vmatprep.subr.mxu0 0.0
  %1824 = vmatpush1.msra.mxu0 0.0
  %1825 = vmatprep.subr.mxu0 0.0
  %1826 = vmatpush1.msra.mxu0 0.0
  %1827 = vmatprep.subr.mxu0 0.0
  %1828 = vmatpush1.msra.mxu0 0.0
  %1829 = vmatprep.subr.mxu0 0.0
  %1830 = vmatpush1.msra.mxu0 0.0
  %1831 = vmatprep.subr.mxu0 0.0
  %1832 = vmatpush1.msra.mxu0 0.0
  %1833 = vmatprep.subr.mxu0 0.0
  %1834 = vmatpush1.msra.mxu0 0.0
  %1835 = vmatprep.subr.mxu0 0.0
  %1836 = vmatpush1.msra.mxu0 0.0
  %1837 = vmatprep.subr.mxu0 0.0
  %1838 = vmatpush1.msra.mxu0 0.0
  %1839 = vmatprep.subr.mxu0 0.0
  %1840 = vmatpush1.msra.mxu0 0.0
  %1841 = vmatprep.subr.mxu0 0.0
  %1842 = vmatpush1.msra.mxu0 0.0
  %1843 = vmatprep.subr.mxu0 0.0
  %1844 = vmatpush1.msra.mxu0 0.0
  %1845 = vmatprep.subr.mxu0 0.0
  %1846 = vmatpush1.msra.mxu0 0.0
  %1847 = vmatprep.mubr.f32.mxu0 0.0
  %1848 = vmatmul.mubr.f32.gmra.mrb[0].mxu0 %v1778
  %v1849 = vpop.f32.mrb[0].mxu0
  %v1850 = vadd.f32 %v1776, %v1849
  %v1851 = vpop.f32.mrb[0].mxu0
  %1852 = vmatprep.mubr.f32.mxu0 0.0
  %1853 = vmatmul.mubr.f32.gmra.mrb[0].mxu0 %v1781
  %v1854 = vpop.f32.mrb[0].mxu0
  %v1855 = vadd.f32 %v1776, %v1854
  %v1856 = vpop.f32.mrb[0].mxu0
  %1857 = vdwg.mxu0
  %1858 = vmatprep.subr.mxu0 0.0
  %1859 = vmatpush1.msra.mxu0 %v74
  %1860 = vmatprep.subr.mxu0 0.0
  %1861 = vmatpush1.msra.mxu0 %v75
  %1862 = vmatprep.subr.mxu0 0.0
  %1863 = vmatpush1.msra.mxu0 %v76
  %1864 = vmatprep.subr.mxu0 0.0
  %1865 = vmatpush1.msra.mxu0 %v77
  %1866 = vmatprep.subr.mxu0 0.0
  %1867 = vmatpush1.msra.mxu0 0.0
  %1868 = vmatprep.subr.mxu0 0.0
  %1869 = vmatpush1.msra.mxu0 0.0
  %1870 = vmatprep.subr.mxu0 0.0
  %1871 = vmatpush1.msra.mxu0 0.0
  %1872 = vmatprep.subr.mxu0 0.0
  %1873 = vmatpush1.msra.mxu0 0.0
  %1874 = vmatprep.subr.mxu0 0.0
  %1875 = vmatpush1.msra.mxu0 0.0
  %1876 = vmatprep.subr.mxu0 0.0
  %1877 = vmatpush1.msra.mxu0 0.0
  %1878 = vmatprep.subr.mxu0 0.0
  %1879 = vmatpush1.msra.mxu0 0.0
  %1880 = vmatprep.subr.mxu0 0.0
  %1881 = vmatpush1.msra.mxu0 0.0
  %1882 = vmatprep.subr.mxu0 0.0
  %1883 = vmatpush1.msra.mxu0 0.0
  %1884 = vmatprep.subr.mxu0 0.0
  %1885 = vmatpush1.msra.mxu0 0.0
  %1886 = vmatprep.subr.mxu0 0.0
  %1887 = vmatpush1.msra.mxu0 0.0
  %1888 = vmatprep.subr.mxu0 0.0
  %1889 = vmatpush1.msra.mxu0 0.0
  %1890 = vmatprep.subr.mxu0 0.0
  %1891 = vmatpush1.msra.mxu0 0.0
  %1892 = vmatprep.subr.mxu0 0.0
  %1893 = vmatpush1.msra.mxu0 0.0
  %1894 = vmatprep.subr.mxu0 0.0
  %1895 = vmatpush1.msra.mxu0 0.0
  %1896 = vmatprep.subr.mxu0 0.0
  %1897 = vmatpush1.msra.mxu0 0.0
  %1898 = vmatprep.subr.mxu0 0.0
  %1899 = vmatpush1.msra.mxu0 0.0
  %1900 = vmatprep.subr.mxu0 0.0
  %1901 = vmatpush1.msra.mxu0 0.0
  %1902 = vmatprep.subr.mxu0 0.0
  %1903 = vmatpush1.msra.mxu0 0.0
  %1904 = vmatprep.subr.mxu0 0.0
  %1905 = vmatpush1.msra.mxu0 0.0
  %1906 = vmatprep.subr.mxu0 0.0
  %1907 = vmatpush1.msra.mxu0 0.0
  %1908 = vmatprep.subr.mxu0 0.0
  %1909 = vmatpush1.msra.mxu0 0.0
  %1910 = vmatprep.subr.mxu0 0.0
  %1911 = vmatpush1.msra.mxu0 0.0
  %1912 = vmatprep.subr.mxu0 0.0
  %1913 = vmatpush1.msra.mxu0 0.0
  %1914 = vmatprep.subr.mxu0 0.0
  %1915 = vmatpush1.msra.mxu0 0.0
  %1916 = vmatprep.subr.mxu0 0.0
  %1917 = vmatpush1.msra.mxu0 0.0
  %1918 = vmatprep.subr.mxu0 0.0
  %1919 = vmatpush1.msra.mxu0 0.0
  %1920 = vmatprep.subr.mxu0 0.0
  %1921 = vmatpush1.msra.mxu0 0.0
  %1922 = vmatprep.mubr.f32.mxu0 0.0
  %1923 = vmatmul.mubr.f32.gmra.mrb[0].mxu0 %v1778
  %v1924 = vpop.f32.mrb[0].mxu0
  %v1925 = vadd.f32 0.0, %v1924
  %v1926 = vpop.f32.mrb[0].mxu0
  %1927 = vmatprep.mubr.f32.mxu0 0.0
  %1928 = vmatmul.mubr.f32.gmra.mrb[0].mxu0 %v1781
  %v1929 = vpop.f32.mrb[0].mxu0
  %v1930 = vadd.f32 0.0, %v1929
  %v1931 = vpop.f32.mrb[0].mxu0
  %1932 = vdwg.mxu0
  %v1933 = vmul.f32 %v1925, %v1850
  %v1934 = vmul.f32 %v1930, %v1855
  %1935 = vmatprep.subr.mxu0 0.0
  %1936 = vmatpush1.msra.mxu0 %v122
  %1937 = vmatprep.subr.mxu0 0.0
  %1938 = vmatpush1.msra.mxu0 %v123
  %1939 = vmatprep.subr.mxu0 0.0
  %1940 = vmatpush1.msra.mxu0 %v124
  %1941 = vmatprep.subr.mxu0 0.0
  %1942 = vmatpush1.msra.mxu0 %v125
  %1943 = vmatprep.subr.mxu0 0.0
  %1944 = vmatpush1.msra.mxu0 %v126
  %1945 = vmatprep.subr.mxu0 0.0
  %1946 = vmatpush1.msra.mxu0 %v127
  %1947 = vmatprep.subr.mxu0 0.0
  %1948 = vmatpush1.msra.mxu0 %v128
  %1949 = vmatprep.subr.mxu0 0.0
  %1950 = vmatpush1.msra.mxu0 %v129
  %1951 = vmatprep.subr.mxu0 0.0
  %1952 = vmatpush1.msra.mxu0 %v130
  %1953 = vmatprep.subr.mxu0 0.0
  %1954 = vmatpush1.msra.mxu0 %v131
  %1955 = vmatprep.subr.mxu0 0.0
  %1956 = vmatpush1.msra.mxu0 %v132
  %1957 = vmatprep.subr.mxu0 0.0
  %1958 = vmatpush1.msra.mxu0 %v133
  %1959 = vmatprep.subr.mxu0 0.0
  %1960 = vmatpush1.msra.mxu0 %v134
  %1961 = vmatprep.subr.mxu0 0.0
  %1962 = vmatpush1.msra.mxu0 %v135
  %1963 = vmatprep.subr.mxu0 0.0
  %1964 = vmatpush1.msra.mxu0 %v136
  %1965 = vmatprep.subr.mxu0 0.0
  %1966 = vmatpush1.msra.mxu0 %v137
  %1967 = vmatprep.subr.mxu0 0.0
  %1968 = vmatpush1.msra.mxu0 0.0
  %1969 = vmatprep.subr.mxu0 0.0
  %1970 = vmatpush1.msra.mxu0 0.0
  %1971 = vmatprep.subr.mxu0 0.0
  %1972 = vmatpush1.msra.mxu0 0.0
  %1973 = vmatprep.subr.mxu0 0.0
  %1974 = vmatpush1.msra.mxu0 0.0
  %1975 = vmatprep.subr.mxu0 0.0
  %1976 = vmatpush1.msra.mxu0 0.0
  %1977 = vmatprep.subr.mxu0 0.0
  %1978 = vmatpush1.msra.mxu0 0.0
  %1979 = vmatprep.subr.mxu0 0.0
  %1980 = vmatpush1.msra.mxu0 0.0
  %1981 = vmatprep.subr.mxu0 0.0
  %1982 = vmatpush1.msra.mxu0 0.0
  %1983 = vmatprep.subr.mxu0 0.0
  %1984 = vmatpush1.msra.mxu0 0.0
  %1985 = vmatprep.subr.mxu0 0.0
  %1986 = vmatpush1.msra.mxu0 0.0
  %1987 = vmatprep.subr.mxu0 0.0
  %1988 = vmatpush1.msra.mxu0 0.0
  %1989 = vmatprep.subr.mxu0 0.0
  %1990 = vmatpush1.msra.mxu0 0.0
  %1991 = vmatprep.subr.mxu0 0.0
  %1992 = vmatpush1.msra.mxu0 0.0
  %1993 = vmatprep.subr.mxu0 0.0
  %1994 = vmatpush1.msra.mxu0 0.0
  %1995 = vmatprep.subr.mxu0 0.0
  %1996 = vmatpush1.msra.mxu0 0.0
  %1997 = vmatprep.subr.mxu0 0.0
  %1998 = vmatpush1.msra.mxu0 0.0
  %1999 = vmatprep.mubr.f32.mxu0 0.0
  %2000 = vmatmul.mubr.f32.gmra.mrb[0].mxu0 %v1933
  %v2001 = vpop.f32.mrb[0].mxu0
  %v2002 = vadd.f32 0.0, %v2001
  %v2003 = vpop.f32.mrb[0].mxu0
  %2004 = vmatprep.mubr.f32.mxu0 0.0
  %2005 = vmatmul.mubr.f32.gmra.mrb[0].mxu0 %v1934
  %v2006 = vpop.f32.mrb[0].mxu0
  %v2007 = vadd.f32 0.0, %v2006
  %v2008 = vpop.f32.mrb[0].mxu0
  %2009 = vdwg.mxu0
  %v2010 = vtanh.pop %v2002
  %v2011 = vtanh.pop %v2007
  %2012 = vrot.lane.b32.xlu0 %v20, 64
  %v2013 = vpop.permute.xlu0 %2012
  %2014 = vrot.lane.b32.xlu0 %v21, 64
  %v2015 = vpop.permute.xlu0 %2014
  %v2018 = vmul.f32 %v2010, %v2013
  %v2019 = vmul.f32 %v2011, %v2015
  %v2020 = vsub.f32 1.0, %v20
  %v2021 = vsub.f32 1.0, %v21
  %v2022 = vmul.f32 %v2020, -10000.0
  %v2023 = vmul.f32 %v2021, -10000.0
  %2026 = vrot.lane.b32.xlu0 %v2022, 64
  %v2027 = vpop.permute.xlu0 %2026
  %2028 = vrot.lane.b32.xlu0 %v2023, 64
  %v2029 = vpop.permute.xlu0 %2028
  %v2032 = vadd.f32 %v2018, %v2027
  %v2033 = vadd.f32 %v2019, %v2029
  %v2034 = vmul.f32 %v2032, 1.442695
  %v2035 = vpow.pop %v2034
  %v2036 = vmul.f32 %v2033, 1.442695
  %v2037 = vpow.pop %v2036
  %vm2038 = vcmask 130048
  %v2040 = vsel %vm2038, %v143, 0
  %2042 = vmatprep.subr.mxu0 0.0
  %2043 = vmatpush1.msra.mxu0 %v2035
  %2044 = vmatprep.subr.mxu0 0.0
  %2045 = vmatpush1.msra.mxu0 %v2037
  %2046 = vmatprep.subr.mxu0 0.0
  %2047 = vmatpush1.msra.mxu0 0.0
  %2048 = vmatprep.subr.mxu0 0.0
  %2049 = vmatpush1.msra.mxu0 0.0
  %2050 = vmatprep.subr.mxu0 0.0
  %2051 = vmatpush1.msra.mxu0 0.0
  %2052 = vmatprep.subr.mxu0 0.0
  %2053 = vmatpush1.msra.mxu0 0.0
  %2054 = vmatprep.subr.mxu0 0.0
  %2055 = vmatpush1.msra.mxu0 0.0
  %2056 = vmatprep.subr.mxu0 0.0
  %2057 = vmatpush1.msra.mxu0 0.0
  %2058 = vmatprep.subr.mxu0 0.0
  %2059 = vmatpush1.msra.mxu0 0.0
  %2060 = vmatprep.subr.mxu0 0.0
  %2061 = vmatpush1.msra.mxu0 0.0
  %2062 = vmatprep.subr.mxu0 0.0
  %2063 = vmatpush1.msra.mxu0 0.0
  %2064 = vmatprep.subr.mxu0 0.0
  %2065 = vmatpush1.msra.mxu0 0.0
  %2066 = vmatprep.subr.mxu0 0.0
  %2067 = vmatpush1.msra.mxu0 0.0
  %2068 = vmatprep.subr.mxu0 0.0
  %2069 = vmatpush1.msra.mxu0 0.0
  %2070 = vmatprep.subr.mxu0 0.0
  %2071 = vmatpush1.msra.mxu0 0.0
  %2072 = vmatprep.subr.mxu0 0.0
  %2073 = vmatpush1.msra.mxu0 0.0
  %2074 = vmatprep.subr.mxu0 0.0
  %2075 = vmatpush1.msra.mxu0 0.0
  %2076 = vmatprep.subr.mxu0 0.0
  %2077 = vmatpush1.msra.mxu0 0.0
  %2078 = vmatprep.subr.mxu0 0.0
  %2079 = vmatpush1.msra.mxu0 0.0
  %2080 = vmatprep.subr.mxu0 0.0
  %2081 = vmatpush1.msra.mxu0 0.0
  %2082 = vmatprep.subr.mxu0 0.0
  %2083 = vmatpush1.msra.mxu0 0.0
  %2084 = vmatprep.subr.mxu0 0.0
  %2085 = vmatpush1.msra.mxu0 0.0
  %2086 = vmatprep.subr.mxu0 0.0
  %2087 = vmatpush1.msra.mxu0 0.0
  %2088 = vmatprep.subr.mxu0 0.0
  %2089 = vmatpush1.msra.mxu0 0.0
  %2090 = vmatprep.subr.mxu0 0.0
  %2091 = vmatpush1.msra.mxu0 0.0
  %2092 = vmatprep.subr.mxu0 0.0
  %2093 = vmatpush1.msra.mxu0 0.0
  %2094 = vmatprep.subr.mxu0 0.0
  %2095 = vmatpush1.msra.mxu0 0.0
  %2096 = vmatprep.subr.mxu0 0.0
  %2097 = vmatpush1.msra.mxu0 0.0
  %2098 = vmatprep.subr.mxu0 0.0
  %2099 = vmatpush1.msra.mxu0 0.0
  %2100 = vmatprep.subr.mxu0 0.0
  %2101 = vmatpush1.msra.mxu0 0.0
  %2102 = vmatprep.subr.mxu0 0.0
  %2103 = vmatpush1.msra.mxu0 0.0
  %2104 = vmatprep.subr.mxu0 0.0
  %2105 = vmatpush1.msra.mxu0 0.0
  %2106 = vmatprep.mubr.f32.mxu0 0.0
  %2107 = vmatmul.mubr.f32.gmra.mrb[0].mxu0 %v2040
  %v2108 = vpop.f32.mrb[0].mxu0
  %v2109 = vadd.f32 0.0, %v2108
  %v2110 = vpop.f32.mrb[0].mxu0
  %2111 = vdwg.mxu0
  %vm2112 = vcmask 15360
  %v2114 = vsel %vm2112, %v148, 0
  %v2117 = vsel %vm2112, %v149, 0
  %vm2119 = vcmask 1041408
  %v2121 = vsel %vm2119, %v2109, 0
  %2123 = vmatprep.subr.mxu0 0.0
  %2124 = vmatpush1.msra.mxu0 %v2121
  %2125 = vmatprep.subr.mxu0 0.0
  %2126 = vmatpush1.msra.mxu0 0.0
  %2127 = vmatprep.subr.mxu0 0.0
  %2128 = vmatpush1.msra.mxu0 0.0
  %2129 = vmatprep.subr.mxu0 0.0
  %2130 = vmatpush1.msra.mxu0 0.0
  %2131 = vmatprep.subr.mxu0 0.0
  %2132 = vmatpush1.msra.mxu0 0.0
  %2133 = vmatprep.subr.mxu0 0.0
  %2134 = vmatpush1.msra.mxu0 0.0
  %2135 = vmatprep.subr.mxu0 0.0
  %2136 = vmatpush1.msra.mxu0 0.0
  %2137 = vmatprep.subr.mxu0 0.0
  %2138 = vmatpush1.msra.mxu0 0.0
  %2139 = vmatprep.subr.mxu0 0.0
  %2140 = vmatpush1.msra.mxu0 0.0
  %2141 = vmatprep.subr.mxu0 0.0
  %2142 = vmatpush1.msra.mxu0 0.0
  %2143 = vmatprep.subr.mxu0 0.0
  %2144 = vmatpush1.msra.mxu0 0.0
  %2145 = vmatprep.subr.mxu0 0.0
  %2146 = vmatpush1.msra.mxu0 0.0
  %2147 = vmatprep.subr.mxu0 0.0
  %2148 = vmatpush1.msra.mxu0 0.0
  %2149 = vmatprep.subr.mxu0 0.0
  %2150 = vmatpush1.msra.mxu0 0.0
  %2151 = vmatprep.subr.mxu0 0.0
  %2152 = vmatpush1.msra.mxu0 0.0
  %2153 = vmatprep.subr.mxu0 0.0
  %2154 = vmatpush1.msra.mxu0 0.0
  %2155 = vmatprep.subr.mxu0 0.0
  %2156 = vmatpush1.msra.mxu0 0.0
  %2157 = vmatprep.subr.mxu0 0.0
  %2158 = vmatpush1.msra.mxu0 0.0
  %2159 = vmatprep.subr.mxu0 0.0
  %2160 = vmatpush1.msra.mxu0 0.0
  %2161 = vmatprep.subr.mxu0 0.0
  %2162 = vmatpush1.msra.mxu0 0.0
  %2163 = vmatprep.subr.mxu0 0.0
  %2164 = vmatpush1.msra.mxu0 0.0
  %2165 = vmatprep.subr.mxu0 0.0
  %2166 = vmatpush1.msra.mxu0 0.0
  %2167 = vmatprep.subr.mxu0 0.0
  %2168 = vmatpush1.msra.mxu0 0.0
  %2169 = vmatprep.subr.mxu0 0.0
  %2170 = vmatpush1.msra.mxu0 0.0
  %2171 = vmatprep.subr.mxu0 0.0
  %2172 = vmatpush1.msra.mxu0 0.0
  %2173 = vmatprep.subr.mxu0 0.0
  %2174 = vmatpush1.msra.mxu0 0.0
  %2175 = vmatprep.subr.mxu0 0.0
  %2176 = vmatpush1.msra.mxu0 0.0
  %2177 = vmatprep.subr.mxu0 0.0
  %2178 = vmatpush1.msra.mxu0 0.0
  %2179 = vmatprep.subr.mxu0 0.0
  %2180 = vmatpush1.msra.mxu0 0.0
  %2181 = vmatprep.subr.mxu0 0.0
  %2182 = vmatpush1.msra.mxu0 0.0
  %2183 = vmatprep.subr.mxu0 0.0
  %2184 = vmatpush1.msra.mxu0 0.0
  %2185 = vmatprep.subr.mxu0 0.0
  %2186 = vmatpush1.msra.mxu0 0.0
  %2187 = vmatprep.mubr.f32.mxu0 0.0
  %2188 = vmatmul.mubr.f32.gmra.mrb[0].mxu0 %v2114
  %v2189 = vpop.f32.mrb[0].mxu0
  %v2190 = vadd.f32 0.0, %v2189
  %v2191 = vpop.f32.mrb[0].mxu0
  %2192 = vmatprep.mubr.f32.mxu0 0.0
  %2193 = vmatmul.mubr.f32.gmra.mrb[0].mxu0 %v2117
  %v2194 = vpop.f32.mrb[0].mxu0
  %v2195 = vadd.f32 0.0, %v2194
  %v2196 = vpop.f32.mrb[0].mxu0
  %2197 = vdwg.mxu0
  %v2198 = vrcp.pop %v2190
  %v2199 = vrcp.pop %v2195
  %v2200 = vmul.f32 %v2035, %v2198
  %v2201 = vmul.f32 %v2037, %v2199
  %vm2202 = vcmask 31744
  %v2204 = vsel %vm2202, %v2200, 0
  %v2207 = vsel %vm2202, %v2201, 0
  %vm2209 = vcmask 1043456
  %v2211 = vsel %vm2209, %v140, 0
  %2213 = vmatprep.subr.mxu0 0.0
  %2214 = vmatpush1.msra.mxu0 %v2211
  %2215 = vmatprep.subr.mxu0 0.0
  %2216 = vmatpush1.msra.mxu0 0.0
  %2217 = vmatprep.subr.mxu0 0.0
  %2218 = vmatpush1.msra.mxu0 0.0
  %2219 = vmatprep.subr.mxu0 0.0
  %2220 = vmatpush1.msra.mxu0 0.0
  %2221 = vmatprep.subr.mxu0 0.0
  %2222 = vmatpush1.msra.mxu0 0.0
  %2223 = vmatprep.subr.mxu0 0.0
  %2224 = vmatpush1.msra.mxu0 0.0
  %2225 = vmatprep.subr.mxu0 0.0
  %2226 = vmatpush1.msra.mxu0 0.0
  %2227 = vmatprep.subr.mxu0 0.0
  %2228 = vmatpush1.msra.mxu0 0.0
  %2229 = vmatprep.subr.mxu0 0.0
  %2230 = vmatpush1.msra.mxu0 0.0
  %2231 = vmatprep.subr.mxu0 0.0
  %2232 = vmatpush1.msra.mxu0 0.0
  %2233 = vmatprep.subr.mxu0 0.0
  %2234 = vmatpush1.msra.mxu0 0.0
  %2235 = vmatprep.subr.mxu0 0.0
  %2236 = vmatpush1.msra.mxu0 0.0
  %2237 = vmatprep.subr.mxu0 0.0
  %2238 = vmatpush1.msra.mxu0 0.0
  %2239 = vmatprep.subr.mxu0 0.0
  %2240 = vmatpush1.msra.mxu0 0.0
  %2241 = vmatprep.subr.mxu0 0.0
  %2242 = vmatpush1.msra.mxu0 0.0
  %2243 = vmatprep.subr.mxu0 0.0
  %2244 = vmatpush1.msra.mxu0 0.0
  %2245 = vmatprep.subr.mxu0 0.0
  %2246 = vmatpush1.msra.mxu0 0.0
  %2247 = vmatprep.subr.mxu0 0.0
  %2248 = vmatpush1.msra.mxu0 0.0
  %2249 = vmatprep.subr.mxu0 0.0
  %2250 = vmatpush1.msra.mxu0 0.0
  %2251 = vmatprep.subr.mxu0 0.0
  %2252 = vmatpush1.msra.mxu0 0.0
  %2253 = vmatprep.subr.mxu0 0.0
  %2254 = vmatpush1.msra.mxu0 0.0
  %2255 = vmatprep.subr.mxu0 0.0
  %2256 = vmatpush1.msra.mxu0 0.0
  %2257 = vmatprep.subr.mxu0 0.0
  %2258 = vmatpush1.msra.mxu0 0.0
  %2259 = vmatprep.subr.mxu0 0.0
  %2260 = vmatpush1.msra.mxu0 0.0
  %2261 = vmatprep.subr.mxu0 0.0
  %2262 = vmatpush1.msra.mxu0 0.0
  %2263 = vmatprep.subr.mxu0 0.0
  %2264 = vmatpush1.msra.mxu0 0.0
  %2265 = vmatprep.subr.mxu0 0.0
  %2266 = vmatpush1.msra.mxu0 0.0
  %2267 = vmatprep.subr.mxu0 0.0
  %2268 = vmatpush1.msra.mxu0 0.0
  %2269 = vmatprep.subr.mxu0 0.0
  %2270 = vmatpush1.msra.mxu0 0.0
  %2271 = vmatprep.subr.mxu0 0.0
  %2272 = vmatpush1.msra.mxu0 0.0
  %2273 = vmatprep.subr.mxu0 0.0
  %2274 = vmatpush1.msra.mxu0 0.0
  %2275 = vmatprep.subr.mxu0 0.0
  %2276 = vmatpush1.msra.mxu0 0.0
  %2277 = vmatprep.mubr.f32.mxu0 0.0
  %2278 = vmatmul.mubr.f32.gmra.mrb[0].mxu0 %v2204
  %v2279 = vpop.f32.mrb[0].mxu0
  %v2280 = vadd.f32 0.0, %v2279
  %v2281 = vpop.f32.mrb[0].mxu0
  %2282 = vmatprep.mubr.f32.mxu0 0.0
  %2283 = vmatmul.mubr.f32.gmra.mrb[0].mxu0 %v2207
  %v2284 = vpop.f32.mrb[0].mxu0
  %v2285 = vadd.f32 0.0, %v2284
  %v2286 = vpop.f32.mrb[0].mxu0
  %2287 = vdwg.mxu0
  %v2288 = vmul.f32 %v2280, %v1925
  %v2289 = vmul.f32 %v2285, %v1930
  %2290 = vmatprep.subr.mxu0 0.0
  %2291 = vmatpush1.msra.mxu0 %v2288
  %2292 = vmatprep.subr.mxu0 0.0
  %2293 = vmatpush1.msra.mxu0 %v2289
  %2294 = vmatprep.subr.mxu0 0.0
  %2295 = vmatpush1.msra.mxu0 0.0
  %2296 = vmatprep.subr.mxu0 0.0
  %2297 = vmatpush1.msra.mxu0 0.0
  %2298 = vmatprep.subr.mxu0 0.0
  %2299 = vmatpush1.msra.mxu0 0.0
  %2300 = vmatprep.subr.mxu0 0.0
  %2301 = vmatpush1.msra.mxu0 0.0
  %2302 = vmatprep.subr.mxu0 0.0
  %2303 = vmatpush1.msra.mxu0 0.0
  %2304 = vmatprep.subr.mxu0 0.0
  %2305 = vmatpush1.msra.mxu0 0.0
  %2306 = vmatprep.subr.mxu0 0.0
  %2307 = vmatpush1.msra.mxu0 0.0
  %2308 = vmatprep.subr.mxu0 0.0
  %2309 = vmatpush1.msra.mxu0 0.0
  %2310 = vmatprep.subr.mxu0 0.0
  %2311 = vmatpush1.msra.mxu0 0.0
  %2312 = vmatprep.subr.mxu0 0.0
  %2313 = vmatpush1.msra.mxu0 0.0
  %2314 = vmatprep.subr.mxu0 0.0
  %2315 = vmatpush1.msra.mxu0 0.0
  %2316 = vmatprep.subr.mxu0 0.0
  %2317 = vmatpush1.msra.mxu0 0.0
  %2318 = vmatprep.subr.mxu0 0.0
  %2319 = vmatpush1.msra.mxu0 0.0
  %2320 = vmatprep.subr.mxu0 0.0
  %2321 = vmatpush1.msra.mxu0 0.0
  %2322 = vmatprep.subr.mxu0 0.0
  %2323 = vmatpush1.msra.mxu0 0.0
  %2324 = vmatprep.subr.mxu0 0.0
  %2325 = vmatpush1.msra.mxu0 0.0
  %2326 = vmatprep.subr.mxu0 0.0
  %2327 = vmatpush1.msra.mxu0 0.0
  %2328 = vmatprep.subr.mxu0 0.0
  %2329 = vmatpush1.msra.mxu0 0.0
  %2330 = vmatprep.subr.mxu0 0.0
  %2331 = vmatpush1.msra.mxu0 0.0
  %2332 = vmatprep.subr.mxu0 0.0
  %2333 = vmatpush1.msra.mxu0 0.0
  %2334 = vmatprep.subr.mxu0 0.0
  %2335 = vmatpush1.msra.mxu0 0.0
  %2336 = vmatprep.subr.mxu0 0.0
  %2337 = vmatpush1.msra.mxu0 0.0
  %2338 = vmatprep.subr.mxu0 0.0
  %2339 = vmatpush1.msra.mxu0 0.0
  %2340 = vmatprep.subr.mxu0 0.0
  %2341 = vmatpush1.msra.mxu0 0.0
  %2342 = vmatprep.subr.mxu0 0.0
  %2343 = vmatpush1.msra.mxu0 0.0
  %2344 = vmatprep.subr.mxu0 0.0
  %2345 = vmatpush1.msra.mxu0 0.0
  %2346 = vmatprep.subr.mxu0 0.0
  %2347 = vmatpush1.msra.mxu0 0.0
  %2348 = vmatprep.subr.mxu0 0.0
  %2349 = vmatpush1.msra.mxu0 0.0
  %2350 = vmatprep.subr.mxu0 0.0
  %2351 = vmatpush1.msra.mxu0 0.0
  %2352 = vmatprep.subr.mxu0 0.0
  %2353 = vmatpush1.msra.mxu0 0.0
  %2354 = vmatprep.mubr.f32.mxu0 0.0
  %2355 = vmatmul.mubr.f32.gmra.mrb[0].mxu0 %v2040
  %v2356 = vpop.f32.mrb[0].mxu0
  %v2357 = vadd.f32 0.0, %v2356
  %v2358 = vpop.f32.mrb[0].mxu0
  %2359 = vdwg.mxu0
  %2360 = vrot.lane.b32.xlu0 %v20, 60
  %v2361 = vpop.permute.xlu0 %2360
  %vm2362 = vcmask 97280
  %v2363 = vsel %vm2362, %v2361, 0
  %v2366 = vsel %vm2209, %v48, 0
  %2368 = vmatprep.subr.mxu0 0.0
  %2369 = vmatpush1.msra.mxu0 %v47
  %2370 = vmatprep.subr.mxu0 0.0
  %2371 = vmatpush1.msra.mxu0 %v2366
  %2372 = vmatprep.subr.mxu0 0.0
  %2373 = vmatpush1.msra.mxu0 0.0
  %2374 = vmatprep.subr.mxu0 0.0
  %2375 = vmatpush1.msra.mxu0 0.0
  %2376 = vmatprep.subr.mxu0 0.0
  %2377 = vmatpush1.msra.mxu0 0.0
  %2378 = vmatprep.subr.mxu0 0.0
  %2379 = vmatpush1.msra.mxu0 0.0
  %2380 = vmatprep.subr.mxu0 0.0
  %2381 = vmatpush1.msra.mxu0 0.0
  %2382 = vmatprep.subr.mxu0 0.0
  %2383 = vmatpush1.msra.mxu0 0.0
  %2384 = vmatprep.subr.mxu0 0.0
  %2385 = vmatpush1.msra.mxu0 0.0
  %2386 = vmatprep.subr.mxu0 0.0
  %2387 = vmatpush1.msra.mxu0 0.0
  %2388 = vmatprep.subr.mxu0 0.0
  %2389 = vmatpush1.msra.mxu0 0.0
  %2390 = vmatprep.subr.mxu0 0.0
  %2391 = vmatpush1.msra.mxu0 0.0
  %2392 = vmatprep.subr.mxu0 0.0
  %2393 = vmatpush1.msra.mxu0 0.0
  %2394 = vmatprep.subr.mxu0 0.0
  %2395 = vmatpush1.msra.mxu0 0.0
  %2396 = vmatprep.subr.mxu0 0.0
  %2397 = vmatpush1.msra.mxu0 0.0
  %2398 = vmatprep.subr.mxu0 0.0
  %2399 = vmatpush1.msra.mxu0 0.0
  %2400 = vmatprep.subr.mxu0 0.0
  %2401 = vmatpush1.msra.mxu0 0.0
  %2402 = vmatprep.subr.mxu0 0.0
  %2403 = vmatpush1.msra.mxu0 0.0
  %2404 = vmatprep.subr.mxu0 0.0
  %2405 = vmatpush1.msra.mxu0 0.0
  %2406 = vmatprep.subr.mxu0 0.0
  %2407 = vmatpush1.msra.mxu0 0.0
  %2408 = vmatprep.subr.mxu0 0.0
  %2409 = vmatpush1.msra.mxu0 0.0
  %2410 = vmatprep.subr.mxu0 0.0
  %2411 = vmatpush1.msra.mxu0 0.0
  %2412 = vmatprep.subr.mxu0 0.0
  %2413 = vmatpush1.msra.mxu0 0.0
  %2414 = vmatprep.subr.mxu0 0.0
  %2415 = vmatpush1.msra.mxu0 0.0
  %2416 = vmatprep.subr.mxu0 0.0
  %2417 = vmatpush1.msra.mxu0 0.0
  %2418 = vmatprep.subr.mxu0 0.0
  %2419 = vmatpush1.msra.mxu0 0.0
  %2420 = vmatprep.subr.mxu0 0.0
  %2421 = vmatpush1.msra.mxu0 0.0
  %2422 = vmatprep.subr.mxu0 0.0
  %2423 = vmatpush1.msra.mxu0 0.0
  %2424 = vmatprep.subr.mxu0 0.0
  %2425 = vmatpush1.msra.mxu0 0.0
  %2426 = vmatprep.subr.mxu0 0.0
  %2427 = vmatpush1.msra.mxu0 0.0
  %2428 = vmatprep.subr.mxu0 0.0
  %2429 = vmatpush1.msra.mxu0 0.0
  %2430 = vmatprep.subr.mxu0 0.0
  %2431 = vmatpush1.msra.mxu0 0.0
  %2432 = vmatprep.mubr.f32.mxu0 0.0
  %2433 = vmatmul.mubr.f32.gmra.mrb[0].mxu0 %v2363
  %v2434 = vpop.f32.mrb[0].mxu0
  %v2435 = vadd.f32 0.0, %v2434
  %v2436 = vpop.f32.mrb[0].mxu0
  %2437 = vdwg.mxu0
  %2438 = vmatprep.subr.mxu0 0.0
  %2439 = vmatpush1.msra.mxu0 %v29
  %2440 = vmatprep.subr.mxu0 0.0
  %2441 = vmatpush1.msra.mxu0 %v30
  %2442 = vmatprep.subr.mxu0 0.0
  %2443 = vmatpush1.msra.mxu0 %v31
  %2444 = vmatprep.subr.mxu0 0.0
  %2445 = vmatpush1.msra.mxu0 %v32
  %2446 = vmatprep.subr.mxu0 0.0
  %2447 = vmatpush1.msra.mxu0 %v33
  %2448 = vmatprep.subr.mxu0 0.0
  %2449 = vmatpush1.msra.mxu0 %v34
  %2450 = vmatprep.subr.mxu0 0.0
  %2451 = vmatpush1.msra.mxu0 %v35
  %2452 = vmatprep.subr.mxu0 0.0
  %2453 = vmatpush1.msra.mxu0 %v36
  %2454 = vmatprep.subr.mxu0 0.0
  %2455 = vmatpush1.msra.mxu0 %v37
  %2456 = vmatprep.subr.mxu0 0.0
  %2457 = vmatpush1.msra.mxu0 %v38
  %2458 = vmatprep.subr.mxu0 0.0
  %2459 = vmatpush1.msra.mxu0 %v39
  %2460 = vmatprep.subr.mxu0 0.0
  %2461 = vmatpush1.msra.mxu0 %v40
  %2462 = vmatprep.subr.mxu0 0.0
  %2463 = vmatpush1.msra.mxu0 %v41
  %2464 = vmatprep.subr.mxu0 0.0
  %2465 = vmatpush1.msra.mxu0 %v42
  %2466 = vmatprep.subr.mxu0 0.0
  %2467 = vmatpush1.msra.mxu0 %v43
  %2468 = vmatprep.subr.mxu0 0.0
  %2469 = vmatpush1.msra.mxu0 %v44
  %2470 = vmatprep.subr.mxu0 0.0
  %2471 = vmatpush1.msra.mxu0 0.0
  %2472 = vmatprep.subr.mxu0 0.0
  %2473 = vmatpush1.msra.mxu0 0.0
  %2474 = vmatprep.subr.mxu0 0.0
  %2475 = vmatpush1.msra.mxu0 0.0
  %2476 = vmatprep.subr.mxu0 0.0
  %2477 = vmatpush1.msra.mxu0 0.0
  %2478 = vmatprep.subr.mxu0 0.0
  %2479 = vmatpush1.msra.mxu0 0.0
  %2480 = vmatprep.subr.mxu0 0.0
  %2481 = vmatpush1.msra.mxu0 0.0
  %2482 = vmatprep.subr.mxu0 0.0
  %2483 = vmatpush1.msra.mxu0 0.0
  %2484 = vmatprep.subr.mxu0 0.0
  %2485 = vmatpush1.msra.mxu0 0.0
  %2486 = vmatprep.subr.mxu0 0.0
  %2487 = vmatpush1.msra.mxu0 0.0
  %2488 = vmatprep.subr.mxu0 0.0
  %2489 = vmatpush1.msra.mxu0 0.0
  %2490 = vmatprep.subr.mxu0 0.0
  %2491 = vmatpush1.msra.mxu0 0.0
  %2492 = vmatprep.subr.mxu0 0.0
  %2493 = vmatpush1.msra.mxu0 0.0
  %2494 = vmatprep.subr.mxu0 0.0
  %2495 = vmatpush1.msra.mxu0 0.0
  %2496 = vmatprep.subr.mxu0 0.0
  %2497 = vmatpush1.msra.mxu0 0.0
  %2498 = vmatprep.subr.mxu0 0.0
  %2499 = vmatpush1.msra.mxu0 0.0
  %2500 = vmatprep.subr.mxu0 0.0
  %2501 = vmatpush1.msra.mxu0 0.0
  %2502 = vmatprep.mubr.f32.mxu0 0.0
  %2503 = vmatmul.mubr.f32.gmra.mrb[0].mxu0 %v2357
  %v2504 = vpop.f32.mrb[0].mxu0
  %v2505 = vadd.f32 %v2435, %v2504
  %v2506 = vpop.f32.mrb[0].mxu0
  %2507 = vdwg.mxu0
  %v2508 = vlaneseq
  %v2509 = vshrl.u32 %v2508, 7
  %v2510 = vsub.s32 4, %v2509
  %v2511 = vrot.slane %v48, %v2510
  %v2512 = vadd.f32 %v2505, %v2511
  %v2513 = vmax.f32 %v2512, 0.0
  %v2514 = vlaneseq
  %v2515 = vshrl.u32 %v2514, 7
  %v2516 = vsub.s32 5, %v2515
  %v2517 = vrot.slane %v48, %v2516
  %v2519 = vsel %vm2038, %v2513, 0
  %2521 = vmatprep.subr.mxu0 0.0
  %2522 = vmatpush1.msra.mxu0 %v45
  %2523 = vmatprep.subr.mxu0 0.0
  %2524 = vmatpush1.msra.mxu0 %v46
  %2525 = vmatprep.subr.mxu0 0.0
  %2526 = vmatpush1.msra.mxu0 0.0
  %2527 = vmatprep.subr.mxu0 0.0
  %2528 = vmatpush1.msra.mxu0 0.0
  %2529 = vmatprep.subr.mxu0 0.0
  %2530 = vmatpush1.msra.mxu0 0.0
  %2531 = vmatprep.subr.mxu0 0.0
  %2532 = vmatpush1.msra.mxu0 0.0
  %2533 = vmatprep.subr.mxu0 0.0
  %2534 = vmatpush1.msra.mxu0 0.0
  %2535 = vmatprep.subr.mxu0 0.0
  %2536 = vmatpush1.msra.mxu0 0.0
  %2537 = vmatprep.subr.mxu0 0.0
  %2538 = vmatpush1.msra.mxu0 0.0
  %2539 = vmatprep.subr.mxu0 0.0
  %2540 = vmatpush1.msra.mxu0 0.0
  %2541 = vmatprep.subr.mxu0 0.0
  %2542 = vmatpush1.msra.mxu0 0.0
  %2543 = vmatprep.subr.mxu0 0.0
  %2544 = vmatpush1.msra.mxu0 0.0
  %2545 = vmatprep.subr.mxu0 0.0
  %2546 = vmatpush1.msra.mxu0 0.0
  %2547 = vmatprep.subr.mxu0 0.0
  %2548 = vmatpush1.msra.mxu0 0.0
  %2549 = vmatprep.subr.mxu0 0.0
  %2550 = vmatpush1.msra.mxu0 0.0
  %2551 = vmatprep.subr.mxu0 0.0
  %2552 = vmatpush1.msra.mxu0 0.0
  %2553 = vmatprep.subr.mxu0 0.0
  %2554 = vmatpush1.msra.mxu0 0.0
  %2555 = vmatprep.subr.mxu0 0.0
  %2556 = vmatpush1.msra.mxu0 0.0
  %2557 = vmatprep.subr.mxu0 0.0
  %2558 = vmatpush1.msra.mxu0 0.0
  %2559 = vmatprep.subr.mxu0 0.0
  %2560 = vmatpush1.msra.mxu0 0.0
  %2561 = vmatprep.subr.mxu0 0.0
  %2562 = vmatpush1.msra.mxu0 0.0
  %2563 = vmatprep.subr.mxu0 0.0
  %2564 = vmatpush1.msra.mxu0 0.0
  %2565 = vmatprep.subr.mxu0 0.0
  %2566 = vmatpush1.msra.mxu0 0.0
  %2567 = vmatprep.subr.mxu0 0.0
  %2568 = vmatpush1.msra.mxu0 0.0
  %2569 = vmatprep.subr.mxu0 0.0
  %2570 = vmatpush1.msra.mxu0 0.0
  %2571 = vmatprep.subr.mxu0 0.0
  %2572 = vmatpush1.msra.mxu0 0.0
  %2573 = vmatprep.subr.mxu0 0.0
  %2574 = vmatpush1.msra.mxu0 0.0
  %2575 = vmatprep.subr.mxu0 0.0
  %2576 = vmatpush1.msra.mxu0 0.0
  %2577 = vmatprep.subr.mxu0 0.0
  %2578 = vmatpush1.msra.mxu0 0.0
  %2579 = vmatprep.subr.mxu0 0.0
  %2580 = vmatpush1.msra.mxu0 0.0
  %2581 = vmatprep.subr.mxu0 0.0
  %2582 = vmatpush1.msra.mxu0 0.0
  %2583 = vmatprep.subr.mxu0 0.0
  %2584 = vmatpush1.msra.mxu0 0.0
  %2585 = vmatprep.mubr.f32.mxu0 0.0
  %2586 = vmatmul.mubr.f32.gmra.mrb[0].mxu0 %v2519
  %v2587 = vpop.f32.mrb[0].mxu0
  %v2588 = vadd.f32 %v2517, %v2587
  %v2589 = vpop.f32.mrb[0].mxu0
  %2590 = vdwg.mxu0
  %v2591 = vmax.f32 %v2588, 0.0
  %v2592 = vlaneseq
  %v2593 = vshrl.u32 %v2592, 7
  %v2594 = vsub.s32 1, %v2593
  %v2595 = vrot.slane %v28, %v2594
  %v2597 = vsel %vm2038, %v2591, 0
  %2599 = vmatprep.subr.mxu0 0.0
  %2600 = vmatpush1.msra.mxu0 %v26
  %2601 = vmatprep.subr.mxu0 0.0
  %2602 = vmatpush1.msra.mxu0 %v27
  %2603 = vmatprep.subr.mxu0 0.0
  %2604 = vmatpush1.msra.mxu0 0.0
  %2605 = vmatprep.subr.mxu0 0.0
  %2606 = vmatpush1.msra.mxu0 0.0
  %2607 = vmatprep.subr.mxu0 0.0
  %2608 = vmatpush1.msra.mxu0 0.0
  %2609 = vmatprep.subr.mxu0 0.0
  %2610 = vmatpush1.msra.mxu0 0.0
  %2611 = vmatprep.subr.mxu0 0.0
  %2612 = vmatpush1.msra.mxu0 0.0
  %2613 = vmatprep.subr.mxu0 0.0
  %2614 = vmatpush1.msra.mxu0 0.0
  %2615 = vmatprep.subr.mxu0 0.0
  %2616 = vmatpush1.msra.mxu0 0.0
  %2617 = vmatprep.subr.mxu0 0.0
  %2618 = vmatpush1.msra.mxu0 0.0
  %2619 = vmatprep.subr.mxu0 0.0
  %2620 = vmatpush1.msra.mxu0 0.0
  %2621 = vmatprep.subr.mxu0 0.0
  %2622 = vmatpush1.msra.mxu0 0.0
  %2623 = vmatprep.subr.mxu0 0.0
  %2624 = vmatpush1.msra.mxu0 0.0
  %2625 = vmatprep.subr.mxu0 0.0
  %2626 = vmatpush1.msra.mxu0 0.0
  %2627 = vmatprep.subr.mxu0 0.0
  %2628 = vmatpush1.msra.mxu0 0.0
  %2629 = vmatprep.subr.mxu0 0.0
  %2630 = vmatpush1.msra.mxu0 0.0
  %2631 = vmatprep.subr.mxu0 0.0
  %2632 = vmatpush1.msra.mxu0 0.0
  %2633 = vmatprep.subr.mxu0 0.0
  %2634 = vmatpush1.msra.mxu0 0.0
  %2635 = vmatprep.subr.mxu0 0.0
  %2636 = vmatpush1.msra.mxu0 0.0
  %2637 = vmatprep.subr.mxu0 0.0
  %2638 = vmatpush1.msra.mxu0 0.0
  %2639 = vmatprep.subr.mxu0 0.0
  %2640 = vmatpush1.msra.mxu0 0.0
  %2641 = vmatprep.subr.mxu0 0.0
  %2642 = vmatpush1.msra.mxu0 0.0
  %2643 = vmatprep.subr.mxu0 0.0
  %2644 = vmatpush1.msra.mxu0 0.0
  %2645 = vmatprep.subr.mxu0 0.0
  %2646 = vmatpush1.msra.mxu0 0.0
  %2647 = vmatprep.subr.mxu0 0.0
  %2648 = vmatpush1.msra.mxu0 0.0
  %2649 = vmatprep.subr.mxu0 0.0
  %2650 = vmatpush1.msra.mxu0 0.0
  %2651 = vmatprep.subr.mxu0 0.0
  %2652 = vmatpush1.msra.mxu0 0.0
  %2653 = vmatprep.subr.mxu0 0.0
  %2654 = vmatpush1.msra.mxu0 0.0
  %2655 = vmatprep.subr.mxu0 0.0
  %2656 = vmatpush1.msra.mxu0 0.0
  %2657 = vmatprep.subr.mxu0 0.0
  %2658 = vmatpush1.msra.mxu0 0.0
  %2659 = vmatprep.subr.mxu0 0.0
  %2660 = vmatpush1.msra.mxu0 0.0
  %2661 = vmatprep.subr.mxu0 0.0
  %2662 = vmatpush1.msra.mxu0 0.0
  %2663 = vmatprep.mubr.f32.mxu0 0.0
  %2664 = vmatmul.mubr.f32.gmra.mrb[0].mxu0 %v2597
  %v2665 = vpop.f32.mrb[0].mxu0
  %v2666 = vadd.f32 %v2595, %v2665
  %v2667 = vpop.f32.mrb[0].mxu0
  %2668 = vdwg.mxu0
  %2669 = vst [vmem:[%s5] sm:$0x3] %v2666
  // Predicated region
  $region22: #{bert_feature_grader_forward.1} parent=0 // pred_check
    _
  $region23: #{bert_feature_grader_forward.1} parent=0 // pred_check_branch
    %2671 = sbr.rel (0) target = $region25
  $region24: #{bert_feature_grader_forward.1} parent=0 // pred_region
    _
  $region25: #{bert_feature_grader_forward.1} parent=0 // pred_fallthru
    _
  // Predicated region
  $region26: #{bert_feature_grader_forward.1} parent=0 // pred_check
    _
  $region27: #{bert_feature_grader_forward.1} parent=0 // pred_check_branch
    %2673 = sbr.rel (0) target = $region29
  $region28: #{bert_feature_grader_forward.1} parent=0 // pred_region
    _
  $region29: #{bert_feature_grader_forward.1} parent=0 // pred_fallthru
    _

</llo_original>
